<compile_context>
chip_gen: v7x
topology: tpu7x:2x2x1
jax: 0.10.0
libtpu: 0.0.40
codegen_flags: <defaults>
</compile_context>

<pallas_src>
import itertools

import jax
import jax.numpy as jnp
from jax.experimental import pallas as pl
from jax.experimental.pallas import tpu as pltpu

INPUT_SIZE = 1
OUTPUT_SIZE = 1
LAYER_SIZES = [INPUT_SIZE, 1, 10, 18, 15, 4, OUTPUT_SIZE]
NEG_SLOPE = 0.01  # F.leaky_relu default negative_slope

_IN = LAYER_SIZES[:-1]    # [1, 1, 10, 18, 15, 4]
_OUT = LAYER_SIZES[1:]    # [1, 10, 18, 15, 4, 1]
N_LAYERS = len(_IN)       # 6


def _round_up(n, m):
    return ((n + m - 1) // m) * m


# ---- packed parameter slab layout ------------------------------------------
# Weights for layers 0..4 are stored [out_i, in_i] starting at row W_ROW_OFF[i]
# (8-row aligned so the per-step slice reads are unmasked), columns [0:in_i].
# The last layer's weight is stored TRANSPOSED ([in,out]=[4,1]) so the kernel can
# do a pure VPU/XLU weighted sublane reduction without a reshape.
# Bias of layer i is stored as a column: rows [0:out_i], column BIAS_COL + i.
_W_ROWS_RAW = [_OUT[i] if i < N_LAYERS - 1 else _IN[i] for i in range(N_LAYERS)]
_W_ROWS = [_round_up(r, 8) for r in _W_ROWS_RAW]                 # sublane aligned
W_ROW_OFF = list(itertools.accumulate([0] + _W_ROWS))[:-1]       # [0,8,24,48,64,72]
P_ROWS = sum(_W_ROWS)                                            # 80
P_COLS = 128                                                     # one full lane tile
BIAS_COL = 32                                                    # clear of max fan-in 18

assert BIAS_COL >= max(max(_IN), _OUT[-1]), "bias columns would alias weight columns"
assert BIAS_COL + N_LAYERS <= P_COLS, "bias columns exceed the 128-lane slab"
assert max(_OUT) <= P_ROWS, "bias rows exceed the slab"

# Scoped-VMEM budget: enough for the big tiles below, < 64 MiB physical on v7x.
VMEM_LIMIT_BYTES = 48 * 1024 * 1024


def _default_tile_b():
    """Generation-aware batch-tile cap: ~0.4-0.7 KB of VMEM per sample
    (double-buffered I/O + sublane-padded intermediates)."""
    vmem = 64 << 20
    try:
        vmem = int(getattr(pltpu.get_tpu_info(), "vmem_capacity_bytes", vmem))
    except Exception:
        pass
    # v5e/v6e: 128 MiB VMEM -> 32k-lane tiles; v7x: 64 MiB -> 16k-lane tiles.
    return 32768 if vmem >= (96 << 20) else 16384


def _leaky(v):
    return jnp.where(v >= 0, v, NEG_SLOPE * v)


# ---------------------------------------------------------------------------
# Kernel: one batch tile, activations are [features, TB] (batch on lanes).
# ---------------------------------------------------------------------------
def _make_kernel(mxu_bf16):
    mxu_dtype = jnp.bfloat16 if mxu_bf16 else jnp.float32

    def mlp_kernel(x_ref, p_ref, o_ref):
        def w(i):
            r = W_ROW_OFF[i]
            if i < N_LAYERS - 1:
                return p_ref[r:r + _OUT[i], 0:_IN[i]]        # [out_i, in_i]
            return p_ref[r:r + _IN[i], 0:_OUT[i]]            # last layer: [in_i, out_i]

        def bcol(i):
            return p_ref[0:_OUT[i], BIAS_COL + i:BIAS_COL + i + 1]   # [out_i, 1]

        h = x_ref[...]                                        # [1, TB]

        # Layer 1 (1 -> 1): scalar FMA on the VPU, no MXU.
        h = _leaky(h * w(0) + bcol(0))                        # [1, TB]

        # Layer 2 (1 -> 10): outer-product broadcast on the VPU, no MXU.
        h = _leaky(w(1) * h + bcol(1))                        # [10, TB]

        # Layers 3-5: MXU matmuls (bf16 operands, f32 accumulate); the batch tile
        # fills the N (lane) dimension.
        for i in (2, 3, 4):
            wi = w(i).astype(mxu_dtype)
            hi = h.astype(mxu_dtype)
            h = _leaky(jnp.dot(wi, hi, preferred_element_type=jnp.float32) + bcol(i))

        # Layer 6 (4 -> 1): 4-term weighted sublane reduction (VPU + XLU), no MXU.
        out = jnp.sum(w(5) * h, axis=0, keepdims=True) + bcol(5)     # [1, TB]
        o_ref[...] = out.astype(o_ref.dtype)

    return mlp_kernel


# ---------------------------------------------------------------------------
# Parameter handling
# ---------------------------------------------------------------------------
def init_params(key):
    """PyTorch-style init: W,b ~ U(-1/sqrt(fan_in), 1/sqrt(fan_in)); W is [out, in]."""
    params = []
    for fan_in, fan_out in zip(_IN, _OUT):
        key, kw, kb = jax.random.split(key, 3)
        bound = 1.0 / (fan_in ** 0.5)
        w = jax.random.uniform(kw, (fan_out, fan_in), jnp.float32, -bound, bound)
        b = jax.random.uniform(kb, (fan_out,), jnp.float32, -bound, bound)
        params.append((w, b))
    return params


def pack_params(params):
    """Pack all weights/biases into a single [P_ROWS, 128] f32 slab.

    Call ONCE per parameter set and reuse the result (kept out of the
    per-forward hot path)."""
    assert len(params) == N_LAYERS
    slab = jnp.zeros((P_ROWS, P_COLS), jnp.float32)
    for i, (w, b) in enumerate(params):
        assert w.shape == (_OUT[i], _IN[i]), (i, w.shape)
        assert b.shape == (_OUT[i],), (i, b.shape)
        r = W_ROW_OFF[i]
        if i < N_LAYERS - 1:
            slab = slab.at[r:r + _OUT[i], 0:_IN[i]].set(w)
        else:
            slab = slab.at[r:r + _IN[i], 0:_OUT[i]].set(w.T)
        slab = slab.at[0:_OUT[i], BIAS_COL + i].set(b)
    return slab


# ---------------------------------------------------------------------------
# Wrapper
# ---------------------------------------------------------------------------
def model1_forward(x, slab, *, tile_b=None, mxu_bf16=True):
    B, F = x.shape
    assert F == INPUT_SIZE

    # Batch on the lane axis: [B, 1] -> [1, B]  (free reshape since INPUT_SIZE == 1).
    xT = x.reshape(INPUT_SIZE, B) if INPUT_SIZE == 1 else x.T

    # Pad only to the 128-lane granule (NOT to a full tile); the boundary tile is
    # handled by Pallas' masked partial-block reads/writes.
    b128 = _round_up(B, 128)
    if b128 != B:
        xT = jnp.pad(xT, ((0, 0), (0, b128 - B)))

    cap = _default_tile_b() if tile_b is None else tile_b
    tb = min(cap, b128)
    if b128 >= 256:
        # Keep grid >= 2 so ("parallel",) can shard tiles across v7x's two TCs.
        tb = min(tb, _round_up(pl.cdiv(b128, 2), 128))
    tb = max(128, tb)
    grid = (pl.cdiv(b128, tb),)

    out_t = pl.pallas_call(
        _make_kernel(mxu_bf16),
        out_shape=jax.ShapeDtypeStruct((OUTPUT_SIZE, b128), jnp.float32),
        grid=grid,
        in_specs=[
            pl.BlockSpec((INPUT_SIZE, tb), lambda i: (0, i)),   # streamed batch tiles
            pl.BlockSpec((P_ROWS, P_COLS), lambda i: (0, 0)),   # params: resident slab
        ],
        out_specs=pl.BlockSpec((OUTPUT_SIZE, tb), lambda i: (0, i)),
        compiler_params=pltpu.CompilerParams(
            dimension_semantics=("parallel",),                  # megacore on v7x
            vmem_limit_bytes=VMEM_LIMIT_BYTES,                  # allow big tiles
        ),
    )(xT, slab)

    out = out_t.reshape(b128, OUTPUT_SIZE) if OUTPUT_SIZE == 1 else out_t.T
    return out[:B]


def model1_reference(x, params):
    h = x
    for idx, (w, b) in enumerate(params):
        h = h @ w.T + b
        if idx < len(params) - 1:
            h = jnp.where(h >= 0, h, NEG_SLOPE * h)
    return h


if __name__ == "__main__":
    key = jax.random.PRNGKey(0)
    key, kx = jax.random.split(key)

    # B chosen so that: it is not a multiple of 128 (exercises the 128-granule
    # pad), the chosen tile does not divide it (exercises the masked partial
    # boundary tile), and the grid has >= 2 steps (v7x megacore path).
    B = 3333
    x = jax.random.normal(kx, (B, INPUT_SIZE), jnp.float32)
    params = init_params(key)
    slab = pack_params(params)            # packed once, reused across calls

    fwd = jax.jit(model1_forward, static_argnames=("tile_b", "mxu_bf16"))
    ref = model1_reference(x, params)

    # Exact f32 MXU path: tight check against the reference.
    out_f32 = jax.block_until_ready(fwd(x, slab, mxu_bf16=False))
    assert out_f32.shape == (B, OUTPUT_SIZE), out_f32.shape
    assert jnp.allclose(out_f32, ref, atol=1e-5, rtol=1e-5), (
        float(jnp.max(jnp.abs(out_f32 - ref))))

    # Default fast path: bf16 MXU operands with f32 accumulate (looser tolerance).
    out = jax.block_until_ready(fwd(x, slab))
    assert out.shape == (B, OUTPUT_SIZE), out.shape
    assert jnp.allclose(out, ref, atol=5e-2, rtol=5e-2), (
        float(jnp.max(jnp.abs(out - ref))))

    print("KERNEL_OK")
</pallas_src>

<mosaic_0001>
module attributes {stable_mosaic.version = 11 : i64} {
  func.func @mlp_kernel(%arg0: i32, %arg1: memref<1x1792xf32, #tpu.memory_space<vmem>>, %arg2: memref<80x128xf32, #tpu.memory_space<vmem>>, %arg3: memref<1x1792xf32, #tpu.memory_space<vmem>>) attributes {dimension_semantics = [#tpu.dimension_semantics<parallel>], iteration_bounds = array<i64: 2>, scalar_prefetch = 0 : i64, scratch_operands = 0 : i64, tpu.core_type = #tpu.core_type<tc>, window_params = [{transform_indices = @transform_0, window_bounds = array<i64: 1, 1792>}, {pipeline_mode = #tpu.pipeline_mode<synchronous>, transform_indices = @transform_1, window_bounds = array<i64: 80, 128>}, {transform_indices = @transform_2, window_bounds = array<i64: 1, 1792>}]} {
    %c0 = arith.constant 0 : index
    %c0_0 = arith.constant 0 : index
    %0 = vector.load %arg1[%c0, %c0_0] : memref<1x1792xf32, #tpu.memory_space<vmem>>, vector<1x1792xf32>
    %c0_1 = arith.constant 0 : index
    %c0_2 = arith.constant 0 : index
    %1 = vector.load %arg2[%c0_1, %c0_2] : memref<80x128xf32, #tpu.memory_space<vmem>>, vector<1x1xf32>
    %2 = vector.broadcast %1 : vector<1x1xf32> to vector<1x1792xf32>
    %3 = arith.mulf %0, %2 : vector<1x1792xf32>
    %c0_3 = arith.constant 0 : index
    %c32 = arith.constant 32 : index
    %4 = vector.load %arg2[%c0_3, %c32] : memref<80x128xf32, #tpu.memory_space<vmem>>, vector<1x1xf32>
    %5 = vector.broadcast %4 : vector<1x1xf32> to vector<1x1792xf32>
    %6 = arith.addf %3, %5 : vector<1x1792xf32>
    %cst = arith.constant 0.000000e+00 : f32
    %7 = vector.broadcast %cst : f32 to vector<1x1792xf32>
    %8 = arith.cmpf oge, %6, %7 : vector<1x1792xf32>
    %cst_4 = arith.constant 0.00999999977 : f32
    %9 = vector.broadcast %cst_4 : f32 to vector<1x1792xf32>
    %10 = arith.mulf %9, %6 : vector<1x1792xf32>
    %11 = arith.select %8, %6, %10 : vector<1x1792xi1>, vector<1x1792xf32>
    %c8 = arith.constant 8 : index
    %c0_5 = arith.constant 0 : index
    %12 = vector.load %arg2[%c8, %c0_5] : memref<80x128xf32, #tpu.memory_space<vmem>>, vector<10x1xf32>
    %13 = vector.broadcast %12 : vector<10x1xf32> to vector<10x1792xf32>
    %14 = vector.broadcast %11 : vector<1x1792xf32> to vector<10x1792xf32>
    %15 = arith.mulf %13, %14 : vector<10x1792xf32>
    %c0_6 = arith.constant 0 : index
    %c33 = arith.constant 33 : index
    %16 = vector.load %arg2[%c0_6, %c33] : memref<80x128xf32, #tpu.memory_space<vmem>>, vector<10x1xf32>
    %17 = vector.broadcast %16 : vector<10x1xf32> to vector<10x1792xf32>
    %18 = arith.addf %15, %17 : vector<10x1792xf32>
    %cst_7 = arith.constant 0.000000e+00 : f32
    %19 = vector.broadcast %cst_7 : f32 to vector<10x1792xf32>
    %20 = arith.cmpf oge, %18, %19 : vector<10x1792xf32>
    %cst_8 = arith.constant 0.00999999977 : f32
    %21 = vector.broadcast %cst_8 : f32 to vector<10x1792xf32>
    %22 = arith.mulf %21, %18 : vector<10x1792xf32>
    %23 = arith.select %20, %18, %22 : vector<10x1792xi1>, vector<10x1792xf32>
    %c24 = arith.constant 24 : index
    %c0_9 = arith.constant 0 : index
    %24 = vector.load %arg2[%c24, %c0_9] : memref<80x128xf32, #tpu.memory_space<vmem>>, vector<18x10xf32>
    %cst_10 = arith.constant dense<0.000000e+00> : vector<18x1792xf32>
    %25 = tpu.matmul %24, %23, %cst_10 {dimension_numbers = #tpu.dot_dimension_numbers<[1], [0], [0], [1], [0, 0, 1, 1], [], []>} : vector<18x10xf32>, vector<10x1792xf32>, vector<18x1792xf32> -> vector<18x1792xf32>
    %c0_11 = arith.constant 0 : index
    %c34 = arith.constant 34 : index
    %26 = vector.load %arg2[%c0_11, %c34] : memref<80x128xf32, #tpu.memory_space<vmem>>, vector<18x1xf32>
    %27 = vector.broadcast %26 : vector<18x1xf32> to vector<18x1792xf32>
    %28 = arith.addf %25, %27 : vector<18x1792xf32>
    %cst_12 = arith.constant 0.000000e+00 : f32
    %29 = vector.broadcast %cst_12 : f32 to vector<18x1792xf32>
    %30 = arith.cmpf oge, %28, %29 : vector<18x1792xf32>
    %cst_13 = arith.constant 0.00999999977 : f32
    %31 = vector.broadcast %cst_13 : f32 to vector<18x1792xf32>
    %32 = arith.mulf %31, %28 : vector<18x1792xf32>
    %33 = arith.select %30, %28, %32 : vector<18x1792xi1>, vector<18x1792xf32>
    %c48 = arith.constant 48 : index
    %c0_14 = arith.constant 0 : index
    %34 = vector.load %arg2[%c48, %c0_14] : memref<80x128xf32, #tpu.memory_space<vmem>>, vector<15x18xf32>
    %cst_15 = arith.constant dense<0.000000e+00> : vector<15x1792xf32>
    %35 = tpu.matmul %34, %33, %cst_15 {dimension_numbers = #tpu.dot_dimension_numbers<[1], [0], [0], [1], [0, 0, 1, 1], [], []>} : vector<15x18xf32>, vector<18x1792xf32>, vector<15x1792xf32> -> vector<15x1792xf32>
    %c0_16 = arith.constant 0 : index
    %c35 = arith.constant 35 : index
    %36 = vector.load %arg2[%c0_16, %c35] : memref<80x128xf32, #tpu.memory_space<vmem>>, vector<15x1xf32>
    %37 = vector.broadcast %36 : vector<15x1xf32> to vector<15x1792xf32>
    %38 = arith.addf %35, %37 : vector<15x1792xf32>
    %cst_17 = arith.constant 0.000000e+00 : f32
    %39 = vector.broadcast %cst_17 : f32 to vector<15x1792xf32>
    %40 = arith.cmpf oge, %38, %39 : vector<15x1792xf32>
    %cst_18 = arith.constant 0.00999999977 : f32
    %41 = vector.broadcast %cst_18 : f32 to vector<15x1792xf32>
    %42 = arith.mulf %41, %38 : vector<15x1792xf32>
    %43 = arith.select %40, %38, %42 : vector<15x1792xi1>, vector<15x1792xf32>
    %c64 = arith.constant 64 : index
    %c0_19 = arith.constant 0 : index
    %44 = vector.load %arg2[%c64, %c0_19] : memref<80x128xf32, #tpu.memory_space<vmem>>, vector<4x15xf32>
    %cst_20 = arith.constant dense<0.000000e+00> : vector<4x1792xf32>
    %45 = tpu.matmul %44, %43, %cst_20 {dimension_numbers = #tpu.dot_dimension_numbers<[1], [0], [0], [1], [0, 0, 1, 1], [], []>} : vector<4x15xf32>, vector<15x1792xf32>, vector<4x1792xf32> -> vector<4x1792xf32>
    %c0_21 = arith.constant 0 : index
    %c36 = arith.constant 36 : index
    %46 = vector.load %arg2[%c0_21, %c36] : memref<80x128xf32, #tpu.memory_space<vmem>>, vector<4x1xf32>
    %47 = vector.broadcast %46 : vector<4x1xf32> to vector<4x1792xf32>
    %48 = arith.addf %45, %47 : vector<4x1792xf32>
    %cst_22 = arith.constant 0.000000e+00 : f32
    %49 = vector.broadcast %cst_22 : f32 to vector<4x1792xf32>
    %50 = arith.cmpf oge, %48, %49 : vector<4x1792xf32>
    %cst_23 = arith.constant 0.00999999977 : f32
    %51 = vector.broadcast %cst_23 : f32 to vector<4x1792xf32>
    %52 = arith.mulf %51, %48 : vector<4x1792xf32>
    %53 = arith.select %50, %48, %52 : vector<4x1792xi1>, vector<4x1792xf32>
    %c72 = arith.constant 72 : index
    %c0_24 = arith.constant 0 : index
    %54 = vector.load %arg2[%c72, %c0_24] : memref<80x128xf32, #tpu.memory_space<vmem>>, vector<4x1xf32>
    %55 = vector.broadcast %54 : vector<4x1xf32> to vector<4x1792xf32>
    %56 = arith.mulf %55, %53 : vector<4x1792xf32>
    %cst_25 = arith.constant dense<0.000000e+00> : vector<1792xf32>
    %57 = vector.multi_reduction <add>, %56, %cst_25 [0] : vector<4x1792xf32> to vector<1792xf32>
    %58 = vector.shape_cast %57 : vector<1792xf32> to vector<1x1792xf32>
    %c0_26 = arith.constant 0 : index
    %c37 = arith.constant 37 : index
    %59 = vector.load %arg2[%c0_26, %c37] : memref<80x128xf32, #tpu.memory_space<vmem>>, vector<1x1xf32>
    %60 = vector.broadcast %59 : vector<1x1xf32> to vector<1x1792xf32>
    %61 = arith.addf %58, %60 : vector<1x1792xf32>
    %c0_27 = arith.constant 0 : index
    %c0_28 = arith.constant 0 : index
    %62 = vector.load %arg3[%c0_27, %c0_28] : memref<1x1792xf32, #tpu.memory_space<vmem>>, vector<1x1792xf32>
    tpu.vector_store %arg3[%c0_27, %c0_28], %61 {strides = array<i32>} : memref<1x1792xf32, #tpu.memory_space<vmem>>, vector<1x1792xf32>,
    return
  }
  func.func @transform_0(%arg0: i32) -> (i32, i32) {
    %c0_i32 = arith.constant 0 : i32
    %c0_i32_0 = arith.constant 0 : i32
    return %c0_i32, %arg0 : i32, i32
  }
  func.func @transform_1(%arg0: i32) -> (i32, i32) {
    %c0_i32 = arith.constant 0 : i32
    %c0_i32_0 = arith.constant 0 : i32
    %c0_i32_1 = arith.constant 0 : i32
    return %c0_i32, %c0_i32_0 : i32, i32
  }
  func.func @transform_2(%arg0: i32) -> (i32, i32) {
    %c0_i32 = arith.constant 0 : i32
    %c0_i32_0 = arith.constant 0 : i32
    return %c0_i32, %arg0 : i32, i32
  }
}

</mosaic_0001>

<llo_original>
// kernel: model1_forward.1
$region0: #{model1_forward.1}
  #allocation0 [shape = 'u32[]', space=smem, size = 0x4, offset = 0x4, fixed_abs, tag = 'smem constant byte address 0x4 - core index']
  #allocation1 [shape = 'u32[144,128]{1,0:T(1,128)}', space=vmem, size = 0x12000, scoped, tag = 'internal scratch']
  %s0 = inlined_call_operand.vmem [shape: f32[1,3456], index: 0, kind: input, shape index: {}]
  %s1 = inlined_call_operand.hbm [shape: f32[80,128], index: 1, kind: input, shape index: {}]
  %s2 = inlined_call_operand.vmem [shape: f32[1,3456], index: 2, kind: output, shape index: {}]
  %s3 = sld [smem:[#allocation0]]
  $region107: #{model1_forward.1} parent=0
    _
  %s5 = ssub.s32 1, %s3
  %s6 = scalar_select 0, %s5, %s3
  $region1: #{model1_forward.1} parent=0
    #allocation2 [shape = 'u8[40960]{0}', space=vmem, size = 0xa000, scoped, tag = 'input window, operand 1, single buffered']
    #allocation3 [shape = 's32[2]{0}', space=sflag, size = 0x8, scoped, tag = 'scoped memory for model1_forward.1']
    #allocation4 [shape = 'u8[14336]{0}', space=vmem, size = 0x3800, scoped, tag = 'output window, operand 0']
    %7 = vsyncpa [#allocation3], 0
    loop: start=0, step=1, limit=4
    $region2: #{model1_forward.1} parent=1 // loop_pre_header
      _
    $region3: #{model1_forward.1} parent=1 // loop_header
      %s9 = sphi 0, %s13
      %p10 = scmp.ge.s32.totalorder %s9, 4
      %s19 = sphi 0, %s21
      %s22 = sphi 0, %s19
      %s23 = sphi 0, %s22
      %s39 = sphi 0, %s23
      %s43 = sphi 0, %s43
      %s45 = sphi 0, %s43
      %s46 = sphi 0, %s45
      %s60 = sphi 0, %s46
      %s66 = sphi 0, %s68
      %s69 = sphi 0, %s66
      %s70 = sphi 0, %s69
      %s86 = sphi 0, %s70
    $region4: #{model1_forward.1} parent=1 // loop_header_branch
      %12 = sbr.rel (%p10) target = $region8
    $region5: #{model1_forward.1} parent=1 // loop_body
      %s14 = ssub.s32 %s9, 1
      %s15 = ssub.s32 %s9, 2
      %s16 = sadd.s32 %s9, 1
      %s17 = ssub.s32 %s9, %s16
      %p18 = scmp.eq.s32.totalorder %s17, 0
      %s20 = sadd.s32 %s19, 1
      %s21 = scalar_select %p18, %s19, %s20
      %p24 = pneg %p18
      %p25 = scmp.eq.s32.totalorder %s9, 1
      %p26 = por %p24, %p25
      %p27 = scmp.ne.s32.totalorder %s19, %s22
      %p28 = scmp.eq.s32.totalorder %s9, 0
      %p29 = por %p27, %p28
      %p30 = scmp.ne.s32.totalorder %s19, %s22
      %p31 = scmp.eq.s32.totalorder %s14, 1
      %p32 = por %p30, %p31
      %p33 = scmp.ne.s32.totalorder %s22, %s23
      %p34 = scmp.eq.s32.totalorder %s14, 0
      %p35 = por %p33, %p34
      %p36 = scmp.ne.s32.totalorder %s22, %s23
      %p37 = scmp.eq.s32.totalorder %s15, 1
      %p38 = por %p36, %p37
      %p40 = scmp.ne.s32.totalorder %s23, %s39
      %p41 = scmp.eq.s32.totalorder %s15, 0
      %p42 = por %p40, %p41
      %s44 = sadd.s32 %s43, 1
      %p47 = scmp.eq.s32.totalorder %s9, 1
      %p48 = scmp.ne.s32.totalorder %s43, %s45
      %p49 = scmp.eq.s32.totalorder %s9, 0
      %p50 = por %p48, %p49
      %p51 = scmp.ne.s32.totalorder %s43, %s45
      %p52 = scmp.eq.s32.totalorder %s14, 1
      %p53 = por %p51, %p52
      %p54 = scmp.ne.s32.totalorder %s45, %s46
      %p55 = scmp.eq.s32.totalorder %s14, 0
      %p56 = por %p54, %p55
      %p57 = scmp.ne.s32.totalorder %s45, %s46
      %p58 = scmp.eq.s32.totalorder %s15, 1
      %p59 = por %p57, %p58
      %p61 = scmp.ne.s32.totalorder %s46, %s60
      %p62 = scmp.eq.s32.totalorder %s15, 0
      %p63 = por %p61, %p62
      %s64 = ssub.s32 %s9, %s16
      %p65 = scmp.eq.s32.totalorder %s64, 0
      %s67 = sadd.s32 %s66, 1
      %s68 = scalar_select %p65, %s66, %s67
      %p71 = pneg %p65
      %p72 = scmp.eq.s32.totalorder %s9, 1
      %p73 = por %p71, %p72
      %p74 = scmp.ne.s32.totalorder %s66, %s69
      %p75 = scmp.eq.s32.totalorder %s9, 0
      %p76 = por %p74, %p75
      %p77 = scmp.ne.s32.totalorder %s66, %s69
      %p78 = scmp.eq.s32.totalorder %s14, 1
      %p79 = por %p77, %p78
      %p80 = scmp.ne.s32.totalorder %s69, %s70
      %p81 = scmp.eq.s32.totalorder %s14, 0
      %p82 = por %p80, %p81
      %p83 = scmp.ne.s32.totalorder %s69, %s70
      %p84 = scmp.eq.s32.totalorder %s15, 1
      %p85 = por %p83, %p84
      %p87 = scmp.ne.s32.totalorder %s70, %s86
      %p88 = scmp.eq.s32.totalorder %s15, 0
      %p89 = por %p87, %p88
      %p90 = scmp.le.s32.totalorder 1, %s9
      %p91 = scmp.lt.s32.totalorder %s9, 3
      %p92 = pnand %p90, %p91
      %p93 = pneg %p92
      // Predicated region
      $region9: #{model1_forward.1} parent=5 // pred_check
        _
      $region10: #{model1_forward.1} parent=5 // pred_check_branch
        %95 = sbr.rel (%p92) target = $region12
      $region11: #{model1_forward.1} parent=5 // pred_region
        %s96 = ssub.s32 %s9, 1
        // Predicated region
        $region13: #{model1_forward.1} parent=11 // pred_check
          %p97 = pneg %p56
        $region14: #{model1_forward.1} parent=11 // pred_check_branch
          %99 = sbr.rel (%p97) target = $region16
        $region15: #{model1_forward.1} parent=11 // pred_region
          %s101 = ssub.s32 1280, 1280
          %102 = vsyncadd [#allocation3], %s101
          %s103 = sshll.u32 [#allocation2], 4
          %s104 = int_to_ptr.vmem [resolvable:$true] %s103
          %109 = dma.hbm_to_vmem [thread:$0]  %s1, 1280, %s104, [#allocation3], 128, 128, 8
        $region16: #{model1_forward.1} parent=11 // pred_fallthru
          _
      $region12: #{model1_forward.1} parent=5 // pred_fallthru
        _
      %p110 = scmp.lt.s32.totalorder %s9, 2
      // Predicated region
      $region17: #{model1_forward.1} parent=5 // pred_check
        %p111 = pneg %p110
      $region18: #{model1_forward.1} parent=5 // pred_check_branch
        %113 = sbr.rel (%p111) target = $region20
      $region19: #{model1_forward.1} parent=5 // pred_region
        // Predicated region
        $region21: #{model1_forward.1} parent=19 // pred_check
          %p114 = pneg %p29
        $region22: #{model1_forward.1} parent=19 // pred_check_branch
          %116 = sbr.rel (%p114) target = $region24
        $region23: #{model1_forward.1} parent=19 // pred_region
          %s117 = smul.u32 14, %s9
          %s118 = ssub.s32 27, %s117
          %p119 = scmp.lt.s32.totalorder %s118, 14
          %s120 = scalar_select %p119, %s118, 14
          %s121 = smul.u32 16, %s120
          %p122 = scmp.lt.s32.totalorder %s117, 26
          %s123 = scalar_select %p122, %s117, 26
          %s124 = scalar_lea.vmem %s0, %s123
          %s125 = smul.u32 14, %s9
          %s126 = ssub.s32 27, %s125
          %p127 = scmp.lt.s32.totalorder %s126, 14
          %s128 = scalar_select %p127, %s126, 14
          %s129 = smul.u32 16, %s128
        $region24: #{model1_forward.1} parent=19 // pred_fallthru
          _
      $region20: #{model1_forward.1} parent=5 // pred_fallthru
        _
      %p130 = scmp.le.s32.totalorder 1, %s9
      %p131 = scmp.lt.s32.totalorder %s9, 3
      %p132 = pnand %p130, %p131
      %p133 = pneg %p132
      // Predicated region
      $region25: #{model1_forward.1} parent=5 // pred_check
        _
      $region26: #{model1_forward.1} parent=5 // pred_check_branch
        %135 = sbr.rel (%p132) target = $region28
      $region27: #{model1_forward.1} parent=5 // pred_region
        %s136 = ssub.s32 %s9, 1
        // Predicated region
        $region29: #{model1_forward.1} parent=27 // pred_check
          %p137 = pneg %p56
        $region30: #{model1_forward.1} parent=27 // pred_check_branch
          %139 = sbr.rel (%p137) target = $region32
        $region31: #{model1_forward.1} parent=27 // pred_region
          %140 = dma.done [#allocation3], 1280
        $region32: #{model1_forward.1} parent=27 // pred_fallthru
          _
        %s141 = smul.u32 14, %s14
        %s142 = ssub.s32 27, %s141
        %p143 = scmp.lt.s32.totalorder %s142, 14
        %s144 = scalar_select %p143, %s142, 14
        %s145 = smul.u32 16, %s144
        %p146 = scmp.lt.s32.totalorder %s141, 26
        %s147 = scalar_select %p146, %s141, 26
        %s148 = scalar_lea.vmem %s0, %s147
        %p149 = pneg %p35
        %p150 = pneg %p32
        %p151 = pneg %p56
        %p152 = pneg %p53
        %p153 = pneg %p82
        %p154 = pneg %p79
        %s155 = sand.u32 %s69, 1
        %s156 = sand.u32 %s69, 1
        %s157 = smul.addr %s156, 14
        %s158 = scalar_lea.vmem [#allocation4], %s157
        %s159 = smul.u32 14, %s14
        %s160 = ssub.s32 27, %s159
        %p161 = scmp.lt.s32.totalorder %s160, 14
        %s162 = scalar_select %p161, %s160, 14
        %s163 = smul.u32 16, %s162
        %p164 = scmp.lt.s32.totalorder %s159, 26
        %s165 = scalar_select %p164, %s159, 26
        %s166 = scalar_lea.vmem %s0, %s165
        %s167 = smul.u32 14, %s14
        %s168 = ssub.s32 27, %s167
        %p169 = scmp.lt.s32.totalorder %s168, 14
        %s170 = scalar_select %p169, %s168, 14
        %s171 = smul.u32 16, %s170
        %s172 = smul.u32 14, %s14
        %s173 = ssub.s32 27, %s172
        %p174 = scmp.lt.s32.totalorder %s173, 14
        %s175 = scalar_select %p174, %s173, 14
        %s176 = smul.u32 16, %s175
        %v177 = vld [vmem:[%s166] sm:$0xff]
        %v178 = vld [vmem:[%s166 + $0x8] sm:$0x3f]
        %v179 = vld [vmem:[#allocation2] sm:$0x1]
        %181 = vset.pattern.permute.xlu0 0
        %182 = vperm.xlu0 %181, %v179
        %v183 = vpop.permute.xlu0 %182
        %v184 = vlaneseq
        %v185 = vshrl.u32 %v184, 7
        %v186 = vsub.s32 0, %v185
        %v187 = vrot.slane %v183, %v186
        %v189 = vmul.f32 %v177, %v187
        %v190 = vmul.f32 %v178, %v187
        %191 = vset.pattern.permute.xlu0 32
        %192 = vperm.xlu0 %191, %v179
        %v193 = vpop.permute.xlu0 %192
        %v194 = vlaneseq
        %v195 = vshrl.u32 %v194, 7
        %v196 = vsub.s32 0, %v195
        %v197 = vrot.slane %v193, %v196
        %v199 = vadd.f32 %v189, %v197
        %v200 = vadd.f32 %v190, %v197
        %vm201 = vcmp.ge.f32.partialorder %v199, 0.0
        %vm202 = vcmp.ge.f32.partialorder %v200, 0.0
        %v203 = vmul.f32 %v199, 0.01
        %v204 = vmul.f32 %v200, 0.01
        %v205 = vsel %vm201, %v199, %v203
        %v206 = vsel %vm202, %v200, %v204
        %v207 = vld [vmem:[#allocation2 + $0x8] sm:$0xff]
        %v208 = vld [vmem:[#allocation2 + $0x10] sm:$0x3]
        %210 = vset.pattern.permute.xlu0 0
        %211 = vperm.xlu0 %210, %v207
        %v212 = vpop.permute.xlu0 %211
        %215 = vset.pattern.permute.xlu0 0
        %216 = vperm.xlu0 %215, %v208
        %v217 = vpop.permute.xlu0 %216
        %v221 = vlaneseq
        %v222 = vshrl.u32 %v221, 7
        %v223 = vsub.s32 0, %v222
        %v224 = vrot.slane %v205, %v223
        %v225 = vlaneseq
        %v226 = vshrl.u32 %v225, 7
        %v227 = vsub.s32 1, %v226
        %v228 = vrot.slane %v205, %v227
        %v229 = vlaneseq
        %v230 = vshrl.u32 %v229, 7
        %v231 = vsub.s32 2, %v230
        %v232 = vrot.slane %v205, %v231
        %v233 = vlaneseq
        %v234 = vshrl.u32 %v233, 7
        %v235 = vsub.s32 3, %v234
        %v236 = vrot.slane %v205, %v235
        %v237 = vlaneseq
        %v238 = vshrl.u32 %v237, 7
        %v239 = vsub.s32 4, %v238
        %v240 = vrot.slane %v205, %v239
        %v241 = vlaneseq
        %v242 = vshrl.u32 %v241, 7
        %v243 = vsub.s32 5, %v242
        %v244 = vrot.slane %v205, %v243
        %v245 = vlaneseq
        %v246 = vshrl.u32 %v245, 7
        %v247 = vsub.s32 6, %v246
        %v248 = vrot.slane %v205, %v247
        %v249 = vlaneseq
        %v250 = vshrl.u32 %v249, 7
        %v251 = vsub.s32 7, %v250
        %v252 = vrot.slane %v205, %v251
        %v253 = vlaneseq
        %v254 = vshrl.u32 %v253, 7
        %v255 = vsub.s32 0, %v254
        %v256 = vrot.slane %v206, %v255
        %v257 = vlaneseq
        %v258 = vshrl.u32 %v257, 7
        %v259 = vsub.s32 1, %v258
        %v260 = vrot.slane %v206, %v259
        %v261 = vlaneseq
        %v262 = vshrl.u32 %v261, 7
        %v263 = vsub.s32 2, %v262
        %v264 = vrot.slane %v206, %v263
        %v265 = vlaneseq
        %v266 = vshrl.u32 %v265, 7
        %v267 = vsub.s32 3, %v266
        %v268 = vrot.slane %v206, %v267
        %v269 = vlaneseq
        %v270 = vshrl.u32 %v269, 7
        %v271 = vsub.s32 4, %v270
        %v272 = vrot.slane %v206, %v271
        %v273 = vlaneseq
        %v274 = vshrl.u32 %v273, 7
        %v275 = vsub.s32 5, %v274
        %v276 = vrot.slane %v206, %v275
        %v291 = vmul.f32 %v212, %v224
        %v292 = vmul.f32 %v212, %v228
        %v293 = vmul.f32 %v212, %v232
        %v294 = vmul.f32 %v212, %v236
        %v295 = vmul.f32 %v212, %v240
        %v296 = vmul.f32 %v212, %v244
        %v297 = vmul.f32 %v212, %v248
        %v298 = vmul.f32 %v212, %v252
        %v299 = vmul.f32 %v212, %v256
        %v300 = vmul.f32 %v212, %v260
        %v301 = vmul.f32 %v212, %v264
        %v302 = vmul.f32 %v212, %v268
        %v303 = vmul.f32 %v212, %v272
        %v304 = vmul.f32 %v212, %v276
        %v305 = vmul.f32 %v217, %v224
        %v306 = vmul.f32 %v217, %v228
        %v307 = vmul.f32 %v217, %v232
        %v308 = vmul.f32 %v217, %v236
        %v309 = vmul.f32 %v217, %v240
        %v310 = vmul.f32 %v217, %v244
        %v311 = vmul.f32 %v217, %v248
        %v312 = vmul.f32 %v217, %v252
        %v313 = vmul.f32 %v217, %v256
        %v314 = vmul.f32 %v217, %v260
        %v315 = vmul.f32 %v217, %v264
        %v316 = vmul.f32 %v217, %v268
        %v317 = vmul.f32 %v217, %v272
        %v318 = vmul.f32 %v217, %v276
        %v319 = vld [vmem:[#allocation2] sm:$0xff]
        %v320 = vld [vmem:[#allocation2 + $0x8] sm:$0x3]
        %322 = vset.pattern.permute.xlu0 33
        %323 = vperm.xlu0 %322, %v319
        %v324 = vpop.permute.xlu0 %323
        %327 = vset.pattern.permute.xlu0 33
        %328 = vperm.xlu0 %327, %v320
        %v329 = vpop.permute.xlu0 %328
        %v331 = vadd.f32 %v291, %v324
        %v332 = vadd.f32 %v292, %v324
        %v333 = vadd.f32 %v293, %v324
        %v334 = vadd.f32 %v294, %v324
        %v335 = vadd.f32 %v295, %v324
        %v336 = vadd.f32 %v296, %v324
        %v337 = vadd.f32 %v297, %v324
        %v338 = vadd.f32 %v298, %v324
        %v339 = vadd.f32 %v299, %v324
        %v340 = vadd.f32 %v300, %v324
        %v341 = vadd.f32 %v301, %v324
        %v342 = vadd.f32 %v302, %v324
        %v343 = vadd.f32 %v303, %v324
        %v344 = vadd.f32 %v304, %v324
        %v345 = vadd.f32 %v305, %v329
        %v346 = vadd.f32 %v306, %v329
        %v347 = vadd.f32 %v307, %v329
        %v348 = vadd.f32 %v308, %v329
        %v349 = vadd.f32 %v309, %v329
        %v350 = vadd.f32 %v310, %v329
        %v351 = vadd.f32 %v311, %v329
        %v352 = vadd.f32 %v312, %v329
        %v353 = vadd.f32 %v313, %v329
        %v354 = vadd.f32 %v314, %v329
        %v355 = vadd.f32 %v315, %v329
        %v356 = vadd.f32 %v316, %v329
        %v357 = vadd.f32 %v317, %v329
        %v358 = vadd.f32 %v318, %v329
        %vm359 = vcmp.ge.f32.partialorder %v331, 0.0
        %vm360 = vcmp.ge.f32.partialorder %v332, 0.0
        %vm361 = vcmp.ge.f32.partialorder %v333, 0.0
        %vm362 = vcmp.ge.f32.partialorder %v334, 0.0
        %vm363 = vcmp.ge.f32.partialorder %v335, 0.0
        %vm364 = vcmp.ge.f32.partialorder %v336, 0.0
        %vm365 = vcmp.ge.f32.partialorder %v337, 0.0
        %vm366 = vcmp.ge.f32.partialorder %v338, 0.0
        %vm367 = vcmp.ge.f32.partialorder %v339, 0.0
        %vm368 = vcmp.ge.f32.partialorder %v340, 0.0
        %vm369 = vcmp.ge.f32.partialorder %v341, 0.0
        %vm370 = vcmp.ge.f32.partialorder %v342, 0.0
        %vm371 = vcmp.ge.f32.partialorder %v343, 0.0
        %vm372 = vcmp.ge.f32.partialorder %v344, 0.0
        %vm373 = vcmp.ge.f32.partialorder %v345, 0.0
        %vm374 = vcmp.ge.f32.partialorder %v346, 0.0
        %vm375 = vcmp.ge.f32.partialorder %v347, 0.0
        %vm376 = vcmp.ge.f32.partialorder %v348, 0.0
        %vm377 = vcmp.ge.f32.partialorder %v349, 0.0
        %vm378 = vcmp.ge.f32.partialorder %v350, 0.0
        %vm379 = vcmp.ge.f32.partialorder %v351, 0.0
        %vm380 = vcmp.ge.f32.partialorder %v352, 0.0
        %vm381 = vcmp.ge.f32.partialorder %v353, 0.0
        %vm382 = vcmp.ge.f32.partialorder %v354, 0.0
        %vm383 = vcmp.ge.f32.partialorder %v355, 0.0
        %vm384 = vcmp.ge.f32.partialorder %v356, 0.0
        %vm385 = vcmp.ge.f32.partialorder %v357, 0.0
        %vm386 = vcmp.ge.f32.partialorder %v358, 0.0
        %v387 = vmul.f32 %v331, 0.01
        %v388 = vmul.f32 %v332, 0.01
        %v389 = vmul.f32 %v333, 0.01
        %v390 = vmul.f32 %v334, 0.01
        %v391 = vmul.f32 %v335, 0.01
        %v392 = vmul.f32 %v336, 0.01
        %v393 = vmul.f32 %v337, 0.01
        %v394 = vmul.f32 %v338, 0.01
        %v395 = vmul.f32 %v339, 0.01
        %v396 = vmul.f32 %v340, 0.01
        %v397 = vmul.f32 %v341, 0.01
        %v398 = vmul.f32 %v342, 0.01
        %v399 = vmul.f32 %v343, 0.01
        %v400 = vmul.f32 %v344, 0.01
        %v401 = vmul.f32 %v345, 0.01
        %v402 = vmul.f32 %v346, 0.01
        %v403 = vmul.f32 %v347, 0.01
        %v404 = vmul.f32 %v348, 0.01
        %v405 = vmul.f32 %v349, 0.01
        %v406 = vmul.f32 %v350, 0.01
        %v407 = vmul.f32 %v351, 0.01
        %v408 = vmul.f32 %v352, 0.01
        %v409 = vmul.f32 %v353, 0.01
        %v410 = vmul.f32 %v354, 0.01
        %v411 = vmul.f32 %v355, 0.01
        %v412 = vmul.f32 %v356, 0.01
        %v413 = vmul.f32 %v357, 0.01
        %v414 = vmul.f32 %v358, 0.01
        %v415 = vsel %vm359, %v331, %v387
        %v416 = vsel %vm360, %v332, %v388
        %v417 = vsel %vm361, %v333, %v389
        %v418 = vsel %vm362, %v334, %v390
        %v419 = vsel %vm363, %v335, %v391
        %v420 = vsel %vm364, %v336, %v392
        %v421 = vsel %vm365, %v337, %v393
        %v422 = vsel %vm366, %v338, %v394
        %v423 = vsel %vm367, %v339, %v395
        %v424 = vsel %vm368, %v340, %v396
        %v425 = vsel %vm369, %v341, %v397
        %v426 = vsel %vm370, %v342, %v398
        %v427 = vsel %vm371, %v343, %v399
        %v428 = vsel %vm372, %v344, %v400
        %v429 = vsel %vm373, %v345, %v401
        %v430 = vsel %vm374, %v346, %v402
        %v431 = vsel %vm375, %v347, %v403
        %v432 = vsel %vm376, %v348, %v404
        %v433 = vsel %vm377, %v349, %v405
        %v434 = vsel %vm378, %v350, %v406
        %v435 = vsel %vm379, %v351, %v407
        %v436 = vsel %vm380, %v352, %v408
        %v437 = vsel %vm381, %v353, %v409
        %v438 = vsel %vm382, %v354, %v410
        %v439 = vsel %vm383, %v355, %v411
        %v440 = vsel %vm384, %v356, %v412
        %v441 = vsel %vm385, %v357, %v413
        %v442 = vsel %vm386, %v358, %v414
        %v443 = vld [vmem:[#allocation2 + $0x18] sm:$0xff]
        %v444 = vld [vmem:[#allocation2 + $0x20] sm:$0xff]
        %v445 = vld [vmem:[#allocation2 + $0x28] sm:$0x3]
        %v446 = vld [vmem:[#allocation2] sm:$0xff]
        %448 = vset.pattern.permute.xlu0 34
        %449 = vperm.xlu0 %448, %v446
        %v450 = vpop.permute.xlu0 %449
        %452 = vset.pattern.permute.xlu0 34
        %453 = vperm.xlu0 %452, %v207
        %v454 = vpop.permute.xlu0 %453
        %456 = vset.pattern.permute.xlu0 34
        %457 = vperm.xlu0 %456, %v208
        %v458 = vpop.permute.xlu0 %457
        %vm460 = vcmask 80896
        %v462 = vsel %vm460, %v443, 0
        %v465 = vsel %vm460, %v444, 0
        %v468 = vsel %vm460, %v445, 0
        %vm470 = vcmask 1041408
        %v472 = vsel %vm470, %v429, 0
        %v475 = vsel %vm470, %v430, 0
        %v478 = vsel %vm470, %v431, 0
        %v481 = vsel %vm470, %v432, 0
        %v484 = vsel %vm470, %v433, 0
        %v487 = vsel %vm470, %v434, 0
        %v490 = vsel %vm470, %v435, 0
        %v493 = vsel %vm470, %v436, 0
        %v496 = vsel %vm470, %v437, 0
        %v499 = vsel %vm470, %v438, 0
        %v502 = vsel %vm470, %v439, 0
        %v505 = vsel %vm470, %v440, 0
        %v508 = vsel %vm470, %v441, 0
        %v511 = vsel %vm470, %v442, 0
        %513 = vmatprep.subr.mxu0 %v416
        %514 = vmatpush1.msra.mxu0 %v415
        %515 = vmatprep.subr.mxu0 %v475
        %516 = vmatpush1.msra.mxu0 %v472
        %517 = vmatprep.subr.mxu0 0.0
        %518 = vmatpush1.msra.mxu0 0.0
        %519 = vmatprep.subr.mxu0 0.0
        %520 = vmatpush1.msra.mxu0 0.0
        %521 = vmatprep.subr.mxu0 0.0
        %522 = vmatpush1.msra.mxu0 0.0
        %523 = vmatprep.subr.mxu0 0.0
        %524 = vmatpush1.msra.mxu0 0.0
        %525 = vmatprep.subr.mxu0 0.0
        %526 = vmatpush1.msra.mxu0 0.0
        %527 = vmatprep.subr.mxu0 0.0
        %528 = vmatpush1.msra.mxu0 0.0
        %529 = vmatprep.subr.mxu0 0.0
        %530 = vmatpush1.msra.mxu0 0.0
        %531 = vmatprep.subr.mxu0 0.0
        %532 = vmatpush1.msra.mxu0 0.0
        %533 = vmatprep.subr.mxu0 0.0
        %534 = vmatpush1.msra.mxu0 0.0
        %535 = vmatprep.subr.mxu0 0.0
        %536 = vmatpush1.msra.mxu0 0.0
        %537 = vmatprep.subr.mxu0 0.0
        %538 = vmatpush1.msra.mxu0 0.0
        %539 = vmatprep.subr.mxu0 0.0
        %540 = vmatpush1.msra.mxu0 0.0
        %541 = vmatprep.subr.mxu0 0.0
        %542 = vmatpush1.msra.mxu0 0.0
        %543 = vmatprep.subr.mxu0 0.0
        %544 = vmatpush1.msra.mxu0 0.0
        %545 = vmatprep.subr.mxu0 0.0
        %546 = vmatpush1.msra.mxu0 0.0
        %547 = vmatprep.subr.mxu0 0.0
        %548 = vmatpush1.msra.mxu0 0.0
        %549 = vmatprep.subr.mxu0 0.0
        %550 = vmatpush1.msra.mxu0 0.0
        %551 = vmatprep.subr.mxu0 0.0
        %552 = vmatpush1.msra.mxu0 0.0
        %553 = vmatprep.subr.mxu0 0.0
        %554 = vmatpush1.msra.mxu0 0.0
        %555 = vmatprep.subr.mxu0 0.0
        %556 = vmatpush1.msra.mxu0 0.0
        %557 = vmatprep.subr.mxu0 0.0
        %558 = vmatpush1.msra.mxu0 0.0
        %559 = vmatprep.subr.mxu0 0.0
        %560 = vmatpush1.msra.mxu0 0.0
        %561 = vmatprep.subr.mxu0 0.0
        %562 = vmatpush1.msra.mxu0 0.0
        %563 = vmatprep.subr.mxu0 0.0
        %564 = vmatpush1.msra.mxu0 0.0
        %565 = vmatprep.subr.mxu0 0.0
        %566 = vmatpush1.msra.mxu0 0.0
        %567 = vmatprep.subr.mxu0 0.0
        %568 = vmatpush1.msra.mxu0 0.0
        %569 = vmatprep.subr.mxu0 0.0
        %570 = vmatpush1.msra.mxu0 0.0
        %571 = vmatprep.subr.mxu0 0.0
        %572 = vmatpush1.msra.mxu0 0.0
        %573 = vmatprep.subr.mxu0 0.0
        %574 = vmatpush1.msra.mxu0 0.0
        %575 = vmatprep.subr.mxu0 0.0
        %576 = vmatpush1.msra.mxu0 0.0
        %577 = vmatprep.mubr.f32.mxu0 0.0
        %578 = vmatmul.mubr.f32.gmra.mrb[0].mxu0 %v462
        %v579 = vpop.f32.mrb[0].mxu0
        %v580 = vadd.f32 %v450, %v579
        %v581 = vpop.f32.mrb[0].mxu0
        %v582 = vadd.f32 %v450, %v581
        %583 = vmatprep.mubr.f32.mxu0 0.0
        %584 = vmatmul.mubr.f32.gmra.mrb[0].mxu0 %v465
        %v585 = vpop.f32.mrb[0].mxu0
        %v586 = vadd.f32 %v454, %v585
        %v587 = vpop.f32.mrb[0].mxu0
        %v588 = vadd.f32 %v454, %v587
        %589 = vmatprep.mubr.f32.mxu0 0.0
        %590 = vmatmul.mubr.f32.gmra.mrb[0].mxu0 %v468
        %v591 = vpop.f32.mrb[0].mxu0
        %v592 = vadd.f32 %v458, %v591
        %v593 = vpop.f32.mrb[0].mxu0
        %v594 = vadd.f32 %v458, %v593
        %595 = vdwg.mxu0
        %596 = vmatprep.subr.mxu0 %v418
        %597 = vmatpush1.msra.mxu0 %v417
        %598 = vmatprep.subr.mxu0 %v481
        %599 = vmatpush1.msra.mxu0 %v478
        %600 = vmatprep.subr.mxu0 0.0
        %601 = vmatpush1.msra.mxu0 0.0
        %602 = vmatprep.subr.mxu0 0.0
        %603 = vmatpush1.msra.mxu0 0.0
        %604 = vmatprep.subr.mxu0 0.0
        %605 = vmatpush1.msra.mxu0 0.0
        %606 = vmatprep.subr.mxu0 0.0
        %607 = vmatpush1.msra.mxu0 0.0
        %608 = vmatprep.subr.mxu0 0.0
        %609 = vmatpush1.msra.mxu0 0.0
        %610 = vmatprep.subr.mxu0 0.0
        %611 = vmatpush1.msra.mxu0 0.0
        %612 = vmatprep.subr.mxu0 0.0
        %613 = vmatpush1.msra.mxu0 0.0
        %614 = vmatprep.subr.mxu0 0.0
        %615 = vmatpush1.msra.mxu0 0.0
        %616 = vmatprep.subr.mxu0 0.0
        %617 = vmatpush1.msra.mxu0 0.0
        %618 = vmatprep.subr.mxu0 0.0
        %619 = vmatpush1.msra.mxu0 0.0
        %620 = vmatprep.subr.mxu0 0.0
        %621 = vmatpush1.msra.mxu0 0.0
        %622 = vmatprep.subr.mxu0 0.0
        %623 = vmatpush1.msra.mxu0 0.0
        %624 = vmatprep.subr.mxu0 0.0
        %625 = vmatpush1.msra.mxu0 0.0
        %626 = vmatprep.subr.mxu0 0.0
        %627 = vmatpush1.msra.mxu0 0.0
        %628 = vmatprep.subr.mxu0 0.0
        %629 = vmatpush1.msra.mxu0 0.0
        %630 = vmatprep.subr.mxu0 0.0
        %631 = vmatpush1.msra.mxu0 0.0
        %632 = vmatprep.subr.mxu0 0.0
        %633 = vmatpush1.msra.mxu0 0.0
        %634 = vmatprep.subr.mxu0 0.0
        %635 = vmatpush1.msra.mxu0 0.0
        %636 = vmatprep.subr.mxu0 0.0
        %637 = vmatpush1.msra.mxu0 0.0
        %638 = vmatprep.subr.mxu0 0.0
        %639 = vmatpush1.msra.mxu0 0.0
        %640 = vmatprep.subr.mxu0 0.0
        %641 = vmatpush1.msra.mxu0 0.0
        %642 = vmatprep.subr.mxu0 0.0
        %643 = vmatpush1.msra.mxu0 0.0
        %644 = vmatprep.subr.mxu0 0.0
        %645 = vmatpush1.msra.mxu0 0.0
        %646 = vmatprep.subr.mxu0 0.0
        %647 = vmatpush1.msra.mxu0 0.0
        %648 = vmatprep.subr.mxu0 0.0
        %649 = vmatpush1.msra.mxu0 0.0
        %650 = vmatprep.subr.mxu0 0.0
        %651 = vmatpush1.msra.mxu0 0.0
        %652 = vmatprep.subr.mxu0 0.0
        %653 = vmatpush1.msra.mxu0 0.0
        %654 = vmatprep.subr.mxu0 0.0
        %655 = vmatpush1.msra.mxu0 0.0
        %656 = vmatprep.subr.mxu0 0.0
        %657 = vmatpush1.msra.mxu0 0.0
        %658 = vmatprep.subr.mxu0 0.0
        %659 = vmatpush1.msra.mxu0 0.0
        %660 = vmatprep.mubr.f32.mxu0 0.0
        %661 = vmatmul.mubr.f32.gmra.mrb[0].mxu0 %v462
        %v662 = vpop.f32.mrb[0].mxu0
        %v663 = vadd.f32 %v450, %v662
        %v664 = vpop.f32.mrb[0].mxu0
        %v665 = vadd.f32 %v450, %v664
        %666 = vmatprep.mubr.f32.mxu0 0.0
        %667 = vmatmul.mubr.f32.gmra.mrb[0].mxu0 %v465
        %v668 = vpop.f32.mrb[0].mxu0
        %v669 = vadd.f32 %v454, %v668
        %v670 = vpop.f32.mrb[0].mxu0
        %v671 = vadd.f32 %v454, %v670
        %672 = vmatprep.mubr.f32.mxu0 0.0
        %673 = vmatmul.mubr.f32.gmra.mrb[0].mxu0 %v468
        %v674 = vpop.f32.mrb[0].mxu0
        %v675 = vadd.f32 %v458, %v674
        %v676 = vpop.f32.mrb[0].mxu0
        %v677 = vadd.f32 %v458, %v676
        %678 = vdwg.mxu0
        %679 = vmatprep.subr.mxu0 %v420
        %680 = vmatpush1.msra.mxu0 %v419
        %681 = vmatprep.subr.mxu0 %v487
        %682 = vmatpush1.msra.mxu0 %v484
        %683 = vmatprep.subr.mxu0 0.0
        %684 = vmatpush1.msra.mxu0 0.0
        %685 = vmatprep.subr.mxu0 0.0
        %686 = vmatpush1.msra.mxu0 0.0
        %687 = vmatprep.subr.mxu0 0.0
        %688 = vmatpush1.msra.mxu0 0.0
        %689 = vmatprep.subr.mxu0 0.0
        %690 = vmatpush1.msra.mxu0 0.0
        %691 = vmatprep.subr.mxu0 0.0
        %692 = vmatpush1.msra.mxu0 0.0
        %693 = vmatprep.subr.mxu0 0.0
        %694 = vmatpush1.msra.mxu0 0.0
        %695 = vmatprep.subr.mxu0 0.0
        %696 = vmatpush1.msra.mxu0 0.0
        %697 = vmatprep.subr.mxu0 0.0
        %698 = vmatpush1.msra.mxu0 0.0
        %699 = vmatprep.subr.mxu0 0.0
        %700 = vmatpush1.msra.mxu0 0.0
        %701 = vmatprep.subr.mxu0 0.0
        %702 = vmatpush1.msra.mxu0 0.0
        %703 = vmatprep.subr.mxu0 0.0
        %704 = vmatpush1.msra.mxu0 0.0
        %705 = vmatprep.subr.mxu0 0.0
        %706 = vmatpush1.msra.mxu0 0.0
        %707 = vmatprep.subr.mxu0 0.0
        %708 = vmatpush1.msra.mxu0 0.0
        %709 = vmatprep.subr.mxu0 0.0
        %710 = vmatpush1.msra.mxu0 0.0
        %711 = vmatprep.subr.mxu0 0.0
        %712 = vmatpush1.msra.mxu0 0.0
        %713 = vmatprep.subr.mxu0 0.0
        %714 = vmatpush1.msra.mxu0 0.0
        %715 = vmatprep.subr.mxu0 0.0
        %716 = vmatpush1.msra.mxu0 0.0
        %717 = vmatprep.subr.mxu0 0.0
        %718 = vmatpush1.msra.mxu0 0.0
        %719 = vmatprep.subr.mxu0 0.0
        %720 = vmatpush1.msra.mxu0 0.0
        %721 = vmatprep.subr.mxu0 0.0
        %722 = vmatpush1.msra.mxu0 0.0
        %723 = vmatprep.subr.mxu0 0.0
        %724 = vmatpush1.msra.mxu0 0.0
        %725 = vmatprep.subr.mxu0 0.0
        %726 = vmatpush1.msra.mxu0 0.0
        %727 = vmatprep.subr.mxu0 0.0
        %728 = vmatpush1.msra.mxu0 0.0
        %729 = vmatprep.subr.mxu0 0.0
        %730 = vmatpush1.msra.mxu0 0.0
        %731 = vmatprep.subr.mxu0 0.0
        %732 = vmatpush1.msra.mxu0 0.0
        %733 = vmatprep.subr.mxu0 0.0
        %734 = vmatpush1.msra.mxu0 0.0
        %735 = vmatprep.subr.mxu0 0.0
        %736 = vmatpush1.msra.mxu0 0.0
        %737 = vmatprep.subr.mxu0 0.0
        %738 = vmatpush1.msra.mxu0 0.0
        %739 = vmatprep.subr.mxu0 0.0
        %740 = vmatpush1.msra.mxu0 0.0
        %741 = vmatprep.subr.mxu0 0.0
        %742 = vmatpush1.msra.mxu0 0.0
        %743 = vmatprep.mubr.f32.mxu0 0.0
        %744 = vmatmul.mubr.f32.gmra.mrb[0].mxu0 %v462
        %v745 = vpop.f32.mrb[0].mxu0
        %v746 = vadd.f32 %v450, %v745
        %v747 = vpop.f32.mrb[0].mxu0
        %v748 = vadd.f32 %v450, %v747
        %749 = vmatprep.mubr.f32.mxu0 0.0
        %750 = vmatmul.mubr.f32.gmra.mrb[0].mxu0 %v465
        %v751 = vpop.f32.mrb[0].mxu0
        %v752 = vadd.f32 %v454, %v751
        %v753 = vpop.f32.mrb[0].mxu0
        %v754 = vadd.f32 %v454, %v753
        %755 = vmatprep.mubr.f32.mxu0 0.0
        %756 = vmatmul.mubr.f32.gmra.mrb[0].mxu0 %v468
        %v757 = vpop.f32.mrb[0].mxu0
        %v758 = vadd.f32 %v458, %v757
        %v759 = vpop.f32.mrb[0].mxu0
        %v760 = vadd.f32 %v458, %v759
        %761 = vdwg.mxu0
        %762 = vmatprep.subr.mxu0 %v422
        %763 = vmatpush1.msra.mxu0 %v421
        %764 = vmatprep.subr.mxu0 %v493
        %765 = vmatpush1.msra.mxu0 %v490
        %766 = vmatprep.subr.mxu0 0.0
        %767 = vmatpush1.msra.mxu0 0.0
        %768 = vmatprep.subr.mxu0 0.0
        %769 = vmatpush1.msra.mxu0 0.0
        %770 = vmatprep.subr.mxu0 0.0
        %771 = vmatpush1.msra.mxu0 0.0
        %772 = vmatprep.subr.mxu0 0.0
        %773 = vmatpush1.msra.mxu0 0.0
        %774 = vmatprep.subr.mxu0 0.0
        %775 = vmatpush1.msra.mxu0 0.0
        %776 = vmatprep.subr.mxu0 0.0
        %777 = vmatpush1.msra.mxu0 0.0
        %778 = vmatprep.subr.mxu0 0.0
        %779 = vmatpush1.msra.mxu0 0.0
        %780 = vmatprep.subr.mxu0 0.0
        %781 = vmatpush1.msra.mxu0 0.0
        %782 = vmatprep.subr.mxu0 0.0
        %783 = vmatpush1.msra.mxu0 0.0
        %784 = vmatprep.subr.mxu0 0.0
        %785 = vmatpush1.msra.mxu0 0.0
        %786 = vmatprep.subr.mxu0 0.0
        %787 = vmatpush1.msra.mxu0 0.0
        %788 = vmatprep.subr.mxu0 0.0
        %789 = vmatpush1.msra.mxu0 0.0
        %790 = vmatprep.subr.mxu0 0.0
        %791 = vmatpush1.msra.mxu0 0.0
        %792 = vmatprep.subr.mxu0 0.0
        %793 = vmatpush1.msra.mxu0 0.0
        %794 = vmatprep.subr.mxu0 0.0
        %795 = vmatpush1.msra.mxu0 0.0
        %796 = vmatprep.subr.mxu0 0.0
        %797 = vmatpush1.msra.mxu0 0.0
        %798 = vmatprep.subr.mxu0 0.0
        %799 = vmatpush1.msra.mxu0 0.0
        %800 = vmatprep.subr.mxu0 0.0
        %801 = vmatpush1.msra.mxu0 0.0
        %802 = vmatprep.subr.mxu0 0.0
        %803 = vmatpush1.msra.mxu0 0.0
        %804 = vmatprep.subr.mxu0 0.0
        %805 = vmatpush1.msra.mxu0 0.0
        %806 = vmatprep.subr.mxu0 0.0
        %807 = vmatpush1.msra.mxu0 0.0
        %808 = vmatprep.subr.mxu0 0.0
        %809 = vmatpush1.msra.mxu0 0.0
        %810 = vmatprep.subr.mxu0 0.0
        %811 = vmatpush1.msra.mxu0 0.0
        %812 = vmatprep.subr.mxu0 0.0
        %813 = vmatpush1.msra.mxu0 0.0
        %814 = vmatprep.subr.mxu0 0.0
        %815 = vmatpush1.msra.mxu0 0.0
        %816 = vmatprep.subr.mxu0 0.0
        %817 = vmatpush1.msra.mxu0 0.0
        %818 = vmatprep.subr.mxu0 0.0
        %819 = vmatpush1.msra.mxu0 0.0
        %820 = vmatprep.subr.mxu0 0.0
        %821 = vmatpush1.msra.mxu0 0.0
        %822 = vmatprep.subr.mxu0 0.0
        %823 = vmatpush1.msra.mxu0 0.0
        %824 = vmatprep.subr.mxu0 0.0
        %825 = vmatpush1.msra.mxu0 0.0
        %826 = vmatprep.mubr.f32.mxu0 0.0
        %827 = vmatmul.mubr.f32.gmra.mrb[0].mxu0 %v462
        %v828 = vpop.f32.mrb[0].mxu0
        %v829 = vadd.f32 %v450, %v828
        %v830 = vpop.f32.mrb[0].mxu0
        %v831 = vadd.f32 %v450, %v830
        %832 = vmatprep.mubr.f32.mxu0 0.0
        %833 = vmatmul.mubr.f32.gmra.mrb[0].mxu0 %v465
        %v834 = vpop.f32.mrb[0].mxu0
        %v835 = vadd.f32 %v454, %v834
        %v836 = vpop.f32.mrb[0].mxu0
        %v837 = vadd.f32 %v454, %v836
        %838 = vmatprep.mubr.f32.mxu0 0.0
        %839 = vmatmul.mubr.f32.gmra.mrb[0].mxu0 %v468
        %v840 = vpop.f32.mrb[0].mxu0
        %v841 = vadd.f32 %v458, %v840
        %v842 = vpop.f32.mrb[0].mxu0
        %v843 = vadd.f32 %v458, %v842
        %844 = vdwg.mxu0
        %845 = vmatprep.subr.mxu0 %v424
        %846 = vmatpush1.msra.mxu0 %v423
        %847 = vmatprep.subr.mxu0 %v499
        %848 = vmatpush1.msra.mxu0 %v496
        %849 = vmatprep.subr.mxu0 0.0
        %850 = vmatpush1.msra.mxu0 0.0
        %851 = vmatprep.subr.mxu0 0.0
        %852 = vmatpush1.msra.mxu0 0.0
        %853 = vmatprep.subr.mxu0 0.0
        %854 = vmatpush1.msra.mxu0 0.0
        %855 = vmatprep.subr.mxu0 0.0
        %856 = vmatpush1.msra.mxu0 0.0
        %857 = vmatprep.subr.mxu0 0.0
        %858 = vmatpush1.msra.mxu0 0.0
        %859 = vmatprep.subr.mxu0 0.0
        %860 = vmatpush1.msra.mxu0 0.0
        %861 = vmatprep.subr.mxu0 0.0
        %862 = vmatpush1.msra.mxu0 0.0
        %863 = vmatprep.subr.mxu0 0.0
        %864 = vmatpush1.msra.mxu0 0.0
        %865 = vmatprep.subr.mxu0 0.0
        %866 = vmatpush1.msra.mxu0 0.0
        %867 = vmatprep.subr.mxu0 0.0
        %868 = vmatpush1.msra.mxu0 0.0
        %869 = vmatprep.subr.mxu0 0.0
        %870 = vmatpush1.msra.mxu0 0.0
        %871 = vmatprep.subr.mxu0 0.0
        %872 = vmatpush1.msra.mxu0 0.0
        %873 = vmatprep.subr.mxu0 0.0
        %874 = vmatpush1.msra.mxu0 0.0
        %875 = vmatprep.subr.mxu0 0.0
        %876 = vmatpush1.msra.mxu0 0.0
        %877 = vmatprep.subr.mxu0 0.0
        %878 = vmatpush1.msra.mxu0 0.0
        %879 = vmatprep.subr.mxu0 0.0
        %880 = vmatpush1.msra.mxu0 0.0
        %881 = vmatprep.subr.mxu0 0.0
        %882 = vmatpush1.msra.mxu0 0.0
        %883 = vmatprep.subr.mxu0 0.0
        %884 = vmatpush1.msra.mxu0 0.0
        %885 = vmatprep.subr.mxu0 0.0
        %886 = vmatpush1.msra.mxu0 0.0
        %887 = vmatprep.subr.mxu0 0.0
        %888 = vmatpush1.msra.mxu0 0.0
        %889 = vmatprep.subr.mxu0 0.0
        %890 = vmatpush1.msra.mxu0 0.0
        %891 = vmatprep.subr.mxu0 0.0
        %892 = vmatpush1.msra.mxu0 0.0
        %893 = vmatprep.subr.mxu0 0.0
        %894 = vmatpush1.msra.mxu0 0.0
        %895 = vmatprep.subr.mxu0 0.0
        %896 = vmatpush1.msra.mxu0 0.0
        %897 = vmatprep.subr.mxu0 0.0
        %898 = vmatpush1.msra.mxu0 0.0
        %899 = vmatprep.subr.mxu0 0.0
        %900 = vmatpush1.msra.mxu0 0.0
        %901 = vmatprep.subr.mxu0 0.0
        %902 = vmatpush1.msra.mxu0 0.0
        %903 = vmatprep.subr.mxu0 0.0
        %904 = vmatpush1.msra.mxu0 0.0
        %905 = vmatprep.subr.mxu0 0.0
        %906 = vmatpush1.msra.mxu0 0.0
        %907 = vmatprep.subr.mxu0 0.0
        %908 = vmatpush1.msra.mxu0 0.0
        %909 = vmatprep.mubr.f32.mxu0 0.0
        %910 = vmatmul.mubr.f32.gmra.mrb[0].mxu0 %v462
        %v911 = vpop.f32.mrb[0].mxu0
        %v912 = vadd.f32 %v450, %v911
        %v913 = vpop.f32.mrb[0].mxu0
        %v914 = vadd.f32 %v450, %v913
        %915 = vmatprep.mubr.f32.mxu0 0.0
        %916 = vmatmul.mubr.f32.gmra.mrb[0].mxu0 %v465
        %v917 = vpop.f32.mrb[0].mxu0
        %v918 = vadd.f32 %v454, %v917
        %v919 = vpop.f32.mrb[0].mxu0
        %v920 = vadd.f32 %v454, %v919
        %921 = vmatprep.mubr.f32.mxu0 0.0
        %922 = vmatmul.mubr.f32.gmra.mrb[0].mxu0 %v468
        %v923 = vpop.f32.mrb[0].mxu0
        %v924 = vadd.f32 %v458, %v923
        %v925 = vpop.f32.mrb[0].mxu0
        %v926 = vadd.f32 %v458, %v925
        %927 = vdwg.mxu0
        %928 = vmatprep.subr.mxu0 %v426
        %929 = vmatpush1.msra.mxu0 %v425
        %930 = vmatprep.subr.mxu0 %v505
        %931 = vmatpush1.msra.mxu0 %v502
        %932 = vmatprep.subr.mxu0 0.0
        %933 = vmatpush1.msra.mxu0 0.0
        %934 = vmatprep.subr.mxu0 0.0
        %935 = vmatpush1.msra.mxu0 0.0
        %936 = vmatprep.subr.mxu0 0.0
        %937 = vmatpush1.msra.mxu0 0.0
        %938 = vmatprep.subr.mxu0 0.0
        %939 = vmatpush1.msra.mxu0 0.0
        %940 = vmatprep.subr.mxu0 0.0
        %941 = vmatpush1.msra.mxu0 0.0
        %942 = vmatprep.subr.mxu0 0.0
        %943 = vmatpush1.msra.mxu0 0.0
        %944 = vmatprep.subr.mxu0 0.0
        %945 = vmatpush1.msra.mxu0 0.0
        %946 = vmatprep.subr.mxu0 0.0
        %947 = vmatpush1.msra.mxu0 0.0
        %948 = vmatprep.subr.mxu0 0.0
        %949 = vmatpush1.msra.mxu0 0.0
        %950 = vmatprep.subr.mxu0 0.0
        %951 = vmatpush1.msra.mxu0 0.0
        %952 = vmatprep.subr.mxu0 0.0
        %953 = vmatpush1.msra.mxu0 0.0
        %954 = vmatprep.subr.mxu0 0.0
        %955 = vmatpush1.msra.mxu0 0.0
        %956 = vmatprep.subr.mxu0 0.0
        %957 = vmatpush1.msra.mxu0 0.0
        %958 = vmatprep.subr.mxu0 0.0
        %959 = vmatpush1.msra.mxu0 0.0
        %960 = vmatprep.subr.mxu0 0.0
        %961 = vmatpush1.msra.mxu0 0.0
        %962 = vmatprep.subr.mxu0 0.0
        %963 = vmatpush1.msra.mxu0 0.0
        %964 = vmatprep.subr.mxu0 0.0
        %965 = vmatpush1.msra.mxu0 0.0
        %966 = vmatprep.subr.mxu0 0.0
        %967 = vmatpush1.msra.mxu0 0.0
        %968 = vmatprep.subr.mxu0 0.0
        %969 = vmatpush1.msra.mxu0 0.0
        %970 = vmatprep.subr.mxu0 0.0
        %971 = vmatpush1.msra.mxu0 0.0
        %972 = vmatprep.subr.mxu0 0.0
        %973 = vmatpush1.msra.mxu0 0.0
        %974 = vmatprep.subr.mxu0 0.0
        %975 = vmatpush1.msra.mxu0 0.0
        %976 = vmatprep.subr.mxu0 0.0
        %977 = vmatpush1.msra.mxu0 0.0
        %978 = vmatprep.subr.mxu0 0.0
        %979 = vmatpush1.msra.mxu0 0.0
        %980 = vmatprep.subr.mxu0 0.0
        %981 = vmatpush1.msra.mxu0 0.0
        %982 = vmatprep.subr.mxu0 0.0
        %983 = vmatpush1.msra.mxu0 0.0
        %984 = vmatprep.subr.mxu0 0.0
        %985 = vmatpush1.msra.mxu0 0.0
        %986 = vmatprep.subr.mxu0 0.0
        %987 = vmatpush1.msra.mxu0 0.0
        %988 = vmatprep.subr.mxu0 0.0
        %989 = vmatpush1.msra.mxu0 0.0
        %990 = vmatprep.subr.mxu0 0.0
        %991 = vmatpush1.msra.mxu0 0.0
        %992 = vmatprep.mubr.f32.mxu0 0.0
        %993 = vmatmul.mubr.f32.gmra.mrb[0].mxu0 %v462
        %v994 = vpop.f32.mrb[0].mxu0
        %v995 = vadd.f32 %v450, %v994
        %v996 = vpop.f32.mrb[0].mxu0
        %v997 = vadd.f32 %v450, %v996
        %998 = vmatprep.mubr.f32.mxu0 0.0
        %999 = vmatmul.mubr.f32.gmra.mrb[0].mxu0 %v465
        %v1000 = vpop.f32.mrb[0].mxu0
        %v1001 = vadd.f32 %v454, %v1000
        %v1002 = vpop.f32.mrb[0].mxu0
        %v1003 = vadd.f32 %v454, %v1002
        %1004 = vmatprep.mubr.f32.mxu0 0.0
        %1005 = vmatmul.mubr.f32.gmra.mrb[0].mxu0 %v468
        %v1006 = vpop.f32.mrb[0].mxu0
        %v1007 = vadd.f32 %v458, %v1006
        %v1008 = vpop.f32.mrb[0].mxu0
        %v1009 = vadd.f32 %v458, %v1008
        %1010 = vdwg.mxu0
        %1011 = vmatprep.subr.mxu0 %v428
        %1012 = vmatpush1.msra.mxu0 %v427
        %1013 = vmatprep.subr.mxu0 %v511
        %1014 = vmatpush1.msra.mxu0 %v508
        %1015 = vmatprep.subr.mxu0 0.0
        %1016 = vmatpush1.msra.mxu0 0.0
        %1017 = vmatprep.subr.mxu0 0.0
        %1018 = vmatpush1.msra.mxu0 0.0
        %1019 = vmatprep.subr.mxu0 0.0
        %1020 = vmatpush1.msra.mxu0 0.0
        %1021 = vmatprep.subr.mxu0 0.0
        %1022 = vmatpush1.msra.mxu0 0.0
        %1023 = vmatprep.subr.mxu0 0.0
        %1024 = vmatpush1.msra.mxu0 0.0
        %1025 = vmatprep.subr.mxu0 0.0
        %1026 = vmatpush1.msra.mxu0 0.0
        %1027 = vmatprep.subr.mxu0 0.0
        %1028 = vmatpush1.msra.mxu0 0.0
        %1029 = vmatprep.subr.mxu0 0.0
        %1030 = vmatpush1.msra.mxu0 0.0
        %1031 = vmatprep.subr.mxu0 0.0
        %1032 = vmatpush1.msra.mxu0 0.0
        %1033 = vmatprep.subr.mxu0 0.0
        %1034 = vmatpush1.msra.mxu0 0.0
        %1035 = vmatprep.subr.mxu0 0.0
        %1036 = vmatpush1.msra.mxu0 0.0
        %1037 = vmatprep.subr.mxu0 0.0
        %1038 = vmatpush1.msra.mxu0 0.0
        %1039 = vmatprep.subr.mxu0 0.0
        %1040 = vmatpush1.msra.mxu0 0.0
        %1041 = vmatprep.subr.mxu0 0.0
        %1042 = vmatpush1.msra.mxu0 0.0
        %1043 = vmatprep.subr.mxu0 0.0
        %1044 = vmatpush1.msra.mxu0 0.0
        %1045 = vmatprep.subr.mxu0 0.0
        %1046 = vmatpush1.msra.mxu0 0.0
        %1047 = vmatprep.subr.mxu0 0.0
        %1048 = vmatpush1.msra.mxu0 0.0
        %1049 = vmatprep.subr.mxu0 0.0
        %1050 = vmatpush1.msra.mxu0 0.0
        %1051 = vmatprep.subr.mxu0 0.0
        %1052 = vmatpush1.msra.mxu0 0.0
        %1053 = vmatprep.subr.mxu0 0.0
        %1054 = vmatpush1.msra.mxu0 0.0
        %1055 = vmatprep.subr.mxu0 0.0
        %1056 = vmatpush1.msra.mxu0 0.0
        %1057 = vmatprep.subr.mxu0 0.0
        %1058 = vmatpush1.msra.mxu0 0.0
        %1059 = vmatprep.subr.mxu0 0.0
        %1060 = vmatpush1.msra.mxu0 0.0
        %1061 = vmatprep.subr.mxu0 0.0
        %1062 = vmatpush1.msra.mxu0 0.0
        %1063 = vmatprep.subr.mxu0 0.0
        %1064 = vmatpush1.msra.mxu0 0.0
        %1065 = vmatprep.subr.mxu0 0.0
        %1066 = vmatpush1.msra.mxu0 0.0
        %1067 = vmatprep.subr.mxu0 0.0
        %1068 = vmatpush1.msra.mxu0 0.0
        %1069 = vmatprep.subr.mxu0 0.0
        %1070 = vmatpush1.msra.mxu0 0.0
        %1071 = vmatprep.subr.mxu0 0.0
        %1072 = vmatpush1.msra.mxu0 0.0
        %1073 = vmatprep.subr.mxu0 0.0
        %1074 = vmatpush1.msra.mxu0 0.0
        %1075 = vmatprep.mubr.f32.mxu0 0.0
        %1076 = vmatmul.mubr.f32.gmra.mrb[0].mxu0 %v462
        %v1077 = vpop.f32.mrb[0].mxu0
        %v1078 = vadd.f32 %v450, %v1077
        %v1079 = vpop.f32.mrb[0].mxu0
        %v1080 = vadd.f32 %v450, %v1079
        %1081 = vmatprep.mubr.f32.mxu0 0.0
        %1082 = vmatmul.mubr.f32.gmra.mrb[0].mxu0 %v465
        %v1083 = vpop.f32.mrb[0].mxu0
        %v1084 = vadd.f32 %v454, %v1083
        %v1085 = vpop.f32.mrb[0].mxu0
        %v1086 = vadd.f32 %v454, %v1085
        %1087 = vmatprep.mubr.f32.mxu0 0.0
        %1088 = vmatmul.mubr.f32.gmra.mrb[0].mxu0 %v468
        %v1089 = vpop.f32.mrb[0].mxu0
        %v1090 = vadd.f32 %v458, %v1089
        %v1091 = vpop.f32.mrb[0].mxu0
        %v1092 = vadd.f32 %v458, %v1091
        %1093 = vdwg.mxu0
        %vm1094 = vcmp.ge.f32.partialorder %v580, 0.0
        %vm1095 = vcmp.ge.f32.partialorder %v582, 0.0
        %vm1096 = vcmp.ge.f32.partialorder %v663, 0.0
        %vm1097 = vcmp.ge.f32.partialorder %v665, 0.0
        %vm1098 = vcmp.ge.f32.partialorder %v746, 0.0
        %vm1099 = vcmp.ge.f32.partialorder %v748, 0.0
        %vm1100 = vcmp.ge.f32.partialorder %v829, 0.0
        %vm1101 = vcmp.ge.f32.partialorder %v831, 0.0
        %vm1102 = vcmp.ge.f32.partialorder %v912, 0.0
        %vm1103 = vcmp.ge.f32.partialorder %v914, 0.0
        %vm1104 = vcmp.ge.f32.partialorder %v995, 0.0
        %vm1105 = vcmp.ge.f32.partialorder %v997, 0.0
        %vm1106 = vcmp.ge.f32.partialorder %v1078, 0.0
        %vm1107 = vcmp.ge.f32.partialorder %v1080, 0.0
        %vm1108 = vcmp.ge.f32.partialorder %v586, 0.0
        %vm1109 = vcmp.ge.f32.partialorder %v588, 0.0
        %vm1110 = vcmp.ge.f32.partialorder %v669, 0.0
        %vm1111 = vcmp.ge.f32.partialorder %v671, 0.0
        %vm1112 = vcmp.ge.f32.partialorder %v752, 0.0
        %vm1113 = vcmp.ge.f32.partialorder %v754, 0.0
        %vm1114 = vcmp.ge.f32.partialorder %v835, 0.0
        %vm1115 = vcmp.ge.f32.partialorder %v837, 0.0
        %vm1116 = vcmp.ge.f32.partialorder %v918, 0.0
        %vm1117 = vcmp.ge.f32.partialorder %v920, 0.0
        %vm1118 = vcmp.ge.f32.partialorder %v1001, 0.0
        %vm1119 = vcmp.ge.f32.partialorder %v1003, 0.0
        %vm1120 = vcmp.ge.f32.partialorder %v1084, 0.0
        %vm1121 = vcmp.ge.f32.partialorder %v1086, 0.0
        %vm1122 = vcmp.ge.f32.partialorder %v592, 0.0
        %vm1123 = vcmp.ge.f32.partialorder %v594, 0.0
        %vm1124 = vcmp.ge.f32.partialorder %v675, 0.0
        %vm1125 = vcmp.ge.f32.partialorder %v677, 0.0
        %vm1126 = vcmp.ge.f32.partialorder %v758, 0.0
        %vm1127 = vcmp.ge.f32.partialorder %v760, 0.0
        %vm1128 = vcmp.ge.f32.partialorder %v841, 0.0
        %vm1129 = vcmp.ge.f32.partialorder %v843, 0.0
        %vm1130 = vcmp.ge.f32.partialorder %v924, 0.0
        %vm1131 = vcmp.ge.f32.partialorder %v926, 0.0
        %vm1132 = vcmp.ge.f32.partialorder %v1007, 0.0
        %vm1133 = vcmp.ge.f32.partialorder %v1009, 0.0
        %vm1134 = vcmp.ge.f32.partialorder %v1090, 0.0
        %vm1135 = vcmp.ge.f32.partialorder %v1092, 0.0
        %v1136 = vmul.f32 %v580, 0.01
        %v1137 = vmul.f32 %v582, 0.01
        %v1138 = vmul.f32 %v663, 0.01
        %v1139 = vmul.f32 %v665, 0.01
        %v1140 = vmul.f32 %v746, 0.01
        %v1141 = vmul.f32 %v748, 0.01
        %v1142 = vmul.f32 %v829, 0.01
        %v1143 = vmul.f32 %v831, 0.01
        %v1144 = vmul.f32 %v912, 0.01
        %v1145 = vmul.f32 %v914, 0.01
        %v1146 = vmul.f32 %v995, 0.01
        %v1147 = vmul.f32 %v997, 0.01
        %v1148 = vmul.f32 %v1078, 0.01
        %v1149 = vmul.f32 %v1080, 0.01
        %v1150 = vmul.f32 %v586, 0.01
        %v1151 = vmul.f32 %v588, 0.01
        %v1152 = vmul.f32 %v669, 0.01
        %v1153 = vmul.f32 %v671, 0.01
        %v1154 = vmul.f32 %v752, 0.01
        %v1155 = vmul.f32 %v754, 0.01
        %v1156 = vmul.f32 %v835, 0.01
        %v1157 = vmul.f32 %v837, 0.01
        %v1158 = vmul.f32 %v918, 0.01
        %v1159 = vmul.f32 %v920, 0.01
        %v1160 = vmul.f32 %v1001, 0.01
        %v1161 = vmul.f32 %v1003, 0.01
        %v1162 = vmul.f32 %v1084, 0.01
        %v1163 = vmul.f32 %v1086, 0.01
        %v1164 = vmul.f32 %v592, 0.01
        %v1165 = vmul.f32 %v594, 0.01
        %v1166 = vmul.f32 %v675, 0.01
        %v1167 = vmul.f32 %v677, 0.01
        %v1168 = vmul.f32 %v758, 0.01
        %v1169 = vmul.f32 %v760, 0.01
        %v1170 = vmul.f32 %v841, 0.01
        %v1171 = vmul.f32 %v843, 0.01
        %v1172 = vmul.f32 %v924, 0.01
        %v1173 = vmul.f32 %v926, 0.01
        %v1174 = vmul.f32 %v1007, 0.01
        %v1175 = vmul.f32 %v1009, 0.01
        %v1176 = vmul.f32 %v1090, 0.01
        %v1177 = vmul.f32 %v1092, 0.01
        %v1178 = vsel %vm1094, %v580, %v1136
        %v1179 = vsel %vm1095, %v582, %v1137
        %v1180 = vsel %vm1096, %v663, %v1138
        %v1181 = vsel %vm1097, %v665, %v1139
        %v1182 = vsel %vm1098, %v746, %v1140
        %v1183 = vsel %vm1099, %v748, %v1141
        %v1184 = vsel %vm1100, %v829, %v1142
        %v1185 = vsel %vm1101, %v831, %v1143
        %v1186 = vsel %vm1102, %v912, %v1144
        %v1187 = vsel %vm1103, %v914, %v1145
        %v1188 = vsel %vm1104, %v995, %v1146
        %v1189 = vsel %vm1105, %v997, %v1147
        %v1190 = vsel %vm1106, %v1078, %v1148
        %v1191 = vsel %vm1107, %v1080, %v1149
        %v1192 = vsel %vm1108, %v586, %v1150
        %v1193 = vsel %vm1109, %v588, %v1151
        %v1194 = vsel %vm1110, %v669, %v1152
        %v1195 = vsel %vm1111, %v671, %v1153
        %v1196 = vsel %vm1112, %v752, %v1154
        %v1197 = vsel %vm1113, %v754, %v1155
        %v1198 = vsel %vm1114, %v835, %v1156
        %v1199 = vsel %vm1115, %v837, %v1157
        %v1200 = vsel %vm1116, %v918, %v1158
        %v1201 = vsel %vm1117, %v920, %v1159
        %v1202 = vsel %vm1118, %v1001, %v1160
        %v1203 = vsel %vm1119, %v1003, %v1161
        %v1204 = vsel %vm1120, %v1084, %v1162
        %v1205 = vsel %vm1121, %v1086, %v1163
        %v1206 = vsel %vm1122, %v592, %v1164
        %v1207 = vsel %vm1123, %v594, %v1165
        %v1208 = vsel %vm1124, %v675, %v1166
        %v1209 = vsel %vm1125, %v677, %v1167
        %v1210 = vsel %vm1126, %v758, %v1168
        %v1211 = vsel %vm1127, %v760, %v1169
        %v1212 = vsel %vm1128, %v841, %v1170
        %v1213 = vsel %vm1129, %v843, %v1171
        %v1214 = vsel %vm1130, %v924, %v1172
        %v1215 = vsel %vm1131, %v926, %v1173
        %v1216 = vsel %vm1132, %v1007, %v1174
        %v1217 = vsel %vm1133, %v1009, %v1175
        %v1218 = vsel %vm1134, %v1090, %v1176
        %v1219 = vsel %vm1135, %v1092, %v1177
        %v1220 = vld [vmem:[#allocation2 + $0x30] sm:$0xff]
        %v1221 = vld [vmem:[#allocation2 + $0x38] sm:$0x7f]
        %v1222 = vld [vmem:[#allocation2] sm:$0xff]
        %v1223 = vld [vmem:[#allocation2 + $0x8] sm:$0x7f]
        %1225 = vset.pattern.permute.xlu0 35
        %1226 = vperm.xlu0 %1225, %v1222
        %v1227 = vpop.permute.xlu0 %1226
        %1230 = vset.pattern.permute.xlu0 35
        %1231 = vperm.xlu0 %1230, %v1223
        %v1232 = vpop.permute.xlu0 %1231
        %vm1234 = vcmask 146432
        %v1236 = vsel %vm1234, %v1220, 0
        %v1239 = vsel %vm1234, %v1221, 0
        %v1242 = vsel %vm470, %v1206, 0
        %v1245 = vsel %vm470, %v1207, 0
        %v1248 = vsel %vm470, %v1208, 0
        %v1251 = vsel %vm470, %v1209, 0
        %v1254 = vsel %vm470, %v1210, 0
        %v1257 = vsel %vm470, %v1211, 0
        %v1260 = vsel %vm470, %v1212, 0
        %v1263 = vsel %vm470, %v1213, 0
        %v1266 = vsel %vm470, %v1214, 0
        %v1269 = vsel %vm470, %v1215, 0
        %v1272 = vsel %vm470, %v1216, 0
        %v1275 = vsel %vm470, %v1217, 0
        %v1278 = vsel %vm470, %v1218, 0
        %v1281 = vsel %vm470, %v1219, 0
        %1283 = vmatprep.subr.mxu0 %v1179
        %1284 = vmatpush1.msra.mxu0 %v1178
        %1285 = vmatprep.subr.mxu0 %v1193
        %1286 = vmatpush1.msra.mxu0 %v1192
        %1287 = vmatprep.subr.mxu0 %v1245
        %1288 = vmatpush1.msra.mxu0 %v1242
        %1289 = vmatprep.subr.mxu0 0.0
        %1290 = vmatpush1.msra.mxu0 0.0
        %1291 = vmatprep.subr.mxu0 0.0
        %1292 = vmatpush1.msra.mxu0 0.0
        %1293 = vmatprep.subr.mxu0 0.0
        %1294 = vmatpush1.msra.mxu0 0.0
        %1295 = vmatprep.subr.mxu0 0.0
        %1296 = vmatpush1.msra.mxu0 0.0
        %1297 = vmatprep.subr.mxu0 0.0
        %1298 = vmatpush1.msra.mxu0 0.0
        %1299 = vmatprep.subr.mxu0 0.0
        %1300 = vmatpush1.msra.mxu0 0.0
        %1301 = vmatprep.subr.mxu0 0.0
        %1302 = vmatpush1.msra.mxu0 0.0
        %1303 = vmatprep.subr.mxu0 0.0
        %1304 = vmatpush1.msra.mxu0 0.0
        %1305 = vmatprep.subr.mxu0 0.0
        %1306 = vmatpush1.msra.mxu0 0.0
        %1307 = vmatprep.subr.mxu0 0.0
        %1308 = vmatpush1.msra.mxu0 0.0
        %1309 = vmatprep.subr.mxu0 0.0
        %1310 = vmatpush1.msra.mxu0 0.0
        %1311 = vmatprep.subr.mxu0 0.0
        %1312 = vmatpush1.msra.mxu0 0.0
        %1313 = vmatprep.subr.mxu0 0.0
        %1314 = vmatpush1.msra.mxu0 0.0
        %1315 = vmatprep.subr.mxu0 0.0
        %1316 = vmatpush1.msra.mxu0 0.0
        %1317 = vmatprep.subr.mxu0 0.0
        %1318 = vmatpush1.msra.mxu0 0.0
        %1319 = vmatprep.subr.mxu0 0.0
        %1320 = vmatpush1.msra.mxu0 0.0
        %1321 = vmatprep.subr.mxu0 0.0
        %1322 = vmatpush1.msra.mxu0 0.0
        %1323 = vmatprep.subr.mxu0 0.0
        %1324 = vmatpush1.msra.mxu0 0.0
        %1325 = vmatprep.subr.mxu0 0.0
        %1326 = vmatpush1.msra.mxu0 0.0
        %1327 = vmatprep.subr.mxu0 0.0
        %1328 = vmatpush1.msra.mxu0 0.0
        %1329 = vmatprep.subr.mxu0 0.0
        %1330 = vmatpush1.msra.mxu0 0.0
        %1331 = vmatprep.subr.mxu0 0.0
        %1332 = vmatpush1.msra.mxu0 0.0
        %1333 = vmatprep.subr.mxu0 0.0
        %1334 = vmatpush1.msra.mxu0 0.0
        %1335 = vmatprep.subr.mxu0 0.0
        %1336 = vmatpush1.msra.mxu0 0.0
        %1337 = vmatprep.subr.mxu0 0.0
        %1338 = vmatpush1.msra.mxu0 0.0
        %1339 = vmatprep.subr.mxu0 0.0
        %1340 = vmatpush1.msra.mxu0 0.0
        %1341 = vmatprep.subr.mxu0 0.0
        %1342 = vmatpush1.msra.mxu0 0.0
        %1343 = vmatprep.subr.mxu0 0.0
        %1344 = vmatpush1.msra.mxu0 0.0
        %1345 = vmatprep.subr.mxu0 0.0
        %1346 = vmatpush1.msra.mxu0 0.0
        %1347 = vmatprep.mubr.f32.mxu0 0.0
        %1348 = vmatmul.mubr.f32.gmra.mrb[0].mxu0 %v1236
        %v1349 = vpop.f32.mrb[0].mxu0
        %v1350 = vadd.f32 %v1227, %v1349
        %v1351 = vpop.f32.mrb[0].mxu0
        %v1352 = vadd.f32 %v1227, %v1351
        %1353 = vmatprep.mubr.f32.mxu0 0.0
        %1354 = vmatmul.mubr.f32.gmra.mrb[0].mxu0 %v1239
        %v1355 = vpop.f32.mrb[0].mxu0
        %v1356 = vadd.f32 %v1232, %v1355
        %v1357 = vpop.f32.mrb[0].mxu0
        %v1358 = vadd.f32 %v1232, %v1357
        %1359 = vdwg.mxu0
        %1360 = vmatprep.subr.mxu0 %v1181
        %1361 = vmatpush1.msra.mxu0 %v1180
        %1362 = vmatprep.subr.mxu0 %v1195
        %1363 = vmatpush1.msra.mxu0 %v1194
        %1364 = vmatprep.subr.mxu0 %v1251
        %1365 = vmatpush1.msra.mxu0 %v1248
        %1366 = vmatprep.subr.mxu0 0.0
        %1367 = vmatpush1.msra.mxu0 0.0
        %1368 = vmatprep.subr.mxu0 0.0
        %1369 = vmatpush1.msra.mxu0 0.0
        %1370 = vmatprep.subr.mxu0 0.0
        %1371 = vmatpush1.msra.mxu0 0.0
        %1372 = vmatprep.subr.mxu0 0.0
        %1373 = vmatpush1.msra.mxu0 0.0
        %1374 = vmatprep.subr.mxu0 0.0
        %1375 = vmatpush1.msra.mxu0 0.0
        %1376 = vmatprep.subr.mxu0 0.0
        %1377 = vmatpush1.msra.mxu0 0.0
        %1378 = vmatprep.subr.mxu0 0.0
        %1379 = vmatpush1.msra.mxu0 0.0
        %1380 = vmatprep.subr.mxu0 0.0
        %1381 = vmatpush1.msra.mxu0 0.0
        %1382 = vmatprep.subr.mxu0 0.0
        %1383 = vmatpush1.msra.mxu0 0.0
        %1384 = vmatprep.subr.mxu0 0.0
        %1385 = vmatpush1.msra.mxu0 0.0
        %1386 = vmatprep.subr.mxu0 0.0
        %1387 = vmatpush1.msra.mxu0 0.0
        %1388 = vmatprep.subr.mxu0 0.0
        %1389 = vmatpush1.msra.mxu0 0.0
        %1390 = vmatprep.subr.mxu0 0.0
        %1391 = vmatpush1.msra.mxu0 0.0
        %1392 = vmatprep.subr.mxu0 0.0
        %1393 = vmatpush1.msra.mxu0 0.0
        %1394 = vmatprep.subr.mxu0 0.0
        %1395 = vmatpush1.msra.mxu0 0.0
        %1396 = vmatprep.subr.mxu0 0.0
        %1397 = vmatpush1.msra.mxu0 0.0
        %1398 = vmatprep.subr.mxu0 0.0
        %1399 = vmatpush1.msra.mxu0 0.0
        %1400 = vmatprep.subr.mxu0 0.0
        %1401 = vmatpush1.msra.mxu0 0.0
        %1402 = vmatprep.subr.mxu0 0.0
        %1403 = vmatpush1.msra.mxu0 0.0
        %1404 = vmatprep.subr.mxu0 0.0
        %1405 = vmatpush1.msra.mxu0 0.0
        %1406 = vmatprep.subr.mxu0 0.0
        %1407 = vmatpush1.msra.mxu0 0.0
        %1408 = vmatprep.subr.mxu0 0.0
        %1409 = vmatpush1.msra.mxu0 0.0
        %1410 = vmatprep.subr.mxu0 0.0
        %1411 = vmatpush1.msra.mxu0 0.0
        %1412 = vmatprep.subr.mxu0 0.0
        %1413 = vmatpush1.msra.mxu0 0.0
        %1414 = vmatprep.subr.mxu0 0.0
        %1415 = vmatpush1.msra.mxu0 0.0
        %1416 = vmatprep.subr.mxu0 0.0
        %1417 = vmatpush1.msra.mxu0 0.0
        %1418 = vmatprep.subr.mxu0 0.0
        %1419 = vmatpush1.msra.mxu0 0.0
        %1420 = vmatprep.subr.mxu0 0.0
        %1421 = vmatpush1.msra.mxu0 0.0
        %1422 = vmatprep.subr.mxu0 0.0
        %1423 = vmatpush1.msra.mxu0 0.0
        %1424 = vmatprep.mubr.f32.mxu0 0.0
        %1425 = vmatmul.mubr.f32.gmra.mrb[0].mxu0 %v1236
        %v1426 = vpop.f32.mrb[0].mxu0
        %v1427 = vadd.f32 %v1227, %v1426
        %v1428 = vpop.f32.mrb[0].mxu0
        %v1429 = vadd.f32 %v1227, %v1428
        %1430 = vmatprep.mubr.f32.mxu0 0.0
        %1431 = vmatmul.mubr.f32.gmra.mrb[0].mxu0 %v1239
        %v1432 = vpop.f32.mrb[0].mxu0
        %v1433 = vadd.f32 %v1232, %v1432
        %v1434 = vpop.f32.mrb[0].mxu0
        %v1435 = vadd.f32 %v1232, %v1434
        %1436 = vdwg.mxu0
        %1437 = vmatprep.subr.mxu0 %v1183
        %1438 = vmatpush1.msra.mxu0 %v1182
        %1439 = vmatprep.subr.mxu0 %v1197
        %1440 = vmatpush1.msra.mxu0 %v1196
        %1441 = vmatprep.subr.mxu0 %v1257
        %1442 = vmatpush1.msra.mxu0 %v1254
        %1443 = vmatprep.subr.mxu0 0.0
        %1444 = vmatpush1.msra.mxu0 0.0
        %1445 = vmatprep.subr.mxu0 0.0
        %1446 = vmatpush1.msra.mxu0 0.0
        %1447 = vmatprep.subr.mxu0 0.0
        %1448 = vmatpush1.msra.mxu0 0.0
        %1449 = vmatprep.subr.mxu0 0.0
        %1450 = vmatpush1.msra.mxu0 0.0
        %1451 = vmatprep.subr.mxu0 0.0
        %1452 = vmatpush1.msra.mxu0 0.0
        %1453 = vmatprep.subr.mxu0 0.0
        %1454 = vmatpush1.msra.mxu0 0.0
        %1455 = vmatprep.subr.mxu0 0.0
        %1456 = vmatpush1.msra.mxu0 0.0
        %1457 = vmatprep.subr.mxu0 0.0
        %1458 = vmatpush1.msra.mxu0 0.0
        %1459 = vmatprep.subr.mxu0 0.0
        %1460 = vmatpush1.msra.mxu0 0.0
        %1461 = vmatprep.subr.mxu0 0.0
        %1462 = vmatpush1.msra.mxu0 0.0
        %1463 = vmatprep.subr.mxu0 0.0
        %1464 = vmatpush1.msra.mxu0 0.0
        %1465 = vmatprep.subr.mxu0 0.0
        %1466 = vmatpush1.msra.mxu0 0.0
        %1467 = vmatprep.subr.mxu0 0.0
        %1468 = vmatpush1.msra.mxu0 0.0
        %1469 = vmatprep.subr.mxu0 0.0
        %1470 = vmatpush1.msra.mxu0 0.0
        %1471 = vmatprep.subr.mxu0 0.0
        %1472 = vmatpush1.msra.mxu0 0.0
        %1473 = vmatprep.subr.mxu0 0.0
        %1474 = vmatpush1.msra.mxu0 0.0
        %1475 = vmatprep.subr.mxu0 0.0
        %1476 = vmatpush1.msra.mxu0 0.0
        %1477 = vmatprep.subr.mxu0 0.0
        %1478 = vmatpush1.msra.mxu0 0.0
        %1479 = vmatprep.subr.mxu0 0.0
        %1480 = vmatpush1.msra.mxu0 0.0
        %1481 = vmatprep.subr.mxu0 0.0
        %1482 = vmatpush1.msra.mxu0 0.0
        %1483 = vmatprep.subr.mxu0 0.0
        %1484 = vmatpush1.msra.mxu0 0.0
        %1485 = vmatprep.subr.mxu0 0.0
        %1486 = vmatpush1.msra.mxu0 0.0
        %1487 = vmatprep.subr.mxu0 0.0
        %1488 = vmatpush1.msra.mxu0 0.0
        %1489 = vmatprep.subr.mxu0 0.0
        %1490 = vmatpush1.msra.mxu0 0.0
        %1491 = vmatprep.subr.mxu0 0.0
        %1492 = vmatpush1.msra.mxu0 0.0
        %1493 = vmatprep.subr.mxu0 0.0
        %1494 = vmatpush1.msra.mxu0 0.0
        %1495 = vmatprep.subr.mxu0 0.0
        %1496 = vmatpush1.msra.mxu0 0.0
        %1497 = vmatprep.subr.mxu0 0.0
        %1498 = vmatpush1.msra.mxu0 0.0
        %1499 = vmatprep.subr.mxu0 0.0
        %1500 = vmatpush1.msra.mxu0 0.0
        %1501 = vmatprep.mubr.f32.mxu0 0.0
        %1502 = vmatmul.mubr.f32.gmra.mrb[0].mxu0 %v1236
        %v1503 = vpop.f32.mrb[0].mxu0
        %v1504 = vadd.f32 %v1227, %v1503
        %v1505 = vpop.f32.mrb[0].mxu0
        %v1506 = vadd.f32 %v1227, %v1505
        %1507 = vmatprep.mubr.f32.mxu0 0.0
        %1508 = vmatmul.mubr.f32.gmra.mrb[0].mxu0 %v1239
        %v1509 = vpop.f32.mrb[0].mxu0
        %v1510 = vadd.f32 %v1232, %v1509
        %v1511 = vpop.f32.mrb[0].mxu0
        %v1512 = vadd.f32 %v1232, %v1511
        %1513 = vdwg.mxu0
        %1514 = vmatprep.subr.mxu0 %v1185
        %1515 = vmatpush1.msra.mxu0 %v1184
        %1516 = vmatprep.subr.mxu0 %v1199
        %1517 = vmatpush1.msra.mxu0 %v1198
        %1518 = vmatprep.subr.mxu0 %v1263
        %1519 = vmatpush1.msra.mxu0 %v1260
        %1520 = vmatprep.subr.mxu0 0.0
        %1521 = vmatpush1.msra.mxu0 0.0
        %1522 = vmatprep.subr.mxu0 0.0
        %1523 = vmatpush1.msra.mxu0 0.0
        %1524 = vmatprep.subr.mxu0 0.0
        %1525 = vmatpush1.msra.mxu0 0.0
        %1526 = vmatprep.subr.mxu0 0.0
        %1527 = vmatpush1.msra.mxu0 0.0
        %1528 = vmatprep.subr.mxu0 0.0
        %1529 = vmatpush1.msra.mxu0 0.0
        %1530 = vmatprep.subr.mxu0 0.0
        %1531 = vmatpush1.msra.mxu0 0.0
        %1532 = vmatprep.subr.mxu0 0.0
        %1533 = vmatpush1.msra.mxu0 0.0
        %1534 = vmatprep.subr.mxu0 0.0
        %1535 = vmatpush1.msra.mxu0 0.0
        %1536 = vmatprep.subr.mxu0 0.0
        %1537 = vmatpush1.msra.mxu0 0.0
        %1538 = vmatprep.subr.mxu0 0.0
        %1539 = vmatpush1.msra.mxu0 0.0
        %1540 = vmatprep.subr.mxu0 0.0
        %1541 = vmatpush1.msra.mxu0 0.0
        %1542 = vmatprep.subr.mxu0 0.0
        %1543 = vmatpush1.msra.mxu0 0.0
        %1544 = vmatprep.subr.mxu0 0.0
        %1545 = vmatpush1.msra.mxu0 0.0
        %1546 = vmatprep.subr.mxu0 0.0
        %1547 = vmatpush1.msra.mxu0 0.0
        %1548 = vmatprep.subr.mxu0 0.0
        %1549 = vmatpush1.msra.mxu0 0.0
        %1550 = vmatprep.subr.mxu0 0.0
        %1551 = vmatpush1.msra.mxu0 0.0
        %1552 = vmatprep.subr.mxu0 0.0
        %1553 = vmatpush1.msra.mxu0 0.0
        %1554 = vmatprep.subr.mxu0 0.0
        %1555 = vmatpush1.msra.mxu0 0.0
        %1556 = vmatprep.subr.mxu0 0.0
        %1557 = vmatpush1.msra.mxu0 0.0
        %1558 = vmatprep.subr.mxu0 0.0
        %1559 = vmatpush1.msra.mxu0 0.0
        %1560 = vmatprep.subr.mxu0 0.0
        %1561 = vmatpush1.msra.mxu0 0.0
        %1562 = vmatprep.subr.mxu0 0.0
        %1563 = vmatpush1.msra.mxu0 0.0
        %1564 = vmatprep.subr.mxu0 0.0
        %1565 = vmatpush1.msra.mxu0 0.0
        %1566 = vmatprep.subr.mxu0 0.0
        %1567 = vmatpush1.msra.mxu0 0.0
        %1568 = vmatprep.subr.mxu0 0.0
        %1569 = vmatpush1.msra.mxu0 0.0
        %1570 = vmatprep.subr.mxu0 0.0
        %1571 = vmatpush1.msra.mxu0 0.0
        %1572 = vmatprep.subr.mxu0 0.0
        %1573 = vmatpush1.msra.mxu0 0.0
        %1574 = vmatprep.subr.mxu0 0.0
        %1575 = vmatpush1.msra.mxu0 0.0
        %1576 = vmatprep.subr.mxu0 0.0
        %1577 = vmatpush1.msra.mxu0 0.0
        %1578 = vmatprep.mubr.f32.mxu0 0.0
        %1579 = vmatmul.mubr.f32.gmra.mrb[0].mxu0 %v1236
        %v1580 = vpop.f32.mrb[0].mxu0
        %v1581 = vadd.f32 %v1227, %v1580
        %v1582 = vpop.f32.mrb[0].mxu0
        %v1583 = vadd.f32 %v1227, %v1582
        %1584 = vmatprep.mubr.f32.mxu0 0.0
        %1585 = vmatmul.mubr.f32.gmra.mrb[0].mxu0 %v1239
        %v1586 = vpop.f32.mrb[0].mxu0
        %v1587 = vadd.f32 %v1232, %v1586
        %v1588 = vpop.f32.mrb[0].mxu0
        %v1589 = vadd.f32 %v1232, %v1588
        %1590 = vdwg.mxu0
        %1591 = vmatprep.subr.mxu0 %v1187
        %1592 = vmatpush1.msra.mxu0 %v1186
        %1593 = vmatprep.subr.mxu0 %v1201
        %1594 = vmatpush1.msra.mxu0 %v1200
        %1595 = vmatprep.subr.mxu0 %v1269
        %1596 = vmatpush1.msra.mxu0 %v1266
        %1597 = vmatprep.subr.mxu0 0.0
        %1598 = vmatpush1.msra.mxu0 0.0
        %1599 = vmatprep.subr.mxu0 0.0
        %1600 = vmatpush1.msra.mxu0 0.0
        %1601 = vmatprep.subr.mxu0 0.0
        %1602 = vmatpush1.msra.mxu0 0.0
        %1603 = vmatprep.subr.mxu0 0.0
        %1604 = vmatpush1.msra.mxu0 0.0
        %1605 = vmatprep.subr.mxu0 0.0
        %1606 = vmatpush1.msra.mxu0 0.0
        %1607 = vmatprep.subr.mxu0 0.0
        %1608 = vmatpush1.msra.mxu0 0.0
        %1609 = vmatprep.subr.mxu0 0.0
        %1610 = vmatpush1.msra.mxu0 0.0
        %1611 = vmatprep.subr.mxu0 0.0
        %1612 = vmatpush1.msra.mxu0 0.0
        %1613 = vmatprep.subr.mxu0 0.0
        %1614 = vmatpush1.msra.mxu0 0.0
        %1615 = vmatprep.subr.mxu0 0.0
        %1616 = vmatpush1.msra.mxu0 0.0
        %1617 = vmatprep.subr.mxu0 0.0
        %1618 = vmatpush1.msra.mxu0 0.0
        %1619 = vmatprep.subr.mxu0 0.0
        %1620 = vmatpush1.msra.mxu0 0.0
        %1621 = vmatprep.subr.mxu0 0.0
        %1622 = vmatpush1.msra.mxu0 0.0
        %1623 = vmatprep.subr.mxu0 0.0
        %1624 = vmatpush1.msra.mxu0 0.0
        %1625 = vmatprep.subr.mxu0 0.0
        %1626 = vmatpush1.msra.mxu0 0.0
        %1627 = vmatprep.subr.mxu0 0.0
        %1628 = vmatpush1.msra.mxu0 0.0
        %1629 = vmatprep.subr.mxu0 0.0
        %1630 = vmatpush1.msra.mxu0 0.0
        %1631 = vmatprep.subr.mxu0 0.0
        %1632 = vmatpush1.msra.mxu0 0.0
        %1633 = vmatprep.subr.mxu0 0.0
        %1634 = vmatpush1.msra.mxu0 0.0
        %1635 = vmatprep.subr.mxu0 0.0
        %1636 = vmatpush1.msra.mxu0 0.0
        %1637 = vmatprep.subr.mxu0 0.0
        %1638 = vmatpush1.msra.mxu0 0.0
        %1639 = vmatprep.subr.mxu0 0.0
        %1640 = vmatpush1.msra.mxu0 0.0
        %1641 = vmatprep.subr.mxu0 0.0
        %1642 = vmatpush1.msra.mxu0 0.0
        %1643 = vmatprep.subr.mxu0 0.0
        %1644 = vmatpush1.msra.mxu0 0.0
        %1645 = vmatprep.subr.mxu0 0.0
        %1646 = vmatpush1.msra.mxu0 0.0
        %1647 = vmatprep.subr.mxu0 0.0
        %1648 = vmatpush1.msra.mxu0 0.0
        %1649 = vmatprep.subr.mxu0 0.0
        %1650 = vmatpush1.msra.mxu0 0.0
        %1651 = vmatprep.subr.mxu0 0.0
        %1652 = vmatpush1.msra.mxu0 0.0
        %1653 = vmatprep.subr.mxu0 0.0
        %1654 = vmatpush1.msra.mxu0 0.0
        %1655 = vmatprep.mubr.f32.mxu0 0.0
        %1656 = vmatmul.mubr.f32.gmra.mrb[0].mxu0 %v1236
        %v1657 = vpop.f32.mrb[0].mxu0
        %v1658 = vadd.f32 %v1227, %v1657
        %v1659 = vpop.f32.mrb[0].mxu0
        %v1660 = vadd.f32 %v1227, %v1659
        %1661 = vmatprep.mubr.f32.mxu0 0.0
        %1662 = vmatmul.mubr.f32.gmra.mrb[0].mxu0 %v1239
        %v1663 = vpop.f32.mrb[0].mxu0
        %v1664 = vadd.f32 %v1232, %v1663
        %v1665 = vpop.f32.mrb[0].mxu0
        %v1666 = vadd.f32 %v1232, %v1665
        %1667 = vdwg.mxu0
        %1668 = vmatprep.subr.mxu0 %v1189
        %1669 = vmatpush1.msra.mxu0 %v1188
        %1670 = vmatprep.subr.mxu0 %v1203
        %1671 = vmatpush1.msra.mxu0 %v1202
        %1672 = vmatprep.subr.mxu0 %v1275
        %1673 = vmatpush1.msra.mxu0 %v1272
        %1674 = vmatprep.subr.mxu0 0.0
        %1675 = vmatpush1.msra.mxu0 0.0
        %1676 = vmatprep.subr.mxu0 0.0
        %1677 = vmatpush1.msra.mxu0 0.0
        %1678 = vmatprep.subr.mxu0 0.0
        %1679 = vmatpush1.msra.mxu0 0.0
        %1680 = vmatprep.subr.mxu0 0.0
        %1681 = vmatpush1.msra.mxu0 0.0
        %1682 = vmatprep.subr.mxu0 0.0
        %1683 = vmatpush1.msra.mxu0 0.0
        %1684 = vmatprep.subr.mxu0 0.0
        %1685 = vmatpush1.msra.mxu0 0.0
        %1686 = vmatprep.subr.mxu0 0.0
        %1687 = vmatpush1.msra.mxu0 0.0
        %1688 = vmatprep.subr.mxu0 0.0
        %1689 = vmatpush1.msra.mxu0 0.0
        %1690 = vmatprep.subr.mxu0 0.0
        %1691 = vmatpush1.msra.mxu0 0.0
        %1692 = vmatprep.subr.mxu0 0.0
        %1693 = vmatpush1.msra.mxu0 0.0
        %1694 = vmatprep.subr.mxu0 0.0
        %1695 = vmatpush1.msra.mxu0 0.0
        %1696 = vmatprep.subr.mxu0 0.0
        %1697 = vmatpush1.msra.mxu0 0.0
        %1698 = vmatprep.subr.mxu0 0.0
        %1699 = vmatpush1.msra.mxu0 0.0
        %1700 = vmatprep.subr.mxu0 0.0
        %1701 = vmatpush1.msra.mxu0 0.0
        %1702 = vmatprep.subr.mxu0 0.0
        %1703 = vmatpush1.msra.mxu0 0.0
        %1704 = vmatprep.subr.mxu0 0.0
        %1705 = vmatpush1.msra.mxu0 0.0
        %1706 = vmatprep.subr.mxu0 0.0
        %1707 = vmatpush1.msra.mxu0 0.0
        %1708 = vmatprep.subr.mxu0 0.0
        %1709 = vmatpush1.msra.mxu0 0.0
        %1710 = vmatprep.subr.mxu0 0.0
        %1711 = vmatpush1.msra.mxu0 0.0
        %1712 = vmatprep.subr.mxu0 0.0
        %1713 = vmatpush1.msra.mxu0 0.0
        %1714 = vmatprep.subr.mxu0 0.0
        %1715 = vmatpush1.msra.mxu0 0.0
        %1716 = vmatprep.subr.mxu0 0.0
        %1717 = vmatpush1.msra.mxu0 0.0
        %1718 = vmatprep.subr.mxu0 0.0
        %1719 = vmatpush1.msra.mxu0 0.0
        %1720 = vmatprep.subr.mxu0 0.0
        %1721 = vmatpush1.msra.mxu0 0.0
        %1722 = vmatprep.subr.mxu0 0.0
        %1723 = vmatpush1.msra.mxu0 0.0
        %1724 = vmatprep.subr.mxu0 0.0
        %1725 = vmatpush1.msra.mxu0 0.0
        %1726 = vmatprep.subr.mxu0 0.0
        %1727 = vmatpush1.msra.mxu0 0.0
        %1728 = vmatprep.subr.mxu0 0.0
        %1729 = vmatpush1.msra.mxu0 0.0
        %1730 = vmatprep.subr.mxu0 0.0
        %1731 = vmatpush1.msra.mxu0 0.0
        %1732 = vmatprep.mubr.f32.mxu0 0.0
        %1733 = vmatmul.mubr.f32.gmra.mrb[0].mxu0 %v1236
        %v1734 = vpop.f32.mrb[0].mxu0
        %v1735 = vadd.f32 %v1227, %v1734
        %v1736 = vpop.f32.mrb[0].mxu0
        %v1737 = vadd.f32 %v1227, %v1736
        %1738 = vmatprep.mubr.f32.mxu0 0.0
        %1739 = vmatmul.mubr.f32.gmra.mrb[0].mxu0 %v1239
        %v1740 = vpop.f32.mrb[0].mxu0
        %v1741 = vadd.f32 %v1232, %v1740
        %v1742 = vpop.f32.mrb[0].mxu0
        %v1743 = vadd.f32 %v1232, %v1742
        %1744 = vdwg.mxu0
        %1745 = vmatprep.subr.mxu0 %v1191
        %1746 = vmatpush1.msra.mxu0 %v1190
        %1747 = vmatprep.subr.mxu0 %v1205
        %1748 = vmatpush1.msra.mxu0 %v1204
        %1749 = vmatprep.subr.mxu0 %v1281
        %1750 = vmatpush1.msra.mxu0 %v1278
        %1751 = vmatprep.subr.mxu0 0.0
        %1752 = vmatpush1.msra.mxu0 0.0
        %1753 = vmatprep.subr.mxu0 0.0
        %1754 = vmatpush1.msra.mxu0 0.0
        %1755 = vmatprep.subr.mxu0 0.0
        %1756 = vmatpush1.msra.mxu0 0.0
        %1757 = vmatprep.subr.mxu0 0.0
        %1758 = vmatpush1.msra.mxu0 0.0
        %1759 = vmatprep.subr.mxu0 0.0
        %1760 = vmatpush1.msra.mxu0 0.0
        %1761 = vmatprep.subr.mxu0 0.0
        %1762 = vmatpush1.msra.mxu0 0.0
        %1763 = vmatprep.subr.mxu0 0.0
        %1764 = vmatpush1.msra.mxu0 0.0
        %1765 = vmatprep.subr.mxu0 0.0
        %1766 = vmatpush1.msra.mxu0 0.0
        %1767 = vmatprep.subr.mxu0 0.0
        %1768 = vmatpush1.msra.mxu0 0.0
        %1769 = vmatprep.subr.mxu0 0.0
        %1770 = vmatpush1.msra.mxu0 0.0
        %1771 = vmatprep.subr.mxu0 0.0
        %1772 = vmatpush1.msra.mxu0 0.0
        %1773 = vmatprep.subr.mxu0 0.0
        %1774 = vmatpush1.msra.mxu0 0.0
        %1775 = vmatprep.subr.mxu0 0.0
        %1776 = vmatpush1.msra.mxu0 0.0
        %1777 = vmatprep.subr.mxu0 0.0
        %1778 = vmatpush1.msra.mxu0 0.0
        %1779 = vmatprep.subr.mxu0 0.0
        %1780 = vmatpush1.msra.mxu0 0.0
        %1781 = vmatprep.subr.mxu0 0.0
        %1782 = vmatpush1.msra.mxu0 0.0
        %1783 = vmatprep.subr.mxu0 0.0
        %1784 = vmatpush1.msra.mxu0 0.0
        %1785 = vmatprep.subr.mxu0 0.0
        %1786 = vmatpush1.msra.mxu0 0.0
        %1787 = vmatprep.subr.mxu0 0.0
        %1788 = vmatpush1.msra.mxu0 0.0
        %1789 = vmatprep.subr.mxu0 0.0
        %1790 = vmatpush1.msra.mxu0 0.0
        %1791 = vmatprep.subr.mxu0 0.0
        %1792 = vmatpush1.msra.mxu0 0.0
        %1793 = vmatprep.subr.mxu0 0.0
        %1794 = vmatpush1.msra.mxu0 0.0
        %1795 = vmatprep.subr.mxu0 0.0
        %1796 = vmatpush1.msra.mxu0 0.0
        %1797 = vmatprep.subr.mxu0 0.0
        %1798 = vmatpush1.msra.mxu0 0.0
        %1799 = vmatprep.subr.mxu0 0.0
        %1800 = vmatpush1.msra.mxu0 0.0
        %1801 = vmatprep.subr.mxu0 0.0
        %1802 = vmatpush1.msra.mxu0 0.0
        %1803 = vmatprep.subr.mxu0 0.0
        %1804 = vmatpush1.msra.mxu0 0.0
        %1805 = vmatprep.subr.mxu0 0.0
        %1806 = vmatpush1.msra.mxu0 0.0
        %1807 = vmatprep.subr.mxu0 0.0
        %1808 = vmatpush1.msra.mxu0 0.0
        %1809 = vmatprep.mubr.f32.mxu0 0.0
        %1810 = vmatmul.mubr.f32.gmra.mrb[0].mxu0 %v1236
        %v1811 = vpop.f32.mrb[0].mxu0
        %v1812 = vadd.f32 %v1227, %v1811
        %v1813 = vpop.f32.mrb[0].mxu0
        %v1814 = vadd.f32 %v1227, %v1813
        %1815 = vmatprep.mubr.f32.mxu0 0.0
        %1816 = vmatmul.mubr.f32.gmra.mrb[0].mxu0 %v1239
        %v1817 = vpop.f32.mrb[0].mxu0
        %v1818 = vadd.f32 %v1232, %v1817
        %v1819 = vpop.f32.mrb[0].mxu0
        %v1820 = vadd.f32 %v1232, %v1819
        %1821 = vdwg.mxu0
        %vm1822 = vcmp.ge.f32.partialorder %v1350, 0.0
        %vm1823 = vcmp.ge.f32.partialorder %v1352, 0.0
        %vm1824 = vcmp.ge.f32.partialorder %v1427, 0.0
        %vm1825 = vcmp.ge.f32.partialorder %v1429, 0.0
        %vm1826 = vcmp.ge.f32.partialorder %v1504, 0.0
        %vm1827 = vcmp.ge.f32.partialorder %v1506, 0.0
        %vm1828 = vcmp.ge.f32.partialorder %v1581, 0.0
        %vm1829 = vcmp.ge.f32.partialorder %v1583, 0.0
        %vm1830 = vcmp.ge.f32.partialorder %v1658, 0.0
        %vm1831 = vcmp.ge.f32.partialorder %v1660, 0.0
        %vm1832 = vcmp.ge.f32.partialorder %v1735, 0.0
        %vm1833 = vcmp.ge.f32.partialorder %v1737, 0.0
        %vm1834 = vcmp.ge.f32.partialorder %v1812, 0.0
        %vm1835 = vcmp.ge.f32.partialorder %v1814, 0.0
        %vm1836 = vcmp.ge.f32.partialorder %v1356, 0.0
        %vm1837 = vcmp.ge.f32.partialorder %v1358, 0.0
        %vm1838 = vcmp.ge.f32.partialorder %v1433, 0.0
        %vm1839 = vcmp.ge.f32.partialorder %v1435, 0.0
        %vm1840 = vcmp.ge.f32.partialorder %v1510, 0.0
        %vm1841 = vcmp.ge.f32.partialorder %v1512, 0.0
        %vm1842 = vcmp.ge.f32.partialorder %v1587, 0.0
        %vm1843 = vcmp.ge.f32.partialorder %v1589, 0.0
        %vm1844 = vcmp.ge.f32.partialorder %v1664, 0.0
        %vm1845 = vcmp.ge.f32.partialorder %v1666, 0.0
        %vm1846 = vcmp.ge.f32.partialorder %v1741, 0.0
        %vm1847 = vcmp.ge.f32.partialorder %v1743, 0.0
        %vm1848 = vcmp.ge.f32.partialorder %v1818, 0.0
        %vm1849 = vcmp.ge.f32.partialorder %v1820, 0.0
        %v1850 = vmul.f32 %v1350, 0.01
        %v1851 = vmul.f32 %v1352, 0.01
        %v1852 = vmul.f32 %v1427, 0.01
        %v1853 = vmul.f32 %v1429, 0.01
        %v1854 = vmul.f32 %v1504, 0.01
        %v1855 = vmul.f32 %v1506, 0.01
        %v1856 = vmul.f32 %v1581, 0.01
        %v1857 = vmul.f32 %v1583, 0.01
        %v1858 = vmul.f32 %v1658, 0.01
        %v1859 = vmul.f32 %v1660, 0.01
        %v1860 = vmul.f32 %v1735, 0.01
        %v1861 = vmul.f32 %v1737, 0.01
        %v1862 = vmul.f32 %v1812, 0.01
        %v1863 = vmul.f32 %v1814, 0.01
        %v1864 = vmul.f32 %v1356, 0.01
        %v1865 = vmul.f32 %v1358, 0.01
        %v1866 = vmul.f32 %v1433, 0.01
        %v1867 = vmul.f32 %v1435, 0.01
        %v1868 = vmul.f32 %v1510, 0.01
        %v1869 = vmul.f32 %v1512, 0.01
        %v1870 = vmul.f32 %v1587, 0.01
        %v1871 = vmul.f32 %v1589, 0.01
        %v1872 = vmul.f32 %v1664, 0.01
        %v1873 = vmul.f32 %v1666, 0.01
        %v1874 = vmul.f32 %v1741, 0.01
        %v1875 = vmul.f32 %v1743, 0.01
        %v1876 = vmul.f32 %v1818, 0.01
        %v1877 = vmul.f32 %v1820, 0.01
        %v1878 = vsel %vm1822, %v1350, %v1850
        %v1879 = vsel %vm1823, %v1352, %v1851
        %v1880 = vsel %vm1824, %v1427, %v1852
        %v1881 = vsel %vm1825, %v1429, %v1853
        %v1882 = vsel %vm1826, %v1504, %v1854
        %v1883 = vsel %vm1827, %v1506, %v1855
        %v1884 = vsel %vm1828, %v1581, %v1856
        %v1885 = vsel %vm1829, %v1583, %v1857
        %v1886 = vsel %vm1830, %v1658, %v1858
        %v1887 = vsel %vm1831, %v1660, %v1859
        %v1888 = vsel %vm1832, %v1735, %v1860
        %v1889 = vsel %vm1833, %v1737, %v1861
        %v1890 = vsel %vm1834, %v1812, %v1862
        %v1891 = vsel %vm1835, %v1814, %v1863
        %v1892 = vsel %vm1836, %v1356, %v1864
        %v1893 = vsel %vm1837, %v1358, %v1865
        %v1894 = vsel %vm1838, %v1433, %v1866
        %v1895 = vsel %vm1839, %v1435, %v1867
        %v1896 = vsel %vm1840, %v1510, %v1868
        %v1897 = vsel %vm1841, %v1512, %v1869
        %v1898 = vsel %vm1842, %v1587, %v1870
        %v1899 = vsel %vm1843, %v1589, %v1871
        %v1900 = vsel %vm1844, %v1664, %v1872
        %v1901 = vsel %vm1845, %v1666, %v1873
        %v1902 = vsel %vm1846, %v1741, %v1874
        %v1903 = vsel %vm1847, %v1743, %v1875
        %v1904 = vsel %vm1848, %v1818, %v1876
        %v1905 = vsel %vm1849, %v1820, %v1877
        %v1906 = vld [vmem:[#allocation2 + $0x40] sm:$0xf]
        %v1907 = vld [vmem:[#allocation2] sm:$0xf]
        %1909 = vset.pattern.permute.xlu0 36
        %1910 = vperm.xlu0 %1909, %v1907
        %v1911 = vpop.permute.xlu0 %1910
        %vm1913 = vcmask 121856
        %v1915 = vsel %vm1913, %v1906, 0
        %vm1917 = vcmask 1046528
        %v1919 = vsel %vm1917, %v1892, 0
        %v1922 = vsel %vm1917, %v1893, 0
        %v1925 = vsel %vm1917, %v1894, 0
        %v1928 = vsel %vm1917, %v1895, 0
        %v1931 = vsel %vm1917, %v1896, 0
        %v1934 = vsel %vm1917, %v1897, 0
        %v1937 = vsel %vm1917, %v1898, 0
        %v1940 = vsel %vm1917, %v1899, 0
        %v1943 = vsel %vm1917, %v1900, 0
        %v1946 = vsel %vm1917, %v1901, 0
        %v1949 = vsel %vm1917, %v1902, 0
        %v1952 = vsel %vm1917, %v1903, 0
        %v1955 = vsel %vm1917, %v1904, 0
        %v1958 = vsel %vm1917, %v1905, 0
        %1960 = vmatprep.subr.mxu0 %v1879
        %1961 = vmatpush1.msra.mxu0 %v1878
        %1962 = vmatprep.subr.mxu0 %v1922
        %1963 = vmatpush1.msra.mxu0 %v1919
        %1964 = vmatprep.subr.mxu0 0.0
        %1965 = vmatpush1.msra.mxu0 0.0
        %1966 = vmatprep.subr.mxu0 0.0
        %1967 = vmatpush1.msra.mxu0 0.0
        %1968 = vmatprep.subr.mxu0 0.0
        %1969 = vmatpush1.msra.mxu0 0.0
        %1970 = vmatprep.subr.mxu0 0.0
        %1971 = vmatpush1.msra.mxu0 0.0
        %1972 = vmatprep.subr.mxu0 0.0
        %1973 = vmatpush1.msra.mxu0 0.0
        %1974 = vmatprep.subr.mxu0 0.0
        %1975 = vmatpush1.msra.mxu0 0.0
        %1976 = vmatprep.subr.mxu0 0.0
        %1977 = vmatpush1.msra.mxu0 0.0
        %1978 = vmatprep.subr.mxu0 0.0
        %1979 = vmatpush1.msra.mxu0 0.0
        %1980 = vmatprep.subr.mxu0 0.0
        %1981 = vmatpush1.msra.mxu0 0.0
        %1982 = vmatprep.subr.mxu0 0.0
        %1983 = vmatpush1.msra.mxu0 0.0
        %1984 = vmatprep.subr.mxu0 0.0
        %1985 = vmatpush1.msra.mxu0 0.0
        %1986 = vmatprep.subr.mxu0 0.0
        %1987 = vmatpush1.msra.mxu0 0.0
        %1988 = vmatprep.subr.mxu0 0.0
        %1989 = vmatpush1.msra.mxu0 0.0
        %1990 = vmatprep.subr.mxu0 0.0
        %1991 = vmatpush1.msra.mxu0 0.0
        %1992 = vmatprep.subr.mxu0 0.0
        %1993 = vmatpush1.msra.mxu0 0.0
        %1994 = vmatprep.subr.mxu0 0.0
        %1995 = vmatpush1.msra.mxu0 0.0
        %1996 = vmatprep.subr.mxu0 0.0
        %1997 = vmatpush1.msra.mxu0 0.0
        %1998 = vmatprep.subr.mxu0 0.0
        %1999 = vmatpush1.msra.mxu0 0.0
        %2000 = vmatprep.subr.mxu0 0.0
        %2001 = vmatpush1.msra.mxu0 0.0
        %2002 = vmatprep.subr.mxu0 0.0
        %2003 = vmatpush1.msra.mxu0 0.0
        %2004 = vmatprep.subr.mxu0 0.0
        %2005 = vmatpush1.msra.mxu0 0.0
        %2006 = vmatprep.subr.mxu0 0.0
        %2007 = vmatpush1.msra.mxu0 0.0
        %2008 = vmatprep.subr.mxu0 0.0
        %2009 = vmatpush1.msra.mxu0 0.0
        %2010 = vmatprep.subr.mxu0 0.0
        %2011 = vmatpush1.msra.mxu0 0.0
        %2012 = vmatprep.subr.mxu0 0.0
        %2013 = vmatpush1.msra.mxu0 0.0
        %2014 = vmatprep.subr.mxu0 0.0
        %2015 = vmatpush1.msra.mxu0 0.0
        %2016 = vmatprep.subr.mxu0 0.0
        %2017 = vmatpush1.msra.mxu0 0.0
        %2018 = vmatprep.subr.mxu0 0.0
        %2019 = vmatpush1.msra.mxu0 0.0
        %2020 = vmatprep.subr.mxu0 0.0
        %2021 = vmatpush1.msra.mxu0 0.0
        %2022 = vmatprep.subr.mxu0 0.0
        %2023 = vmatpush1.msra.mxu0 0.0
        %2024 = vmatprep.mubr.f32.mxu0 0.0
        %2025 = vmatmul.mubr.f32.gmra.mrb[0].mxu0 %v1915
        %v2026 = vpop.f32.mrb[0].mxu0
        %v2027 = vadd.f32 %v1911, %v2026
        %v2028 = vpop.f32.mrb[0].mxu0
        %v2029 = vadd.f32 %v1911, %v2028
        %2030 = vdwg.mxu0
        %2031 = vmatprep.subr.mxu0 %v1881
        %2032 = vmatpush1.msra.mxu0 %v1880
        %2033 = vmatprep.subr.mxu0 %v1928
        %2034 = vmatpush1.msra.mxu0 %v1925
        %2035 = vmatprep.subr.mxu0 0.0
        %2036 = vmatpush1.msra.mxu0 0.0
        %2037 = vmatprep.subr.mxu0 0.0
        %2038 = vmatpush1.msra.mxu0 0.0
        %2039 = vmatprep.subr.mxu0 0.0
        %2040 = vmatpush1.msra.mxu0 0.0
        %2041 = vmatprep.subr.mxu0 0.0
        %2042 = vmatpush1.msra.mxu0 0.0
        %2043 = vmatprep.subr.mxu0 0.0
        %2044 = vmatpush1.msra.mxu0 0.0
        %2045 = vmatprep.subr.mxu0 0.0
        %2046 = vmatpush1.msra.mxu0 0.0
        %2047 = vmatprep.subr.mxu0 0.0
        %2048 = vmatpush1.msra.mxu0 0.0
        %2049 = vmatprep.subr.mxu0 0.0
        %2050 = vmatpush1.msra.mxu0 0.0
        %2051 = vmatprep.subr.mxu0 0.0
        %2052 = vmatpush1.msra.mxu0 0.0
        %2053 = vmatprep.subr.mxu0 0.0
        %2054 = vmatpush1.msra.mxu0 0.0
        %2055 = vmatprep.subr.mxu0 0.0
        %2056 = vmatpush1.msra.mxu0 0.0
        %2057 = vmatprep.subr.mxu0 0.0
        %2058 = vmatpush1.msra.mxu0 0.0
        %2059 = vmatprep.subr.mxu0 0.0
        %2060 = vmatpush1.msra.mxu0 0.0
        %2061 = vmatprep.subr.mxu0 0.0
        %2062 = vmatpush1.msra.mxu0 0.0
        %2063 = vmatprep.subr.mxu0 0.0
        %2064 = vmatpush1.msra.mxu0 0.0
        %2065 = vmatprep.subr.mxu0 0.0
        %2066 = vmatpush1.msra.mxu0 0.0
        %2067 = vmatprep.subr.mxu0 0.0
        %2068 = vmatpush1.msra.mxu0 0.0
        %2069 = vmatprep.subr.mxu0 0.0
        %2070 = vmatpush1.msra.mxu0 0.0
        %2071 = vmatprep.subr.mxu0 0.0
        %2072 = vmatpush1.msra.mxu0 0.0
        %2073 = vmatprep.subr.mxu0 0.0
        %2074 = vmatpush1.msra.mxu0 0.0
        %2075 = vmatprep.subr.mxu0 0.0
        %2076 = vmatpush1.msra.mxu0 0.0
        %2077 = vmatprep.subr.mxu0 0.0
        %2078 = vmatpush1.msra.mxu0 0.0
        %2079 = vmatprep.subr.mxu0 0.0
        %2080 = vmatpush1.msra.mxu0 0.0
        %2081 = vmatprep.subr.mxu0 0.0
        %2082 = vmatpush1.msra.mxu0 0.0
        %2083 = vmatprep.subr.mxu0 0.0
        %2084 = vmatpush1.msra.mxu0 0.0
        %2085 = vmatprep.subr.mxu0 0.0
        %2086 = vmatpush1.msra.mxu0 0.0
        %2087 = vmatprep.subr.mxu0 0.0
        %2088 = vmatpush1.msra.mxu0 0.0
        %2089 = vmatprep.subr.mxu0 0.0
        %2090 = vmatpush1.msra.mxu0 0.0
        %2091 = vmatprep.subr.mxu0 0.0
        %2092 = vmatpush1.msra.mxu0 0.0
        %2093 = vmatprep.subr.mxu0 0.0
        %2094 = vmatpush1.msra.mxu0 0.0
        %2095 = vmatprep.mubr.f32.mxu0 0.0
        %2096 = vmatmul.mubr.f32.gmra.mrb[0].mxu0 %v1915
        %v2097 = vpop.f32.mrb[0].mxu0
        %v2098 = vadd.f32 %v1911, %v2097
        %v2099 = vpop.f32.mrb[0].mxu0
        %v2100 = vadd.f32 %v1911, %v2099
        %2101 = vdwg.mxu0
        %2102 = vmatprep.subr.mxu0 %v1883
        %2103 = vmatpush1.msra.mxu0 %v1882
        %2104 = vmatprep.subr.mxu0 %v1934
        %2105 = vmatpush1.msra.mxu0 %v1931
        %2106 = vmatprep.subr.mxu0 0.0
        %2107 = vmatpush1.msra.mxu0 0.0
        %2108 = vmatprep.subr.mxu0 0.0
        %2109 = vmatpush1.msra.mxu0 0.0
        %2110 = vmatprep.subr.mxu0 0.0
        %2111 = vmatpush1.msra.mxu0 0.0
        %2112 = vmatprep.subr.mxu0 0.0
        %2113 = vmatpush1.msra.mxu0 0.0
        %2114 = vmatprep.subr.mxu0 0.0
        %2115 = vmatpush1.msra.mxu0 0.0
        %2116 = vmatprep.subr.mxu0 0.0
        %2117 = vmatpush1.msra.mxu0 0.0
        %2118 = vmatprep.subr.mxu0 0.0
        %2119 = vmatpush1.msra.mxu0 0.0
        %2120 = vmatprep.subr.mxu0 0.0
        %2121 = vmatpush1.msra.mxu0 0.0
        %2122 = vmatprep.subr.mxu0 0.0
        %2123 = vmatpush1.msra.mxu0 0.0
        %2124 = vmatprep.subr.mxu0 0.0
        %2125 = vmatpush1.msra.mxu0 0.0
        %2126 = vmatprep.subr.mxu0 0.0
        %2127 = vmatpush1.msra.mxu0 0.0
        %2128 = vmatprep.subr.mxu0 0.0
        %2129 = vmatpush1.msra.mxu0 0.0
        %2130 = vmatprep.subr.mxu0 0.0
        %2131 = vmatpush1.msra.mxu0 0.0
        %2132 = vmatprep.subr.mxu0 0.0
        %2133 = vmatpush1.msra.mxu0 0.0
        %2134 = vmatprep.subr.mxu0 0.0
        %2135 = vmatpush1.msra.mxu0 0.0
        %2136 = vmatprep.subr.mxu0 0.0
        %2137 = vmatpush1.msra.mxu0 0.0
        %2138 = vmatprep.subr.mxu0 0.0
        %2139 = vmatpush1.msra.mxu0 0.0
        %2140 = vmatprep.subr.mxu0 0.0
        %2141 = vmatpush1.msra.mxu0 0.0
        %2142 = vmatprep.subr.mxu0 0.0
        %2143 = vmatpush1.msra.mxu0 0.0
        %2144 = vmatprep.subr.mxu0 0.0
        %2145 = vmatpush1.msra.mxu0 0.0
        %2146 = vmatprep.subr.mxu0 0.0
        %2147 = vmatpush1.msra.mxu0 0.0
        %2148 = vmatprep.subr.mxu0 0.0
        %2149 = vmatpush1.msra.mxu0 0.0
        %2150 = vmatprep.subr.mxu0 0.0
        %2151 = vmatpush1.msra.mxu0 0.0
        %2152 = vmatprep.subr.mxu0 0.0
        %2153 = vmatpush1.msra.mxu0 0.0
        %2154 = vmatprep.subr.mxu0 0.0
        %2155 = vmatpush1.msra.mxu0 0.0
        %2156 = vmatprep.subr.mxu0 0.0
        %2157 = vmatpush1.msra.mxu0 0.0
        %2158 = vmatprep.subr.mxu0 0.0
        %2159 = vmatpush1.msra.mxu0 0.0
        %2160 = vmatprep.subr.mxu0 0.0
        %2161 = vmatpush1.msra.mxu0 0.0
        %2162 = vmatprep.subr.mxu0 0.0
        %2163 = vmatpush1.msra.mxu0 0.0
        %2164 = vmatprep.subr.mxu0 0.0
        %2165 = vmatpush1.msra.mxu0 0.0
        %2166 = vmatprep.mubr.f32.mxu0 0.0
        %2167 = vmatmul.mubr.f32.gmra.mrb[0].mxu0 %v1915
        %v2168 = vpop.f32.mrb[0].mxu0
        %v2169 = vadd.f32 %v1911, %v2168
        %v2170 = vpop.f32.mrb[0].mxu0
        %v2171 = vadd.f32 %v1911, %v2170
        %2172 = vdwg.mxu0
        %2173 = vmatprep.subr.mxu0 %v1885
        %2174 = vmatpush1.msra.mxu0 %v1884
        %2175 = vmatprep.subr.mxu0 %v1940
        %2176 = vmatpush1.msra.mxu0 %v1937
        %2177 = vmatprep.subr.mxu0 0.0
        %2178 = vmatpush1.msra.mxu0 0.0
        %2179 = vmatprep.subr.mxu0 0.0
        %2180 = vmatpush1.msra.mxu0 0.0
        %2181 = vmatprep.subr.mxu0 0.0
        %2182 = vmatpush1.msra.mxu0 0.0
        %2183 = vmatprep.subr.mxu0 0.0
        %2184 = vmatpush1.msra.mxu0 0.0
        %2185 = vmatprep.subr.mxu0 0.0
        %2186 = vmatpush1.msra.mxu0 0.0
        %2187 = vmatprep.subr.mxu0 0.0
        %2188 = vmatpush1.msra.mxu0 0.0
        %2189 = vmatprep.subr.mxu0 0.0
        %2190 = vmatpush1.msra.mxu0 0.0
        %2191 = vmatprep.subr.mxu0 0.0
        %2192 = vmatpush1.msra.mxu0 0.0
        %2193 = vmatprep.subr.mxu0 0.0
        %2194 = vmatpush1.msra.mxu0 0.0
        %2195 = vmatprep.subr.mxu0 0.0
        %2196 = vmatpush1.msra.mxu0 0.0
        %2197 = vmatprep.subr.mxu0 0.0
        %2198 = vmatpush1.msra.mxu0 0.0
        %2199 = vmatprep.subr.mxu0 0.0
        %2200 = vmatpush1.msra.mxu0 0.0
        %2201 = vmatprep.subr.mxu0 0.0
        %2202 = vmatpush1.msra.mxu0 0.0
        %2203 = vmatprep.subr.mxu0 0.0
        %2204 = vmatpush1.msra.mxu0 0.0
        %2205 = vmatprep.subr.mxu0 0.0
        %2206 = vmatpush1.msra.mxu0 0.0
        %2207 = vmatprep.subr.mxu0 0.0
        %2208 = vmatpush1.msra.mxu0 0.0
        %2209 = vmatprep.subr.mxu0 0.0
        %2210 = vmatpush1.msra.mxu0 0.0
        %2211 = vmatprep.subr.mxu0 0.0
        %2212 = vmatpush1.msra.mxu0 0.0
        %2213 = vmatprep.subr.mxu0 0.0
        %2214 = vmatpush1.msra.mxu0 0.0
        %2215 = vmatprep.subr.mxu0 0.0
        %2216 = vmatpush1.msra.mxu0 0.0
        %2217 = vmatprep.subr.mxu0 0.0
        %2218 = vmatpush1.msra.mxu0 0.0
        %2219 = vmatprep.subr.mxu0 0.0
        %2220 = vmatpush1.msra.mxu0 0.0
        %2221 = vmatprep.subr.mxu0 0.0
        %2222 = vmatpush1.msra.mxu0 0.0
        %2223 = vmatprep.subr.mxu0 0.0
        %2224 = vmatpush1.msra.mxu0 0.0
        %2225 = vmatprep.subr.mxu0 0.0
        %2226 = vmatpush1.msra.mxu0 0.0
        %2227 = vmatprep.subr.mxu0 0.0
        %2228 = vmatpush1.msra.mxu0 0.0
        %2229 = vmatprep.subr.mxu0 0.0
        %2230 = vmatpush1.msra.mxu0 0.0
        %2231 = vmatprep.subr.mxu0 0.0
        %2232 = vmatpush1.msra.mxu0 0.0
        %2233 = vmatprep.subr.mxu0 0.0
        %2234 = vmatpush1.msra.mxu0 0.0
        %2235 = vmatprep.subr.mxu0 0.0
        %2236 = vmatpush1.msra.mxu0 0.0
        %2237 = vmatprep.mubr.f32.mxu0 0.0
        %2238 = vmatmul.mubr.f32.gmra.mrb[0].mxu0 %v1915
        %v2239 = vpop.f32.mrb[0].mxu0
        %v2240 = vadd.f32 %v1911, %v2239
        %v2241 = vpop.f32.mrb[0].mxu0
        %v2242 = vadd.f32 %v1911, %v2241
        %2243 = vdwg.mxu0
        %2244 = vmatprep.subr.mxu0 %v1887
        %2245 = vmatpush1.msra.mxu0 %v1886
        %2246 = vmatprep.subr.mxu0 %v1946
        %2247 = vmatpush1.msra.mxu0 %v1943
        %2248 = vmatprep.subr.mxu0 0.0
        %2249 = vmatpush1.msra.mxu0 0.0
        %2250 = vmatprep.subr.mxu0 0.0
        %2251 = vmatpush1.msra.mxu0 0.0
        %2252 = vmatprep.subr.mxu0 0.0
        %2253 = vmatpush1.msra.mxu0 0.0
        %2254 = vmatprep.subr.mxu0 0.0
        %2255 = vmatpush1.msra.mxu0 0.0
        %2256 = vmatprep.subr.mxu0 0.0
        %2257 = vmatpush1.msra.mxu0 0.0
        %2258 = vmatprep.subr.mxu0 0.0
        %2259 = vmatpush1.msra.mxu0 0.0
        %2260 = vmatprep.subr.mxu0 0.0
        %2261 = vmatpush1.msra.mxu0 0.0
        %2262 = vmatprep.subr.mxu0 0.0
        %2263 = vmatpush1.msra.mxu0 0.0
        %2264 = vmatprep.subr.mxu0 0.0
        %2265 = vmatpush1.msra.mxu0 0.0
        %2266 = vmatprep.subr.mxu0 0.0
        %2267 = vmatpush1.msra.mxu0 0.0
        %2268 = vmatprep.subr.mxu0 0.0
        %2269 = vmatpush1.msra.mxu0 0.0
        %2270 = vmatprep.subr.mxu0 0.0
        %2271 = vmatpush1.msra.mxu0 0.0
        %2272 = vmatprep.subr.mxu0 0.0
        %2273 = vmatpush1.msra.mxu0 0.0
        %2274 = vmatprep.subr.mxu0 0.0
        %2275 = vmatpush1.msra.mxu0 0.0
        %2276 = vmatprep.subr.mxu0 0.0
        %2277 = vmatpush1.msra.mxu0 0.0
        %2278 = vmatprep.subr.mxu0 0.0
        %2279 = vmatpush1.msra.mxu0 0.0
        %2280 = vmatprep.subr.mxu0 0.0
        %2281 = vmatpush1.msra.mxu0 0.0
        %2282 = vmatprep.subr.mxu0 0.0
        %2283 = vmatpush1.msra.mxu0 0.0
        %2284 = vmatprep.subr.mxu0 0.0
        %2285 = vmatpush1.msra.mxu0 0.0
        %2286 = vmatprep.subr.mxu0 0.0
        %2287 = vmatpush1.msra.mxu0 0.0
        %2288 = vmatprep.subr.mxu0 0.0
        %2289 = vmatpush1.msra.mxu0 0.0
        %2290 = vmatprep.subr.mxu0 0.0
        %2291 = vmatpush1.msra.mxu0 0.0
        %2292 = vmatprep.subr.mxu0 0.0
        %2293 = vmatpush1.msra.mxu0 0.0
        %2294 = vmatprep.subr.mxu0 0.0
        %2295 = vmatpush1.msra.mxu0 0.0
        %2296 = vmatprep.subr.mxu0 0.0
        %2297 = vmatpush1.msra.mxu0 0.0
        %2298 = vmatprep.subr.mxu0 0.0
        %2299 = vmatpush1.msra.mxu0 0.0
        %2300 = vmatprep.subr.mxu0 0.0
        %2301 = vmatpush1.msra.mxu0 0.0
        %2302 = vmatprep.subr.mxu0 0.0
        %2303 = vmatpush1.msra.mxu0 0.0
        %2304 = vmatprep.subr.mxu0 0.0
        %2305 = vmatpush1.msra.mxu0 0.0
        %2306 = vmatprep.subr.mxu0 0.0
        %2307 = vmatpush1.msra.mxu0 0.0
        %2308 = vmatprep.mubr.f32.mxu0 0.0
        %2309 = vmatmul.mubr.f32.gmra.mrb[0].mxu0 %v1915
        %v2310 = vpop.f32.mrb[0].mxu0
        %v2311 = vadd.f32 %v1911, %v2310
        %v2312 = vpop.f32.mrb[0].mxu0
        %v2313 = vadd.f32 %v1911, %v2312
        %2314 = vdwg.mxu0
        %2315 = vmatprep.subr.mxu0 %v1889
        %2316 = vmatpush1.msra.mxu0 %v1888
        %2317 = vmatprep.subr.mxu0 %v1952
        %2318 = vmatpush1.msra.mxu0 %v1949
        %2319 = vmatprep.subr.mxu0 0.0
        %2320 = vmatpush1.msra.mxu0 0.0
        %2321 = vmatprep.subr.mxu0 0.0
        %2322 = vmatpush1.msra.mxu0 0.0
        %2323 = vmatprep.subr.mxu0 0.0
        %2324 = vmatpush1.msra.mxu0 0.0
        %2325 = vmatprep.subr.mxu0 0.0
        %2326 = vmatpush1.msra.mxu0 0.0
        %2327 = vmatprep.subr.mxu0 0.0
        %2328 = vmatpush1.msra.mxu0 0.0
        %2329 = vmatprep.subr.mxu0 0.0
        %2330 = vmatpush1.msra.mxu0 0.0
        %2331 = vmatprep.subr.mxu0 0.0
        %2332 = vmatpush1.msra.mxu0 0.0
        %2333 = vmatprep.subr.mxu0 0.0
        %2334 = vmatpush1.msra.mxu0 0.0
        %2335 = vmatprep.subr.mxu0 0.0
        %2336 = vmatpush1.msra.mxu0 0.0
        %2337 = vmatprep.subr.mxu0 0.0
        %2338 = vmatpush1.msra.mxu0 0.0
        %2339 = vmatprep.subr.mxu0 0.0
        %2340 = vmatpush1.msra.mxu0 0.0
        %2341 = vmatprep.subr.mxu0 0.0
        %2342 = vmatpush1.msra.mxu0 0.0
        %2343 = vmatprep.subr.mxu0 0.0
        %2344 = vmatpush1.msra.mxu0 0.0
        %2345 = vmatprep.subr.mxu0 0.0
        %2346 = vmatpush1.msra.mxu0 0.0
        %2347 = vmatprep.subr.mxu0 0.0
        %2348 = vmatpush1.msra.mxu0 0.0
        %2349 = vmatprep.subr.mxu0 0.0
        %2350 = vmatpush1.msra.mxu0 0.0
        %2351 = vmatprep.subr.mxu0 0.0
        %2352 = vmatpush1.msra.mxu0 0.0
        %2353 = vmatprep.subr.mxu0 0.0
        %2354 = vmatpush1.msra.mxu0 0.0
        %2355 = vmatprep.subr.mxu0 0.0
        %2356 = vmatpush1.msra.mxu0 0.0
        %2357 = vmatprep.subr.mxu0 0.0
        %2358 = vmatpush1.msra.mxu0 0.0
        %2359 = vmatprep.subr.mxu0 0.0
        %2360 = vmatpush1.msra.mxu0 0.0
        %2361 = vmatprep.subr.mxu0 0.0
        %2362 = vmatpush1.msra.mxu0 0.0
        %2363 = vmatprep.subr.mxu0 0.0
        %2364 = vmatpush1.msra.mxu0 0.0
        %2365 = vmatprep.subr.mxu0 0.0
        %2366 = vmatpush1.msra.mxu0 0.0
        %2367 = vmatprep.subr.mxu0 0.0
        %2368 = vmatpush1.msra.mxu0 0.0
        %2369 = vmatprep.subr.mxu0 0.0
        %2370 = vmatpush1.msra.mxu0 0.0
        %2371 = vmatprep.subr.mxu0 0.0
        %2372 = vmatpush1.msra.mxu0 0.0
        %2373 = vmatprep.subr.mxu0 0.0
        %2374 = vmatpush1.msra.mxu0 0.0
        %2375 = vmatprep.subr.mxu0 0.0
        %2376 = vmatpush1.msra.mxu0 0.0
        %2377 = vmatprep.subr.mxu0 0.0
        %2378 = vmatpush1.msra.mxu0 0.0
        %2379 = vmatprep.mubr.f32.mxu0 0.0
        %2380 = vmatmul.mubr.f32.gmra.mrb[0].mxu0 %v1915
        %v2381 = vpop.f32.mrb[0].mxu0
        %v2382 = vadd.f32 %v1911, %v2381
        %v2383 = vpop.f32.mrb[0].mxu0
        %v2384 = vadd.f32 %v1911, %v2383
        %2385 = vdwg.mxu0
        %2386 = vmatprep.subr.mxu0 %v1891
        %2387 = vmatpush1.msra.mxu0 %v1890
        %2388 = vmatprep.subr.mxu0 %v1958
        %2389 = vmatpush1.msra.mxu0 %v1955
        %2390 = vmatprep.subr.mxu0 0.0
        %2391 = vmatpush1.msra.mxu0 0.0
        %2392 = vmatprep.subr.mxu0 0.0
        %2393 = vmatpush1.msra.mxu0 0.0
        %2394 = vmatprep.subr.mxu0 0.0
        %2395 = vmatpush1.msra.mxu0 0.0
        %2396 = vmatprep.subr.mxu0 0.0
        %2397 = vmatpush1.msra.mxu0 0.0
        %2398 = vmatprep.subr.mxu0 0.0
        %2399 = vmatpush1.msra.mxu0 0.0
        %2400 = vmatprep.subr.mxu0 0.0
        %2401 = vmatpush1.msra.mxu0 0.0
        %2402 = vmatprep.subr.mxu0 0.0
        %2403 = vmatpush1.msra.mxu0 0.0
        %2404 = vmatprep.subr.mxu0 0.0
        %2405 = vmatpush1.msra.mxu0 0.0
        %2406 = vmatprep.subr.mxu0 0.0
        %2407 = vmatpush1.msra.mxu0 0.0
        %2408 = vmatprep.subr.mxu0 0.0
        %2409 = vmatpush1.msra.mxu0 0.0
        %2410 = vmatprep.subr.mxu0 0.0
        %2411 = vmatpush1.msra.mxu0 0.0
        %2412 = vmatprep.subr.mxu0 0.0
        %2413 = vmatpush1.msra.mxu0 0.0
        %2414 = vmatprep.subr.mxu0 0.0
        %2415 = vmatpush1.msra.mxu0 0.0
        %2416 = vmatprep.subr.mxu0 0.0
        %2417 = vmatpush1.msra.mxu0 0.0
        %2418 = vmatprep.subr.mxu0 0.0
        %2419 = vmatpush1.msra.mxu0 0.0
        %2420 = vmatprep.subr.mxu0 0.0
        %2421 = vmatpush1.msra.mxu0 0.0
        %2422 = vmatprep.subr.mxu0 0.0
        %2423 = vmatpush1.msra.mxu0 0.0
        %2424 = vmatprep.subr.mxu0 0.0
        %2425 = vmatpush1.msra.mxu0 0.0
        %2426 = vmatprep.subr.mxu0 0.0
        %2427 = vmatpush1.msra.mxu0 0.0
        %2428 = vmatprep.subr.mxu0 0.0
        %2429 = vmatpush1.msra.mxu0 0.0
        %2430 = vmatprep.subr.mxu0 0.0
        %2431 = vmatpush1.msra.mxu0 0.0
        %2432 = vmatprep.subr.mxu0 0.0
        %2433 = vmatpush1.msra.mxu0 0.0
        %2434 = vmatprep.subr.mxu0 0.0
        %2435 = vmatpush1.msra.mxu0 0.0
        %2436 = vmatprep.subr.mxu0 0.0
        %2437 = vmatpush1.msra.mxu0 0.0
        %2438 = vmatprep.subr.mxu0 0.0
        %2439 = vmatpush1.msra.mxu0 0.0
        %2440 = vmatprep.subr.mxu0 0.0
        %2441 = vmatpush1.msra.mxu0 0.0
        %2442 = vmatprep.subr.mxu0 0.0
        %2443 = vmatpush1.msra.mxu0 0.0
        %2444 = vmatprep.subr.mxu0 0.0
        %2445 = vmatpush1.msra.mxu0 0.0
        %2446 = vmatprep.subr.mxu0 0.0
        %2447 = vmatpush1.msra.mxu0 0.0
        %2448 = vmatprep.subr.mxu0 0.0
        %2449 = vmatpush1.msra.mxu0 0.0
        %2450 = vmatprep.mubr.f32.mxu0 0.0
        %2451 = vmatmul.mubr.f32.gmra.mrb[0].mxu0 %v1915
        %v2452 = vpop.f32.mrb[0].mxu0
        %v2453 = vadd.f32 %v1911, %v2452
        %v2454 = vpop.f32.mrb[0].mxu0
        %v2455 = vadd.f32 %v1911, %v2454
        %2456 = vdwg.mxu0
        %vm2457 = vcmp.ge.f32.partialorder %v2027, 0.0
        %vm2458 = vcmp.ge.f32.partialorder %v2029, 0.0
        %vm2459 = vcmp.ge.f32.partialorder %v2098, 0.0
        %vm2460 = vcmp.ge.f32.partialorder %v2100, 0.0
        %vm2461 = vcmp.ge.f32.partialorder %v2169, 0.0
        %vm2462 = vcmp.ge.f32.partialorder %v2171, 0.0
        %vm2463 = vcmp.ge.f32.partialorder %v2240, 0.0
        %vm2464 = vcmp.ge.f32.partialorder %v2242, 0.0
        %vm2465 = vcmp.ge.f32.partialorder %v2311, 0.0
        %vm2466 = vcmp.ge.f32.partialorder %v2313, 0.0
        %vm2467 = vcmp.ge.f32.partialorder %v2382, 0.0
        %vm2468 = vcmp.ge.f32.partialorder %v2384, 0.0
        %vm2469 = vcmp.ge.f32.partialorder %v2453, 0.0
        %vm2470 = vcmp.ge.f32.partialorder %v2455, 0.0
        %v2471 = vmul.f32 %v2027, 0.01
        %v2472 = vmul.f32 %v2029, 0.01
        %v2473 = vmul.f32 %v2098, 0.01
        %v2474 = vmul.f32 %v2100, 0.01
        %v2475 = vmul.f32 %v2169, 0.01
        %v2476 = vmul.f32 %v2171, 0.01
        %v2477 = vmul.f32 %v2240, 0.01
        %v2478 = vmul.f32 %v2242, 0.01
        %v2479 = vmul.f32 %v2311, 0.01
        %v2480 = vmul.f32 %v2313, 0.01
        %v2481 = vmul.f32 %v2382, 0.01
        %v2482 = vmul.f32 %v2384, 0.01
        %v2483 = vmul.f32 %v2453, 0.01
        %v2484 = vmul.f32 %v2455, 0.01
        %v2485 = vsel %vm2457, %v2027, %v2471
        %v2486 = vsel %vm2458, %v2029, %v2472
        %v2487 = vsel %vm2459, %v2098, %v2473
        %v2488 = vsel %vm2460, %v2100, %v2474
        %v2489 = vsel %vm2461, %v2169, %v2475
        %v2490 = vsel %vm2462, %v2171, %v2476
        %v2491 = vsel %vm2463, %v2240, %v2477
        %v2492 = vsel %vm2464, %v2242, %v2478
        %v2493 = vsel %vm2465, %v2311, %v2479
        %v2494 = vsel %vm2466, %v2313, %v2480
        %v2495 = vsel %vm2467, %v2382, %v2481
        %v2496 = vsel %vm2468, %v2384, %v2482
        %v2497 = vsel %vm2469, %v2453, %v2483
        %v2498 = vsel %vm2470, %v2455, %v2484
        %v2499 = vld [vmem:[#allocation2 + $0x48] sm:$0xf]
        %2501 = vset.pattern.permute.xlu0 0
        %2502 = vperm.xlu0 %2501, %v2499
        %v2503 = vpop.permute.xlu0 %2502
        %v2505 = vmul.f32 %v2503, %v2485
        %v2506 = vmul.f32 %v2503, %v2486
        %v2507 = vmul.f32 %v2503, %v2487
        %v2508 = vmul.f32 %v2503, %v2488
        %v2509 = vmul.f32 %v2503, %v2489
        %v2510 = vmul.f32 %v2503, %v2490
        %v2511 = vmul.f32 %v2503, %v2491
        %v2512 = vmul.f32 %v2503, %v2492
        %v2513 = vmul.f32 %v2503, %v2493
        %v2514 = vmul.f32 %v2503, %v2494
        %v2515 = vmul.f32 %v2503, %v2495
        %v2516 = vmul.f32 %v2503, %v2496
        %v2517 = vmul.f32 %v2503, %v2497
        %v2518 = vmul.f32 %v2503, %v2498
        %vm2519 = vcmask 1043456
        %v2520 = vsel %vm2519, %v2505, 0.0
        %v2521 = vrot.slane %v2520, 4
        %v2522 = vadd.f32 %v2520, %v2521
        %v2523 = vrot.slane %v2522, 2
        %v2524 = vadd.f32 %v2522, %v2523
        %v2525 = vrot.slane %v2524, 1
        %v2526 = vadd.f32 %v2524, %v2525
        %v2527 = vsel %vm2519, %v2506, 0.0
        %v2528 = vrot.slane %v2527, 4
        %v2529 = vadd.f32 %v2527, %v2528
        %v2530 = vrot.slane %v2529, 2
        %v2531 = vadd.f32 %v2529, %v2530
        %v2532 = vrot.slane %v2531, 1
        %v2533 = vadd.f32 %v2531, %v2532
        %v2534 = vsel %vm2519, %v2507, 0.0
        %v2535 = vrot.slane %v2534, 4
        %v2536 = vadd.f32 %v2534, %v2535
        %v2537 = vrot.slane %v2536, 2
        %v2538 = vadd.f32 %v2536, %v2537
        %v2539 = vrot.slane %v2538, 1
        %v2540 = vadd.f32 %v2538, %v2539
        %v2541 = vsel %vm2519, %v2508, 0.0
        %v2542 = vrot.slane %v2541, 4
        %v2543 = vadd.f32 %v2541, %v2542
        %v2544 = vrot.slane %v2543, 2
        %v2545 = vadd.f32 %v2543, %v2544
        %v2546 = vrot.slane %v2545, 1
        %v2547 = vadd.f32 %v2545, %v2546
        %v2548 = vsel %vm2519, %v2509, 0.0
        %v2549 = vrot.slane %v2548, 4
        %v2550 = vadd.f32 %v2548, %v2549
        %v2551 = vrot.slane %v2550, 2
        %v2552 = vadd.f32 %v2550, %v2551
        %v2553 = vrot.slane %v2552, 1
        %v2554 = vadd.f32 %v2552, %v2553
        %v2555 = vsel %vm2519, %v2510, 0.0
        %v2556 = vrot.slane %v2555, 4
        %v2557 = vadd.f32 %v2555, %v2556
        %v2558 = vrot.slane %v2557, 2
        %v2559 = vadd.f32 %v2557, %v2558
        %v2560 = vrot.slane %v2559, 1
        %v2561 = vadd.f32 %v2559, %v2560
        %v2562 = vsel %vm2519, %v2511, 0.0
        %v2563 = vrot.slane %v2562, 4
        %v2564 = vadd.f32 %v2562, %v2563
        %v2565 = vrot.slane %v2564, 2
        %v2566 = vadd.f32 %v2564, %v2565
        %v2567 = vrot.slane %v2566, 1
        %v2568 = vadd.f32 %v2566, %v2567
        %v2569 = vsel %vm2519, %v2512, 0.0
        %v2570 = vrot.slane %v2569, 4
        %v2571 = vadd.f32 %v2569, %v2570
        %v2572 = vrot.slane %v2571, 2
        %v2573 = vadd.f32 %v2571, %v2572
        %v2574 = vrot.slane %v2573, 1
        %v2575 = vadd.f32 %v2573, %v2574
        %v2576 = vsel %vm2519, %v2513, 0.0
        %v2577 = vrot.slane %v2576, 4
        %v2578 = vadd.f32 %v2576, %v2577
        %v2579 = vrot.slane %v2578, 2
        %v2580 = vadd.f32 %v2578, %v2579
        %v2581 = vrot.slane %v2580, 1
        %v2582 = vadd.f32 %v2580, %v2581
        %v2583 = vsel %vm2519, %v2514, 0.0
        %v2584 = vrot.slane %v2583, 4
        %v2585 = vadd.f32 %v2583, %v2584
        %v2586 = vrot.slane %v2585, 2
        %v2587 = vadd.f32 %v2585, %v2586
        %v2588 = vrot.slane %v2587, 1
        %v2589 = vadd.f32 %v2587, %v2588
        %v2590 = vsel %vm2519, %v2515, 0.0
        %v2591 = vrot.slane %v2590, 4
        %v2592 = vadd.f32 %v2590, %v2591
        %v2593 = vrot.slane %v2592, 2
        %v2594 = vadd.f32 %v2592, %v2593
        %v2595 = vrot.slane %v2594, 1
        %v2596 = vadd.f32 %v2594, %v2595
        %v2597 = vsel %vm2519, %v2516, 0.0
        %v2598 = vrot.slane %v2597, 4
        %v2599 = vadd.f32 %v2597, %v2598
        %v2600 = vrot.slane %v2599, 2
        %v2601 = vadd.f32 %v2599, %v2600
        %v2602 = vrot.slane %v2601, 1
        %v2603 = vadd.f32 %v2601, %v2602
        %v2604 = vsel %vm2519, %v2517, 0.0
        %v2605 = vrot.slane %v2604, 4
        %v2606 = vadd.f32 %v2604, %v2605
        %v2607 = vrot.slane %v2606, 2
        %v2608 = vadd.f32 %v2606, %v2607
        %v2609 = vrot.slane %v2608, 1
        %v2610 = vadd.f32 %v2608, %v2609
        %v2611 = vsel %vm2519, %v2518, 0.0
        %v2612 = vrot.slane %v2611, 4
        %v2613 = vadd.f32 %v2611, %v2612
        %v2614 = vrot.slane %v2613, 2
        %v2615 = vadd.f32 %v2613, %v2614
        %v2616 = vrot.slane %v2615, 1
        %v2617 = vadd.f32 %v2615, %v2616
        %2618 = vset.pattern.permute.xlu0 37
        %2619 = vperm.xlu0 %2618, %v179
        %v2620 = vpop.permute.xlu0 %2619
        %v2622 = vadd.f32 %v2526, %v2620
        %v2623 = vadd.f32 %v2533, %v2620
        %v2624 = vadd.f32 %v2540, %v2620
        %v2625 = vadd.f32 %v2547, %v2620
        %v2626 = vadd.f32 %v2554, %v2620
        %v2627 = vadd.f32 %v2561, %v2620
        %v2628 = vadd.f32 %v2568, %v2620
        %v2629 = vadd.f32 %v2575, %v2620
        %v2630 = vadd.f32 %v2582, %v2620
        %v2631 = vadd.f32 %v2589, %v2620
        %v2632 = vadd.f32 %v2596, %v2620
        %v2633 = vadd.f32 %v2603, %v2620
        %v2634 = vadd.f32 %v2610, %v2620
        %v2635 = vadd.f32 %v2617, %v2620
        %v2650 = vcombine.low %v2622, %v2623
        %v2651 = vcombine.low %v2624, %v2625
        %v2652 = vcombine.low %v2626, %v2627
        %v2653 = vcombine.low %v2628, %v2629
        %v2655 = vunpack.c.l.s4 1966171168
        %v2656 = vunpack.c.0.s8 %v2655
        %v2657 = vlaneseq
        %v2658 = vshrl.u32 %v2657, 7
        %v2659 = vsub.s32 %v2656, %v2658
        %v2660 = vrot.slane %v2650, %v2659
        %v2662 = vunpack.c.l.s4 1966171168
        %v2663 = vunpack.c.0.s8 %v2662
        %v2664 = vlaneseq
        %v2665 = vshrl.u32 %v2664, 7
        %v2666 = vsub.s32 %v2663, %v2665
        %v2667 = vrot.slane %v2651, %v2666
        %v2669 = vunpack.c.l.s4 1966171168
        %v2670 = vunpack.c.0.s8 %v2669
        %v2671 = vlaneseq
        %v2672 = vshrl.u32 %v2671, 7
        %v2673 = vsub.s32 %v2670, %v2672
        %v2674 = vrot.slane %v2652, %v2673
        %v2676 = vunpack.c.l.s4 1966171168
        %v2677 = vunpack.c.0.s8 %v2676
        %v2678 = vlaneseq
        %v2679 = vshrl.u32 %v2678, 7
        %v2680 = vsub.s32 %v2677, %v2679
        %v2681 = vrot.slane %v2653, %v2680
        %v2682 = vcombine.low %v2660, %v2667
        %v2683 = vcombine.low %v2674, %v2681
        %v2685 = vunpack.c.l.s4 1966171168
        %v2686 = vunpack.c.0.s8 %v2685
        %v2687 = vlaneseq
        %v2688 = vshrl.u32 %v2687, 7
        %v2689 = vsub.s32 %v2686, %v2688
        %v2690 = vrot.slane %v2682, %v2689
        %v2692 = vunpack.c.l.s4 1966171168
        %v2693 = vunpack.c.0.s8 %v2692
        %v2694 = vlaneseq
        %v2695 = vshrl.u32 %v2694, 7
        %v2696 = vsub.s32 %v2693, %v2695
        %v2697 = vrot.slane %v2683, %v2696
        %v2698 = vcombine.low %v2690, %v2697
        %v2699 = vcombine.low %v2630, %v2631
        %v2700 = vcombine.low %v2632, %v2633
        %v2701 = vcombine.low %v2634, %v2635
        %v2703 = vunpack.c.l.s4 1966171168
        %v2704 = vunpack.c.0.s8 %v2703
        %v2705 = vlaneseq
        %v2706 = vshrl.u32 %v2705, 7
        %v2707 = vsub.s32 %v2704, %v2706
        %v2708 = vrot.slane %v2699, %v2707
        %v2710 = vunpack.c.l.s4 1966171168
        %v2711 = vunpack.c.0.s8 %v2710
        %v2712 = vlaneseq
        %v2713 = vshrl.u32 %v2712, 7
        %v2714 = vsub.s32 %v2711, %v2713
        %v2715 = vrot.slane %v2700, %v2714
        %v2717 = vunpack.c.l.s4 1966171168
        %v2718 = vunpack.c.0.s8 %v2717
        %v2719 = vlaneseq
        %v2720 = vshrl.u32 %v2719, 7
        %v2721 = vsub.s32 %v2718, %v2720
        %v2722 = vrot.slane %v2701, %v2721
        %v2723 = vcombine.low %v2708, %v2715
        %v2725 = vunpack.c.l.s4 1966171168
        %v2726 = vunpack.c.0.s8 %v2725
        %v2727 = vlaneseq
        %v2728 = vshrl.u32 %v2727, 7
        %v2729 = vsub.s32 %v2726, %v2728
        %v2730 = vrot.slane %v2723, %v2729
        %v2732 = vunpack.c.l.s4 1966171168
        %v2733 = vunpack.c.0.s8 %v2732
        %v2734 = vlaneseq
        %v2735 = vshrl.u32 %v2734, 7
        %v2736 = vsub.s32 %v2733, %v2735
        %v2737 = vrot.slane %v2722, %v2736
        %v2738 = vcombine.low %v2730, %v2737
        %2741 = vst [vmem:[%s158] sm:$0xff] %v2698
        %v2742 = vlaneseq
        %vm2743 = vcmp.ge.s32.totalorder %v2742, 0
        %vm2744 = vcmp.lt.s32.totalorder %v2742, 768
        %vm2745 = vmand %vm2743, %vm2744
        %2746 = vst.msk [vmem:[%s158 + $0x8] sm:$0x3f] %vm2745, %v2738
        %s2747 = sand.u32 %s69, 1
        %s2748 = sand.u32 %s69, 1
        %s2749 = smul.addr %s2748, 14
        %s2750 = scalar_lea.vmem [#allocation4], %s2749
        // Predicated region
        $region33: #{model1_forward.1} parent=27 // pred_check
          %p2751 = pneg %p79
        $region34: #{model1_forward.1} parent=27 // pred_check_branch
          %2753 = sbr.rel (%p2751) target = $region36
        $region35: #{model1_forward.1} parent=27 // pred_region
          %s2754 = smul.u32 14, %s14
          %s2755 = ssub.s32 27, %s2754
          %p2756 = scmp.lt.s32.totalorder %s2755, 14
          %s2757 = scalar_select %p2756, %s2755, 14
          %s2758 = smul.u32 16, %s2757
          %p2759 = scmp.ne.s32.totalorder 0, %s2758
          %s2760 = scalar_lea.vmem %s2, %s2754
          // Predicated region
          $region37: #{model1_forward.1} parent=35 // pred_check
            %p2761 = pneg %p2759
          $region38: #{model1_forward.1} parent=35 // pred_check_branch
            %2763 = sbr.rel (%p2761) target = $region40
          $region39: #{model1_forward.1} parent=35 // pred_region
            %p2764 = scmp.lt.u32.totalorder %s2757, 8
            %p2765 = pneg %p2764
            // Predicated region
            $region41: #{model1_forward.1} parent=39 // pred_check
              _
            $region42: #{model1_forward.1} parent=39 // pred_check_branch
              %2767 = sbr.rel (%p2764) target = $region44
            $region43: #{model1_forward.1} parent=39 // pred_region
              %s2782 = sand.u32 %s2757, 7
              %p2783 = scmp.eq.s32.totalorder %s2782, 0
              // Predicated region
              $region56: #{model1_forward.1} parent=43 // pred_check
                %p2784 = pneg %p2783
              $region57: #{model1_forward.1} parent=43 // pred_check_branch
                %2786 = sbr.rel (%p2784) target = $region59
              $region58: #{model1_forward.1} parent=43 // pred_region
                %s2787 = sshrl.u32 %s2757, 3
                %s2788 = sshrl.u32 %s2787, 6
                // While loop
                $region60: #{model1_forward.1} parent=58 // loop_pre_header
                  _
                $region61: #{model1_forward.1} parent=58 // loop_header
                  %s2792 = sphi 0, %s2794
                  %p2793 = scmp.ge.s32.totalorder %s2792, %s2788
                  %s2797 = sphi 0, %s2930
                  %s2798 = sphi %s2750, %s2933
                  %s2799 = sphi %s2760, %s2934
                $region62: #{model1_forward.1} parent=58 // loop_header_branch
                  %2796 = sbr.rel (%p2793) target = $region66
                $region63: #{model1_forward.1} parent=58 // loop_body
                  %v2800 = vld [vmem:[%s2798] sm:$0xff]
                  %2801 = vst [vmem:[%s2799] sm:$0xff] %v2800
                  %v2802 = vld [vmem:[%s2798 + $0x8] sm:$0xff]
                  %2803 = vst [vmem:[%s2799 + $0x8] sm:$0xff] %v2802
                  %v2804 = vld [vmem:[%s2798 + $0x10] sm:$0xff]
                  %2805 = vst [vmem:[%s2799 + $0x10] sm:$0xff] %v2804
                  %v2806 = vld [vmem:[%s2798 + $0x18] sm:$0xff]
                  %2807 = vst [vmem:[%s2799 + $0x18] sm:$0xff] %v2806
                  %v2808 = vld [vmem:[%s2798 + $0x20] sm:$0xff]
                  %2809 = vst [vmem:[%s2799 + $0x20] sm:$0xff] %v2808
                  %v2810 = vld [vmem:[%s2798 + $0x28] sm:$0xff]
                  %2811 = vst [vmem:[%s2799 + $0x28] sm:$0xff] %v2810
                  %v2812 = vld [vmem:[%s2798 + $0x30] sm:$0xff]
                  %2813 = vst [vmem:[%s2799 + $0x30] sm:$0xff] %v2812
                  %v2814 = vld [vmem:[%s2798 + $0x38] sm:$0xff]
                  %2815 = vst [vmem:[%s2799 + $0x38] sm:$0xff] %v2814
                  %v2816 = vld [vmem:[%s2798 + $0x40] sm:$0xff]
                  %2817 = vst [vmem:[%s2799 + $0x40] sm:$0xff] %v2816
                  %v2818 = vld [vmem:[%s2798 + $0x48] sm:$0xff]
                  %2819 = vst [vmem:[%s2799 + $0x48] sm:$0xff] %v2818
                  %v2820 = vld [vmem:[%s2798 + $0x50] sm:$0xff]
                  %2821 = vst [vmem:[%s2799 + $0x50] sm:$0xff] %v2820
                  %v2822 = vld [vmem:[%s2798 + $0x58] sm:$0xff]
                  %2823 = vst [vmem:[%s2799 + $0x58] sm:$0xff] %v2822
                  %v2824 = vld [vmem:[%s2798 + $0x60] sm:$0xff]
                  %2825 = vst [vmem:[%s2799 + $0x60] sm:$0xff] %v2824
                  %v2826 = vld [vmem:[%s2798 + $0x68] sm:$0xff]
                  %2827 = vst [vmem:[%s2799 + $0x68] sm:$0xff] %v2826
                  %v2828 = vld [vmem:[%s2798 + $0x70] sm:$0xff]
                  %2829 = vst [vmem:[%s2799 + $0x70] sm:$0xff] %v2828
                  %v2830 = vld [vmem:[%s2798 + $0x78] sm:$0xff]
                  %2831 = vst [vmem:[%s2799 + $0x78] sm:$0xff] %v2830
                  %v2832 = vld [vmem:[%s2798 + $0x80] sm:$0xff]
                  %2833 = vst [vmem:[%s2799 + $0x80] sm:$0xff] %v2832
                  %v2834 = vld [vmem:[%s2798 + $0x88] sm:$0xff]
                  %2835 = vst [vmem:[%s2799 + $0x88] sm:$0xff] %v2834
                  %v2836 = vld [vmem:[%s2798 + $0x90] sm:$0xff]
                  %2837 = vst [vmem:[%s2799 + $0x90] sm:$0xff] %v2836
                  %v2838 = vld [vmem:[%s2798 + $0x98] sm:$0xff]
                  %2839 = vst [vmem:[%s2799 + $0x98] sm:$0xff] %v2838
                  %v2840 = vld [vmem:[%s2798 + $0xa0] sm:$0xff]
                  %2841 = vst [vmem:[%s2799 + $0xa0] sm:$0xff] %v2840
                  %v2842 = vld [vmem:[%s2798 + $0xa8] sm:$0xff]
                  %2843 = vst [vmem:[%s2799 + $0xa8] sm:$0xff] %v2842
                  %v2844 = vld [vmem:[%s2798 + $0xb0] sm:$0xff]
                  %2845 = vst [vmem:[%s2799 + $0xb0] sm:$0xff] %v2844
                  %v2846 = vld [vmem:[%s2798 + $0xb8] sm:$0xff]
                  %2847 = vst [vmem:[%s2799 + $0xb8] sm:$0xff] %v2846
                  %v2848 = vld [vmem:[%s2798 + $0xc0] sm:$0xff]
                  %2849 = vst [vmem:[%s2799 + $0xc0] sm:$0xff] %v2848
                  %v2850 = vld [vmem:[%s2798 + $0xc8] sm:$0xff]
                  %2851 = vst [vmem:[%s2799 + $0xc8] sm:$0xff] %v2850
                  %v2852 = vld [vmem:[%s2798 + $0xd0] sm:$0xff]
                  %2853 = vst [vmem:[%s2799 + $0xd0] sm:$0xff] %v2852
                  %v2854 = vld [vmem:[%s2798 + $0xd8] sm:$0xff]
                  %2855 = vst [vmem:[%s2799 + $0xd8] sm:$0xff] %v2854
                  %v2856 = vld [vmem:[%s2798 + $0xe0] sm:$0xff]
                  %2857 = vst [vmem:[%s2799 + $0xe0] sm:$0xff] %v2856
                  %v2858 = vld [vmem:[%s2798 + $0xe8] sm:$0xff]
                  %2859 = vst [vmem:[%s2799 + $0xe8] sm:$0xff] %v2858
                  %v2860 = vld [vmem:[%s2798 + $0xf0] sm:$0xff]
                  %2861 = vst [vmem:[%s2799 + $0xf0] sm:$0xff] %v2860
                  %v2862 = vld [vmem:[%s2798 + $0xf8] sm:$0xff]
                  %2863 = vst [vmem:[%s2799 + $0xf8] sm:$0xff] %v2862
                  %v2864 = vld [vmem:[%s2798 + $0x100] sm:$0xff]
                  %2865 = vst [vmem:[%s2799 + $0x100] sm:$0xff] %v2864
                  %v2866 = vld [vmem:[%s2798 + $0x108] sm:$0xff]
                  %2867 = vst [vmem:[%s2799 + $0x108] sm:$0xff] %v2866
                  %v2868 = vld [vmem:[%s2798 + $0x110] sm:$0xff]
                  %2869 = vst [vmem:[%s2799 + $0x110] sm:$0xff] %v2868
                  %v2870 = vld [vmem:[%s2798 + $0x118] sm:$0xff]
                  %2871 = vst [vmem:[%s2799 + $0x118] sm:$0xff] %v2870
                  %v2872 = vld [vmem:[%s2798 + $0x120] sm:$0xff]
                  %2873 = vst [vmem:[%s2799 + $0x120] sm:$0xff] %v2872
                  %v2874 = vld [vmem:[%s2798 + $0x128] sm:$0xff]
                  %2875 = vst [vmem:[%s2799 + $0x128] sm:$0xff] %v2874
                  %v2876 = vld [vmem:[%s2798 + $0x130] sm:$0xff]
                  %2877 = vst [vmem:[%s2799 + $0x130] sm:$0xff] %v2876
                  %v2878 = vld [vmem:[%s2798 + $0x138] sm:$0xff]
                  %2879 = vst [vmem:[%s2799 + $0x138] sm:$0xff] %v2878
                  %v2880 = vld [vmem:[%s2798 + $0x140] sm:$0xff]
                  %2881 = vst [vmem:[%s2799 + $0x140] sm:$0xff] %v2880
                  %v2882 = vld [vmem:[%s2798 + $0x148] sm:$0xff]
                  %2883 = vst [vmem:[%s2799 + $0x148] sm:$0xff] %v2882
                  %v2884 = vld [vmem:[%s2798 + $0x150] sm:$0xff]
                  %2885 = vst [vmem:[%s2799 + $0x150] sm:$0xff] %v2884
                  %v2886 = vld [vmem:[%s2798 + $0x158] sm:$0xff]
                  %2887 = vst [vmem:[%s2799 + $0x158] sm:$0xff] %v2886
                  %v2888 = vld [vmem:[%s2798 + $0x160] sm:$0xff]
                  %2889 = vst [vmem:[%s2799 + $0x160] sm:$0xff] %v2888
                  %v2890 = vld [vmem:[%s2798 + $0x168] sm:$0xff]
                  %2891 = vst [vmem:[%s2799 + $0x168] sm:$0xff] %v2890
                  %v2892 = vld [vmem:[%s2798 + $0x170] sm:$0xff]
                  %2893 = vst [vmem:[%s2799 + $0x170] sm:$0xff] %v2892
                  %v2894 = vld [vmem:[%s2798 + $0x178] sm:$0xff]
                  %2895 = vst [vmem:[%s2799 + $0x178] sm:$0xff] %v2894
                  %v2896 = vld [vmem:[%s2798 + $0x180] sm:$0xff]
                  %2897 = vst [vmem:[%s2799 + $0x180] sm:$0xff] %v2896
                  %v2898 = vld [vmem:[%s2798 + $0x188] sm:$0xff]
                  %2899 = vst [vmem:[%s2799 + $0x188] sm:$0xff] %v2898
                  %v2900 = vld [vmem:[%s2798 + $0x190] sm:$0xff]
                  %2901 = vst [vmem:[%s2799 + $0x190] sm:$0xff] %v2900
                  %v2902 = vld [vmem:[%s2798 + $0x198] sm:$0xff]
                  %2903 = vst [vmem:[%s2799 + $0x198] sm:$0xff] %v2902
                  %v2904 = vld [vmem:[%s2798 + $0x1a0] sm:$0xff]
                  %2905 = vst [vmem:[%s2799 + $0x1a0] sm:$0xff] %v2904
                  %v2906 = vld [vmem:[%s2798 + $0x1a8] sm:$0xff]
                  %2907 = vst [vmem:[%s2799 + $0x1a8] sm:$0xff] %v2906
                  %v2908 = vld [vmem:[%s2798 + $0x1b0] sm:$0xff]
                  %2909 = vst [vmem:[%s2799 + $0x1b0] sm:$0xff] %v2908
                  %v2910 = vld [vmem:[%s2798 + $0x1b8] sm:$0xff]
                  %2911 = vst [vmem:[%s2799 + $0x1b8] sm:$0xff] %v2910
                  %v2912 = vld [vmem:[%s2798 + $0x1c0] sm:$0xff]
                  %2913 = vst [vmem:[%s2799 + $0x1c0] sm:$0xff] %v2912
                  %v2914 = vld [vmem:[%s2798 + $0x1c8] sm:$0xff]
                  %2915 = vst [vmem:[%s2799 + $0x1c8] sm:$0xff] %v2914
                  %v2916 = vld [vmem:[%s2798 + $0x1d0] sm:$0xff]
                  %2917 = vst [vmem:[%s2799 + $0x1d0] sm:$0xff] %v2916
                  %v2918 = vld [vmem:[%s2798 + $0x1d8] sm:$0xff]
                  %2919 = vst [vmem:[%s2799 + $0x1d8] sm:$0xff] %v2918
                  %v2920 = vld [vmem:[%s2798 + $0x1e0] sm:$0xff]
                  %2921 = vst [vmem:[%s2799 + $0x1e0] sm:$0xff] %v2920
                  %v2922 = vld [vmem:[%s2798 + $0x1e8] sm:$0xff]
                  %2923 = vst [vmem:[%s2799 + $0x1e8] sm:$0xff] %v2922
                  %v2924 = vld [vmem:[%s2798 + $0x1f0] sm:$0xff]
                  %2925 = vst [vmem:[%s2799 + $0x1f0] sm:$0xff] %v2924
                  %v2926 = vld [vmem:[%s2798 + $0x1f8] sm:$0xff]
                  %2927 = vst [vmem:[%s2799 + $0x1f8] sm:$0xff] %v2926
                  %s2928 = sadd.s32 1, %s2797
                  %p2929 = scmp.ge.s32.totalorder %s2928, %s2788
                  %s2930 = scalar_select %p2929, 0, %s2928
                  %s2931 = smul.u32 %s2930, 512
                  %s2932 = smul.u32 %s2930, 512
                  %s2933 = scalar_lea.vmem %s2750, %s2931 [#allocation4]
                  %s2934 = scalar_lea.vmem %s2760, %s2932
                $region64: #{model1_forward.1} parent=58 // loop_footer
                  %s2794 = sadd.s32 %s2792, 1
                $region65: #{model1_forward.1} parent=58 // loop_footer_branch
                  %2791 = sbr.rel target = $region61
                $region66: #{model1_forward.1} parent=58 // loop_exit
                  _
                %s2935 = sshrl.u32 %s2787, 6
                %s2936 = sand.u32 %s2787, 63
                %s2937 = smul.u32 %s2935, 64
                %s2938 = smul.u32 128, %s2937
                %s2939 = sshra.s32 %s2938, 4
                %s2940 = scalar_lea.vmem %s2750, %s2939 [#allocation4]
                %s2941 = smul.u32 128, %s2937
                %s2942 = sshra.s32 %s2941, 4
                %s2943 = scalar_lea.vmem %s2760, %s2942
                // While loop
                $region67: #{model1_forward.1} parent=58 // loop_pre_header
                  _
                $region68: #{model1_forward.1} parent=58 // loop_header
                  %s2947 = sphi 0, %s2949
                  %p2948 = scmp.ge.s32.totalorder %s2947, %s2936
                  %s2952 = sphi 0, %s2959
                  %s2953 = sphi %s2940, %s2962
                  %s2954 = sphi %s2943, %s2963
                $region69: #{model1_forward.1} parent=58 // loop_header_branch
                  %2951 = sbr.rel (%p2948) target = $region73
                $region70: #{model1_forward.1} parent=58 // loop_body
                  %v2955 = vld [vmem:[%s2953] sm:$0xff]
                  %2956 = vst [vmem:[%s2954] sm:$0xff] %v2955
                  %s2957 = sadd.s32 1, %s2952
                  %p2958 = scmp.ge.s32.totalorder %s2957, %s2936
                  %s2959 = scalar_select %p2958, 0, %s2957
                  %s2960 = smul.u32 %s2959, 8
                  %s2961 = smul.u32 %s2959, 8
                  %s2962 = scalar_lea.vmem %s2940, %s2960 [#allocation4]
                  %s2963 = scalar_lea.vmem %s2943, %s2961
                $region71: #{model1_forward.1} parent=58 // loop_footer
                  %s2949 = sadd.s32 %s2947, 1
                $region72: #{model1_forward.1} parent=58 // loop_footer_branch
                  %2946 = sbr.rel target = $region68
                $region73: #{model1_forward.1} parent=58 // loop_exit
                  _
              $region59: #{model1_forward.1} parent=43 // pred_fallthru
                _
              %p2964 = pneg %p2783
              // Predicated region
              $region74: #{model1_forward.1} parent=43 // pred_check
                _
              $region75: #{model1_forward.1} parent=43 // pred_check_branch
                %2966 = sbr.rel (%p2783) target = $region77
              $region76: #{model1_forward.1} parent=43 // pred_region
                %s2967 = sand.u32 %s2757, 7
                %s2968 = ssub.s32 %s2757, %s2967
                %s2969 = scalar_lea.vmem %s2750, %s2968 [#allocation4]
                %s2970 = ssub.s32 %s2757, %s2967
                %s2971 = scalar_lea.vmem %s2760, %s2970
                %s2972 = sshrl.u32 %s2757, 3
                %s2973 = sshrl.u32 %s2972, 6
                // While loop
                $region78: #{model1_forward.1} parent=76 // loop_pre_header
                  _
                $region79: #{model1_forward.1} parent=76 // loop_header
                  %s2977 = sphi 0, %s2979
                  %p2978 = scmp.ge.s32.totalorder %s2977, %s2973
                  %s2982 = sphi 0, %s3115
                  %s2983 = sphi %s2750, %s3118
                  %s2984 = sphi %s2760, %s3119
                $region80: #{model1_forward.1} parent=76 // loop_header_branch
                  %2981 = sbr.rel (%p2978) target = $region84
                $region81: #{model1_forward.1} parent=76 // loop_body
                  %v2985 = vld [vmem:[%s2983] sm:$0xff]
                  %2986 = vst [vmem:[%s2984] sm:$0xff] %v2985
                  %v2987 = vld [vmem:[%s2983 + $0x8] sm:$0xff]
                  %2988 = vst [vmem:[%s2984 + $0x8] sm:$0xff] %v2987
                  %v2989 = vld [vmem:[%s2983 + $0x10] sm:$0xff]
                  %2990 = vst [vmem:[%s2984 + $0x10] sm:$0xff] %v2989
                  %v2991 = vld [vmem:[%s2983 + $0x18] sm:$0xff]
                  %2992 = vst [vmem:[%s2984 + $0x18] sm:$0xff] %v2991
                  %v2993 = vld [vmem:[%s2983 + $0x20] sm:$0xff]
                  %2994 = vst [vmem:[%s2984 + $0x20] sm:$0xff] %v2993
                  %v2995 = vld [vmem:[%s2983 + $0x28] sm:$0xff]
                  %2996 = vst [vmem:[%s2984 + $0x28] sm:$0xff] %v2995
                  %v2997 = vld [vmem:[%s2983 + $0x30] sm:$0xff]
                  %2998 = vst [vmem:[%s2984 + $0x30] sm:$0xff] %v2997
                  %v2999 = vld [vmem:[%s2983 + $0x38] sm:$0xff]
                  %3000 = vst [vmem:[%s2984 + $0x38] sm:$0xff] %v2999
                  %v3001 = vld [vmem:[%s2983 + $0x40] sm:$0xff]
                  %3002 = vst [vmem:[%s2984 + $0x40] sm:$0xff] %v3001
                  %v3003 = vld [vmem:[%s2983 + $0x48] sm:$0xff]
                  %3004 = vst [vmem:[%s2984 + $0x48] sm:$0xff] %v3003
                  %v3005 = vld [vmem:[%s2983 + $0x50] sm:$0xff]
                  %3006 = vst [vmem:[%s2984 + $0x50] sm:$0xff] %v3005
                  %v3007 = vld [vmem:[%s2983 + $0x58] sm:$0xff]
                  %3008 = vst [vmem:[%s2984 + $0x58] sm:$0xff] %v3007
                  %v3009 = vld [vmem:[%s2983 + $0x60] sm:$0xff]
                  %3010 = vst [vmem:[%s2984 + $0x60] sm:$0xff] %v3009
                  %v3011 = vld [vmem:[%s2983 + $0x68] sm:$0xff]
                  %3012 = vst [vmem:[%s2984 + $0x68] sm:$0xff] %v3011
                  %v3013 = vld [vmem:[%s2983 + $0x70] sm:$0xff]
                  %3014 = vst [vmem:[%s2984 + $0x70] sm:$0xff] %v3013
                  %v3015 = vld [vmem:[%s2983 + $0x78] sm:$0xff]
                  %3016 = vst [vmem:[%s2984 + $0x78] sm:$0xff] %v3015
                  %v3017 = vld [vmem:[%s2983 + $0x80] sm:$0xff]
                  %3018 = vst [vmem:[%s2984 + $0x80] sm:$0xff] %v3017
                  %v3019 = vld [vmem:[%s2983 + $0x88] sm:$0xff]
                  %3020 = vst [vmem:[%s2984 + $0x88] sm:$0xff] %v3019
                  %v3021 = vld [vmem:[%s2983 + $0x90] sm:$0xff]
                  %3022 = vst [vmem:[%s2984 + $0x90] sm:$0xff] %v3021
                  %v3023 = vld [vmem:[%s2983 + $0x98] sm:$0xff]
                  %3024 = vst [vmem:[%s2984 + $0x98] sm:$0xff] %v3023
                  %v3025 = vld [vmem:[%s2983 + $0xa0] sm:$0xff]
                  %3026 = vst [vmem:[%s2984 + $0xa0] sm:$0xff] %v3025
                  %v3027 = vld [vmem:[%s2983 + $0xa8] sm:$0xff]
                  %3028 = vst [vmem:[%s2984 + $0xa8] sm:$0xff] %v3027
                  %v3029 = vld [vmem:[%s2983 + $0xb0] sm:$0xff]
                  %3030 = vst [vmem:[%s2984 + $0xb0] sm:$0xff] %v3029
                  %v3031 = vld [vmem:[%s2983 + $0xb8] sm:$0xff]
                  %3032 = vst [vmem:[%s2984 + $0xb8] sm:$0xff] %v3031
                  %v3033 = vld [vmem:[%s2983 + $0xc0] sm:$0xff]
                  %3034 = vst [vmem:[%s2984 + $0xc0] sm:$0xff] %v3033
                  %v3035 = vld [vmem:[%s2983 + $0xc8] sm:$0xff]
                  %3036 = vst [vmem:[%s2984 + $0xc8] sm:$0xff] %v3035
                  %v3037 = vld [vmem:[%s2983 + $0xd0] sm:$0xff]
                  %3038 = vst [vmem:[%s2984 + $0xd0] sm:$0xff] %v3037
                  %v3039 = vld [vmem:[%s2983 + $0xd8] sm:$0xff]
                  %3040 = vst [vmem:[%s2984 + $0xd8] sm:$0xff] %v3039
                  %v3041 = vld [vmem:[%s2983 + $0xe0] sm:$0xff]
                  %3042 = vst [vmem:[%s2984 + $0xe0] sm:$0xff] %v3041
                  %v3043 = vld [vmem:[%s2983 + $0xe8] sm:$0xff]
                  %3044 = vst [vmem:[%s2984 + $0xe8] sm:$0xff] %v3043
                  %v3045 = vld [vmem:[%s2983 + $0xf0] sm:$0xff]
                  %3046 = vst [vmem:[%s2984 + $0xf0] sm:$0xff] %v3045
                  %v3047 = vld [vmem:[%s2983 + $0xf8] sm:$0xff]
                  %3048 = vst [vmem:[%s2984 + $0xf8] sm:$0xff] %v3047
                  %v3049 = vld [vmem:[%s2983 + $0x100] sm:$0xff]
                  %3050 = vst [vmem:[%s2984 + $0x100] sm:$0xff] %v3049
                  %v3051 = vld [vmem:[%s2983 + $0x108] sm:$0xff]
                  %3052 = vst [vmem:[%s2984 + $0x108] sm:$0xff] %v3051
                  %v3053 = vld [vmem:[%s2983 + $0x110] sm:$0xff]
                  %3054 = vst [vmem:[%s2984 + $0x110] sm:$0xff] %v3053
                  %v3055 = vld [vmem:[%s2983 + $0x118] sm:$0xff]
                  %3056 = vst [vmem:[%s2984 + $0x118] sm:$0xff] %v3055
                  %v3057 = vld [vmem:[%s2983 + $0x120] sm:$0xff]
                  %3058 = vst [vmem:[%s2984 + $0x120] sm:$0xff] %v3057
                  %v3059 = vld [vmem:[%s2983 + $0x128] sm:$0xff]
                  %3060 = vst [vmem:[%s2984 + $0x128] sm:$0xff] %v3059
                  %v3061 = vld [vmem:[%s2983 + $0x130] sm:$0xff]
                  %3062 = vst [vmem:[%s2984 + $0x130] sm:$0xff] %v3061
                  %v3063 = vld [vmem:[%s2983 + $0x138] sm:$0xff]
                  %3064 = vst [vmem:[%s2984 + $0x138] sm:$0xff] %v3063
                  %v3065 = vld [vmem:[%s2983 + $0x140] sm:$0xff]
                  %3066 = vst [vmem:[%s2984 + $0x140] sm:$0xff] %v3065
                  %v3067 = vld [vmem:[%s2983 + $0x148] sm:$0xff]
                  %3068 = vst [vmem:[%s2984 + $0x148] sm:$0xff] %v3067
                  %v3069 = vld [vmem:[%s2983 + $0x150] sm:$0xff]
                  %3070 = vst [vmem:[%s2984 + $0x150] sm:$0xff] %v3069
                  %v3071 = vld [vmem:[%s2983 + $0x158] sm:$0xff]
                  %3072 = vst [vmem:[%s2984 + $0x158] sm:$0xff] %v3071
                  %v3073 = vld [vmem:[%s2983 + $0x160] sm:$0xff]
                  %3074 = vst [vmem:[%s2984 + $0x160] sm:$0xff] %v3073
                  %v3075 = vld [vmem:[%s2983 + $0x168] sm:$0xff]
                  %3076 = vst [vmem:[%s2984 + $0x168] sm:$0xff] %v3075
                  %v3077 = vld [vmem:[%s2983 + $0x170] sm:$0xff]
                  %3078 = vst [vmem:[%s2984 + $0x170] sm:$0xff] %v3077
                  %v3079 = vld [vmem:[%s2983 + $0x178] sm:$0xff]
                  %3080 = vst [vmem:[%s2984 + $0x178] sm:$0xff] %v3079
                  %v3081 = vld [vmem:[%s2983 + $0x180] sm:$0xff]
                  %3082 = vst [vmem:[%s2984 + $0x180] sm:$0xff] %v3081
                  %v3083 = vld [vmem:[%s2983 + $0x188] sm:$0xff]
                  %3084 = vst [vmem:[%s2984 + $0x188] sm:$0xff] %v3083
                  %v3085 = vld [vmem:[%s2983 + $0x190] sm:$0xff]
                  %3086 = vst [vmem:[%s2984 + $0x190] sm:$0xff] %v3085
                  %v3087 = vld [vmem:[%s2983 + $0x198] sm:$0xff]
                  %3088 = vst [vmem:[%s2984 + $0x198] sm:$0xff] %v3087
                  %v3089 = vld [vmem:[%s2983 + $0x1a0] sm:$0xff]
                  %3090 = vst [vmem:[%s2984 + $0x1a0] sm:$0xff] %v3089
                  %v3091 = vld [vmem:[%s2983 + $0x1a8] sm:$0xff]
                  %3092 = vst [vmem:[%s2984 + $0x1a8] sm:$0xff] %v3091
                  %v3093 = vld [vmem:[%s2983 + $0x1b0] sm:$0xff]
                  %3094 = vst [vmem:[%s2984 + $0x1b0] sm:$0xff] %v3093
                  %v3095 = vld [vmem:[%s2983 + $0x1b8] sm:$0xff]
                  %3096 = vst [vmem:[%s2984 + $0x1b8] sm:$0xff] %v3095
                  %v3097 = vld [vmem:[%s2983 + $0x1c0] sm:$0xff]
                  %3098 = vst [vmem:[%s2984 + $0x1c0] sm:$0xff] %v3097
                  %v3099 = vld [vmem:[%s2983 + $0x1c8] sm:$0xff]
                  %3100 = vst [vmem:[%s2984 + $0x1c8] sm:$0xff] %v3099
                  %v3101 = vld [vmem:[%s2983 + $0x1d0] sm:$0xff]
                  %3102 = vst [vmem:[%s2984 + $0x1d0] sm:$0xff] %v3101
                  %v3103 = vld [vmem:[%s2983 + $0x1d8] sm:$0xff]
                  %3104 = vst [vmem:[%s2984 + $0x1d8] sm:$0xff] %v3103
                  %v3105 = vld [vmem:[%s2983 + $0x1e0] sm:$0xff]
                  %3106 = vst [vmem:[%s2984 + $0x1e0] sm:$0xff] %v3105
                  %v3107 = vld [vmem:[%s2983 + $0x1e8] sm:$0xff]
                  %3108 = vst [vmem:[%s2984 + $0x1e8] sm:$0xff] %v3107
                  %v3109 = vld [vmem:[%s2983 + $0x1f0] sm:$0xff]
                  %3110 = vst [vmem:[%s2984 + $0x1f0] sm:$0xff] %v3109
                  %v3111 = vld [vmem:[%s2983 + $0x1f8] sm:$0xff]
                  %3112 = vst [vmem:[%s2984 + $0x1f8] sm:$0xff] %v3111
                  %s3113 = sadd.s32 1, %s2982
                  %p3114 = scmp.ge.s32.totalorder %s3113, %s2973
                  %s3115 = scalar_select %p3114, 0, %s3113
                  %s3116 = smul.u32 %s3115, 512
                  %s3117 = smul.u32 %s3115, 512
                  %s3118 = scalar_lea.vmem %s2750, %s3116 [#allocation4]
                  %s3119 = scalar_lea.vmem %s2760, %s3117
                $region82: #{model1_forward.1} parent=76 // loop_footer
                  %s2979 = sadd.s32 %s2977, 1
                $region83: #{model1_forward.1} parent=76 // loop_footer_branch
                  %2976 = sbr.rel target = $region79
                $region84: #{model1_forward.1} parent=76 // loop_exit
                  _
                %s3120 = sshrl.u32 %s2972, 6
                %s3121 = sand.u32 %s2972, 63
                %s3122 = smul.u32 %s3120, 64
                %s3123 = smul.u32 128, %s3122
                %s3124 = sshra.s32 %s3123, 4
                %s3125 = scalar_lea.vmem %s2750, %s3124 [#allocation4]
                %s3126 = smul.u32 128, %s3122
                %s3127 = sshra.s32 %s3126, 4
                %s3128 = scalar_lea.vmem %s2760, %s3127
                // While loop
                $region85: #{model1_forward.1} parent=76 // loop_pre_header
                  _
                $region86: #{model1_forward.1} parent=76 // loop_header
                  %s3132 = sphi 0, %s3134
                  %p3133 = scmp.ge.s32.totalorder %s3132, %s3121
                  %s3137 = sphi 0, %s3144
                  %s3138 = sphi %s3125, %s3147
                  %s3139 = sphi %s3128, %s3148
                $region87: #{model1_forward.1} parent=76 // loop_header_branch
                  %3136 = sbr.rel (%p3133) target = $region91
                $region88: #{model1_forward.1} parent=76 // loop_body
                  %v3140 = vld [vmem:[%s3138] sm:$0xff]
                  %3141 = vst [vmem:[%s3139] sm:$0xff] %v3140
                  %s3142 = sadd.s32 1, %s3137
                  %p3143 = scmp.ge.s32.totalorder %s3142, %s3121
                  %s3144 = scalar_select %p3143, 0, %s3142
                  %s3145 = smul.u32 %s3144, 8
                  %s3146 = smul.u32 %s3144, 8
                  %s3147 = scalar_lea.vmem %s3125, %s3145 [#allocation4]
                  %s3148 = scalar_lea.vmem %s3128, %s3146
                $region89: #{model1_forward.1} parent=76 // loop_footer
                  %s3134 = sadd.s32 %s3132, 1
                $region90: #{model1_forward.1} parent=76 // loop_footer_branch
                  %3131 = sbr.rel target = $region86
                $region91: #{model1_forward.1} parent=76 // loop_exit
                  _
                %s3149 = sshllo.u32 0, %s2967
                loop: start=0, step=1, limit=1
                $region92: #{model1_forward.1} parent=76 // loop_pre_header
                  _
                $region93: #{model1_forward.1} parent=76 // loop_header
                  %s3151 = sphi 0, %s3155
                  %p3152 = scmp.ge.s32.totalorder %s3151, 1
                  %s3156 = sphi %s2969, %s2969
                  %s3157 = sphi %s2971, %s2971
                $region94: #{model1_forward.1} parent=76 // loop_header_branch
                  %3154 = sbr.rel (%p3152) target = $region98
                $region95: #{model1_forward.1} parent=76 // loop_body
                  %v3158 = vld [vmem:[%s3156] sm:%s3149]
                  %3159 = vst [vmem:[%s3157] sm:%s3149] %v3158
                $region96: #{model1_forward.1} parent=76 // loop_footer
                  %s3155 = sadd.s32 1, %s3151
                $region97: #{model1_forward.1} parent=76 // loop_footer_branch
                  %3150 = sbr.rel target = $region93
                $region98: #{model1_forward.1} parent=76 // loop_exit
                  _
              $region77: #{model1_forward.1} parent=43 // pred_fallthru
                _
            $region44: #{model1_forward.1} parent=39 // pred_fallthru
              _
            // Predicated region
            $region45: #{model1_forward.1} parent=39 // pred_check
              %p2768 = pneg %p2764
            $region46: #{model1_forward.1} parent=39 // pred_check_branch
              %2770 = sbr.rel (%p2768) target = $region48
            $region47: #{model1_forward.1} parent=39 // pred_region
              %s2771 = sshllo.u32 0, %s2757
              loop: start=0, step=1, limit=1
              $region49: #{model1_forward.1} parent=47 // loop_pre_header
                _
              $region50: #{model1_forward.1} parent=47 // loop_header
                %s2773 = sphi 0, %s2777
                %p2774 = scmp.ge.s32.totalorder %s2773, 1
                %s2778 = sphi %s2750, %s2750
                %s2779 = sphi %s2760, %s2760
              $region51: #{model1_forward.1} parent=47 // loop_header_branch
                %2776 = sbr.rel (%p2774) target = $region55
              $region52: #{model1_forward.1} parent=47 // loop_body
                %v2780 = vld [vmem:[%s2778] sm:%s2771]
                %2781 = vst [vmem:[%s2779] sm:%s2771] %v2780
              $region53: #{model1_forward.1} parent=47 // loop_footer
                %s2777 = sadd.s32 1, %s2773
              $region54: #{model1_forward.1} parent=47 // loop_footer_branch
                %2772 = sbr.rel target = $region50
              $region55: #{model1_forward.1} parent=47 // loop_exit
                _
            $region48: #{model1_forward.1} parent=39 // pred_fallthru
              _
          $region40: #{model1_forward.1} parent=35 // pred_fallthru
            _
          %3160 = vnop
        $region36: #{model1_forward.1} parent=27 // pred_fallthru
          _
      $region28: #{model1_forward.1} parent=5 // pred_fallthru
        _
      %p3161 = scmp.le.s32.totalorder 2, %s9
      // Predicated region
      $region99: #{model1_forward.1} parent=5 // pred_check
        %p3162 = pneg %p3161
      $region100: #{model1_forward.1} parent=5 // pred_check_branch
        %3164 = sbr.rel (%p3162) target = $region102
      $region101: #{model1_forward.1} parent=5 // pred_region
        %s3165 = ssub.s32 %s9, 2
        // Predicated region
        $region103: #{model1_forward.1} parent=101 // pred_check
          %p3166 = pneg %p85
        $region104: #{model1_forward.1} parent=101 // pred_check_branch
          %3168 = sbr.rel (%p3166) target = $region106
        $region105: #{model1_forward.1} parent=101 // pred_region
          %s3169 = sand.u32 %s70, 1
          %s3170 = sand.u32 %s70, 1
          %s3171 = smul.addr %s3170, 14
          %s3172 = scalar_lea.vmem [#allocation4], %s3171
        $region106: #{model1_forward.1} parent=101 // pred_fallthru
          _
      $region102: #{model1_forward.1} parent=5 // pred_fallthru
        _
    $region6: #{model1_forward.1} parent=1 // loop_footer
      %s13 = sadd.s32 1, %s9
    $region7: #{model1_forward.1} parent=1 // loop_footer_branch
      %8 = sbr.rel target = $region3
    $region8: #{model1_forward.1} parent=1 // loop_exit
      _
    %3173 = vsyncpa [#allocation3], 1
    %s3174 = scalar_lea.sflag [#allocation3], 1
    %3175 = vsyncpa %s3174, 1

</llo_original>
